<compile_context>
chip_gen: v6e
topology: v6e:2x2x1
jax: 0.10.0
libtpu: 0.0.40
codegen_flags: <defaults>
</compile_context>

<pallas_src>
import functools

import jax
import jax.numpy as jnp
from jax import lax
from jax.experimental import pallas as pl
from jax.experimental.pallas import tpu as pltpu

BN_EPS = 1e-5


def _round_up(x, m):
    return (x + m - 1) // m * m


def _vmem_capacity_bytes():
    try:
        info = pltpu.get_tpu_info()
        cap = getattr(info, "vmem_capacity_bytes", None)
        if cap:
            return int(cap)
    except Exception:
        pass
    return 64 << 20  # conservative default: v7x per-TensorCore VMEM


def _compiler_params(semantics, working_set_bytes):
    """Scoped-VMEM limit from the tile working set, bounded by the part's VMEM."""
    cap = _vmem_capacity_bytes()
    upper = max(min(cap - (16 << 20), 100 << 20), 24 << 20)
    limit = int(min(max(2 * working_set_bytes + (8 << 20), 16 << 20), upper))
    return pltpu.CompilerParams(dimension_semantics=semantics,
                                vmem_limit_bytes=limit)


# ----------------------------------------------------------------------------
# Tiled GEMM (1x1 shortcut conv, stride!=1 conv1 fallback).
# Grid order (j=N, i=M, k=K): the full-K weight block (index (0, j)) stays
# VMEM-resident across the entire M sweep and is only re-fetched per N tile.
# ----------------------------------------------------------------------------
def _make_matmul_kernel(bk, nk):
    def kernel(a_ref, b_ref, o_ref, acc_ref):
        kk = pl.program_id(2)

        @pl.when(kk == 0)
        def _init():
            acc_ref[...] = jnp.zeros_like(acc_ref)

        if nk == 1:
            b = b_ref[...]
        else:
            start = pl.multiple_of(kk * bk, bk)
            b = b_ref[pl.ds(start, bk), :]
        acc_ref[...] += jnp.dot(a_ref[...], b, preferred_element_type=jnp.float32)

        @pl.when(kk == nk - 1)
        def _store():
            o_ref[...] = acc_ref[...].astype(o_ref.dtype)

    return kernel


def pallas_matmul(a, b, compute_dtype=jnp.float32, out_dtype=jnp.float32):
    """C = A @ B.  A:(M,K), B:(K,N); result (M,N) in out_dtype.

    N is padded to a multiple of 128 so every output store is a full-lane vst.
    """
    m, k = a.shape
    k2, n = b.shape
    assert k2 == k
    a = a.astype(compute_dtype)
    b = b.astype(compute_dtype)

    n_pad = _round_up(n, 128)
    bn = next(c for c in (512, 384, 256, 128) if n_pad % c == 0)
    if k > 1024:                      # tile the reduction only for large K,
        k_pad, bk = _round_up(k, 512), 512   # keeping bk large (review item)
    else:
        k_pad, bk = k, k
    bm = 512 if m >= 512 else _round_up(m, 16)   # 16-aligned for bf16 packing
    m_pad = _round_up(m, bm)

    if (m_pad, k_pad) != (m, k):
        a = jnp.pad(a, ((0, m_pad - m), (0, k_pad - k)))
    if (k_pad, n_pad) != (k, n):
        b = jnp.pad(b, ((0, k_pad - k), (0, n_pad - n)))

    nk = k_pad // bk
    grid = (n_pad // bn, m_pad // bm, nk)
    a_spec = pl.BlockSpec((bm, bk), lambda j, i, kk: (i, kk))
    b_spec = pl.BlockSpec((k_pad, bn), lambda j, i, kk: (0, j))   # resident weights
    o_spec = pl.BlockSpec((bm, bn), lambda j, i, kk: (i, j))

    itm = jnp.dtype(compute_dtype).itemsize
    work = 2 * bm * bk * itm + 2 * k_pad * bn * itm + bm * bn * (4 + 2 * 4)
    out = pl.pallas_call(
        _make_matmul_kernel(bk, nk),
        grid=grid,
        in_specs=[a_spec, b_spec],
        out_specs=o_spec,
        out_shape=jax.ShapeDtypeStruct((m_pad, n_pad), out_dtype),
        scratch_shapes=[pltpu.VMEM((bm, bn), jnp.float32)],
        compiler_params=_compiler_params(("parallel", "parallel", "arbitrary"), work),
        cost_estimate=pl.CostEstimate(
            flops=2 * m_pad * n_pad * k_pad, transcendentals=0,
            bytes_accessed=int(a.size * itm + b.size * itm + m_pad * n_pad * 4)),
    )(a, b)
    return out[:m, :n]


# ----------------------------------------------------------------------------
# BatchNorm (training-mode batch statistics) helpers.
# ----------------------------------------------------------------------------
def _lane_pack(x_nhwc, target=512):
    """Fold trailing spatial positions into lanes until >=`target` lanes wide."""
    n, h, w, c = x_nhwc.shape
    rows, lane = n * h * w, c
    while lane < target and rows % 2 == 0:
        lane *= 2
        rows //= 2
    return x_nhwc.reshape(rows, lane), rows, lane, lane // c


def _bn_stats_kernel(x_ref, sum_ref, sq_ref):
    @pl.when(pl.program_id(1) == 0)
    def _init():
        sum_ref[...] = jnp.zeros_like(sum_ref)
        sq_ref[...] = jnp.zeros_like(sq_ref)

    x = x_ref[...].astype(jnp.float32)
    sum_ref[...] += jnp.sum(x, axis=0, keepdims=True)
    sq_ref[...] += jnp.sum(x * x, axis=0, keepdims=True)


def bn_stats(x_nhwc):
    """Per-channel sum / sum-of-squares.  A leading size-2 'parallel' axis keeps
    two separate partial accumulators (one per v7x TensorCore); combined in glue.
    """
    n, h, w, c = x_nhwc.shape
    x2, rows, lane, fold = _lane_pack(x_nhwc)
    bm = min(1024, _round_up(rows, 8))
    rows_pad = _round_up(rows, 2 * bm)
    if rows_pad != rows:
        x2 = jnp.pad(x2, ((0, rows_pad - rows), (0, 0)))   # zero rows don't perturb sums
    half = rows_pad // (2 * bm)
    itm = x2.dtype.itemsize

    ssum, ssq = pl.pallas_call(
        _bn_stats_kernel,
        grid=(2, half),
        in_specs=[pl.BlockSpec((bm, lane), lambda cc, i: (cc * half + i, 0))],
        out_specs=(pl.BlockSpec((8, lane), lambda cc, i: (cc, 0)),
                   pl.BlockSpec((8, lane), lambda cc, i: (cc, 0))),
        out_shape=(jax.ShapeDtypeStruct((16, lane), jnp.float32),
                   jax.ShapeDtypeStruct((16, lane), jnp.float32)),
        compiler_params=_compiler_params(("parallel", "arbitrary"),
                                         2 * bm * lane * itm + 4 * 16 * lane * 4),
    )(x2)
    s = ssum.reshape(2, 8, lane)[:, 0, :].sum(axis=0).reshape(fold, c).sum(axis=0)
    sq = ssq.reshape(2, 8, lane)[:, 0, :].sum(axis=0).reshape(fold, c).sum(axis=0)
    return s, sq, n * h * w


def _bn_scale_shift(gamma, beta, ssum, ssq, count):
    # NOTE: E[x^2] - E[x]^2 in f32; fine at these scales (see review notes).
    mean = ssum / count
    var = ssq / count - mean * mean
    scale = gamma.astype(jnp.float32) * lax.rsqrt(var + BN_EPS)
    shift = beta.astype(jnp.float32) - mean * scale
    return scale, shift


def _bn_apply_kernel(x_ref, sc_ref, sh_ref, o_ref):
    y = x_ref[...].astype(jnp.float32) * sc_ref[...] + sh_ref[...]
    o_ref[...] = jnp.maximum(y, 0.0).astype(o_ref.dtype)


def bn_apply_relu(x_nhwc, scale, shift, out_dtype=jnp.float32):
    n, h, w, c = x_nhwc.shape
    x2, rows, lane, fold = _lane_pack(x_nhwc)
    bm = min(2048, _round_up(rows, 8))          # >=1-2 MB tiles on real shapes
    rows_pad = _round_up(rows, bm)
    if rows_pad != rows:
        x2 = jnp.pad(x2, ((0, rows_pad - rows), (0, 0)))
    sc = jnp.tile(scale.astype(jnp.float32), fold).reshape(1, lane)
    sh = jnp.tile(shift.astype(jnp.float32), fold).reshape(1, lane)
    itm = x2.dtype.itemsize

    y = pl.pallas_call(
        _bn_apply_kernel,
        grid=(rows_pad // bm,),
        in_specs=[pl.BlockSpec((bm, lane), lambda i: (i, 0)),
                  pl.BlockSpec((1, lane), lambda i: (0, 0)),
                  pl.BlockSpec((1, lane), lambda i: (0, 0))],
        out_specs=pl.BlockSpec((bm, lane), lambda i: (i, 0)),
        out_shape=jax.ShapeDtypeStruct((rows_pad, lane), out_dtype),
        compiler_params=_compiler_params(
            ("parallel",),
            bm * lane * (itm + jnp.dtype(out_dtype).itemsize) + 2 * lane * 4),
    )(x2, sc, sh)
    return y[:rows].reshape(n, h, w, c)


# ----------------------------------------------------------------------------
# Direct stride-1 3x3 convolution (no im2col).
# Flat padded layout: input row r = h*Wp + w of a (Hp*Wp, Cin) slab per image;
# output row r needs input rows r + kh*Wp + kw -- 9 static row-offset slices of
# a VMEM-resident buffer.  Rows with w >= W (and the bottom slack) are garbage
# and sliced off in glue (and masked out of the fused statistics).
# ----------------------------------------------------------------------------
def _make_dconv_kernel(wp, rp, cdtype, with_residual, with_stats):
    offs = [kh * wp + kw for kh in range(3) for kw in range(3)]

    def kernel(*refs):
        x_ref, w_ref, sc_ref, sh_ref, im_ref = refs[:5]
        idx = 5
        r_ref = om_ref = None
        if with_residual:
            r_ref = refs[idx]; idx += 1
        if with_stats:
            om_ref = refs[idx]; idx += 1
        o_ref = refs[idx]; idx += 1
        if with_stats:
            sum_ref, sq_ref = refs[idx], refs[idx + 1]; idx += 2
        a_buf, acc_ref = refs[idx], refs[idx + 1]

        # Prologue: fused BN normalize + ReLU; the mask keeps the zero padding
        # border zero (PyTorch pads AFTER bn+relu) and zeroes the row slack.
        a = jnp.maximum(x_ref[...].astype(jnp.float32) * sc_ref[...] + sh_ref[...],
                        0.0)
        a_buf[...] = (a * im_ref[...]).astype(cdtype)

        acc_ref[...] = jnp.zeros_like(acc_ref)
        for t, off in enumerate(offs):                 # 9 taps, static unroll
            acc_ref[...] += jnp.dot(a_buf[pl.ds(off, rp), :], w_ref[t],
                                    preferred_element_type=jnp.float32)

        y = acc_ref[...]
        if with_residual:
            # NOTE: the residual input is aliased to this output; it must not be
            # read again after this kernel (true for PreActBlock's dataflow).
            y = y + r_ref[...].astype(jnp.float32)
        o_ref[...] = y.astype(o_ref.dtype)

        if with_stats:
            @pl.when(pl.program_id(0) == 0)
            def _init():
                sum_ref[...] = jnp.zeros_like(sum_ref)
                sq_ref[...] = jnp.zeros_like(sq_ref)
            m = acc_ref[...] * om_ref[...]             # mask out invalid rows
            sum_ref[...] += jnp.sum(m, axis=0, keepdims=True)
            sq_ref[...] += jnp.sum(m * m, axis=0, keepdims=True)

    return kernel


def conv3x3_s1_direct(x_nhwc, w_oihw, *, scale=None, shift=None, residual=None,
                      compute_stats=False, compute_dtype=jnp.float32,
                      out_dtype=jnp.float32):
    """3x3 conv, stride 1, padding 1.  Optional fused BN prologue, fused
    residual-add epilogue, or fused per-channel sum/sumsq epilogue."""
    assert not (compute_stats and residual is not None)
    n, h, w, cin = x_nhwc.shape
    cout = w_oihw.shape[0]
    hp, wp = h + 2, w + 2
    rv = hp * wp                                   # valid flat rows per image
    rp = _round_up(rv, 16)                         # output rows per image
    rtot = _round_up(rp + 2 * wp + 2, 16)          # input rows per image (+halo)
    coutp = _round_up(cout, 128)                   # lane-dense output stores

    # Flat padded input slab per image.
    xp = jnp.pad(x_nhwc, ((0, 0), (1, 1), (1, 1), (0, 0))).reshape(n, rv, cin)
    xp = jnp.pad(xp, ((0, 0), (0, rtot - rv), (0, 0))).reshape(n * rtot, cin)

    # Weights -> (9, Cin, Coutp) in the MXU compute dtype (VMEM-resident).
    wg = jnp.transpose(w_oihw, (2, 3, 1, 0)).reshape(9, cin, cout)
    wg = jnp.pad(wg, ((0, 0), (0, 0), (0, coutp - cout))).astype(compute_dtype)

    if scale is None:
        scale = jnp.ones((cin,), jnp.float32)
        shift = jnp.zeros((cin,), jnp.float32)
    sc = scale.reshape(1, cin).astype(jnp.float32)
    sh = shift.reshape(1, cin).astype(jnp.float32)

    ii = jnp.arange(rtot)
    hh, ww = ii // wp, ii % wp
    in_mask = ((ii < rv) & (hh >= 1) & (hh <= h) & (ww >= 1) & (ww <= w))
    in_mask = in_mask.astype(jnp.float32).reshape(rtot, 1)

    x_spec = pl.BlockSpec((rtot, cin), lambda i: (i, 0))
    w_spec = pl.BlockSpec((9, cin, coutp), lambda i: (0, 0, 0))
    v_spec = pl.BlockSpec((1, cin), lambda i: (0, 0))
    im_spec = pl.BlockSpec((rtot, 1), lambda i: (0, 0))
    y_spec = pl.BlockSpec((rp, coutp), lambda i: (i, 0))
    s_spec = pl.BlockSpec((1, coutp), lambda i: (0, 0))

    itc = jnp.dtype(compute_dtype).itemsize
    work = (2 * rtot * cin * jnp.dtype(xp.dtype).itemsize
            + 2 * 9 * cin * coutp * itc
            + 2 * rp * coutp * 4 * (2 if residual is not None else 1)
            + rtot * cin * itc + rp * coutp * 4)
    flops = 2 * n * rp * cin * coutp * 9
    scratch = [pltpu.VMEM((rtot, cin), compute_dtype),
               pltpu.VMEM((rp, coutp), jnp.float32)]
    kern = _make_dconv_kernel(wp, rp, compute_dtype,
                              with_residual=residual is not None,
                              with_stats=compute_stats)
    io_bytes = int(xp.size * jnp.dtype(xp.dtype).itemsize + wg.size * itc)

    if residual is not None:
        res = jnp.pad(residual.astype(out_dtype),
                      ((0, 0), (0, hp - h), (0, wp - w), (0, coutp - cout)))
        res = res.reshape(n, rv, coutp)
        res = jnp.pad(res, ((0, 0), (0, rp - rv), (0, 0))).reshape(n * rp, coutp)
        y_flat = pl.pallas_call(
            kern, grid=(n,),
            in_specs=[x_spec, w_spec, v_spec, v_spec, im_spec, y_spec],
            out_specs=y_spec,
            out_shape=jax.ShapeDtypeStruct((n * rp, coutp), out_dtype),
            scratch_shapes=scratch,
            input_output_aliases={5: 0},           # residual buffer is overwritten
            compiler_params=_compiler_params(("parallel",), work),
            cost_estimate=pl.CostEstimate(
                flops=flops, transcendentals=0,
                bytes_accessed=io_bytes + 2 * n * rp * coutp * 4),
        )(xp, wg, sc, sh, in_mask, res)
        stats = None
    elif compute_stats:
        io = jnp.arange(rp)
        ho, wo = io // wp, io % wp
        out_mask = ((io < rv) & (ho < h) & (wo < w)).astype(jnp.float32)
        out_mask = out_mask.reshape(rp, 1)
        y_flat, ssum, ssq = pl.pallas_call(
            kern, grid=(n,),
            in_specs=[x_spec, w_spec, v_spec, v_spec, im_spec,
                      pl.BlockSpec((rp, 1), lambda i: (0, 0))],
            out_specs=(y_spec, s_spec, s_spec),
            out_shape=(jax.ShapeDtypeStruct((n * rp, coutp), out_dtype),
                       jax.ShapeDtypeStruct((1, coutp), jnp.float32),
                       jax.ShapeDtypeStruct((1, coutp), jnp.float32)),
            scratch_shapes=scratch,
            compiler_params=_compiler_params(("arbitrary",), work),
            cost_estimate=pl.CostEstimate(
                flops=flops, transcendentals=0,
                bytes_accessed=io_bytes + n * rp * coutp * 4),
        )(xp, wg, sc, sh, in_mask, out_mask)
        stats = (ssum[0, :cout], ssq[0, :cout], n * h * w)
    else:
        raise NotImplementedError("use residual=... or compute_stats=True")

    y = (y_flat.reshape(n, rp, coutp)[:, :rv, :]
         .reshape(n, hp, wp, coutp)[:, :h, :w, :cout])
    if compute_stats:
        return (y,) + stats
    return y


# ----------------------------------------------------------------------------
# Convolution wrappers for the remaining shapes.
# ----------------------------------------------------------------------------
def _im2col(x, ksize, stride, pad):
    n, h, w, c = x.shape
    xp = jnp.pad(x, ((0, 0), (pad, pad), (pad, pad), (0, 0)))
    ho = (h + 2 * pad - ksize) // stride + 1
    wo = (w + 2 * pad - ksize) // stride + 1
    cols = []
    for kh in range(ksize):
        for kw in range(ksize):
            cols.append(
                xp[:, kh:kh + stride * ho:stride, kw:kw + stride * wo:stride, :])
    patches = jnp.concatenate(cols, axis=-1)
    return patches.reshape(n * ho * wo, ksize * ksize * c), ho, wo


def conv3x3_im2col(x, w_oihw, stride, compute_dtype=jnp.float32,
                   out_dtype=jnp.float32):
    # TODO(synk): still materializes the 9x patch matrix; only used when stride!=1.
    cout, cin, _, _ = w_oihw.shape
    a, ho, wo = _im2col(x.astype(compute_dtype), 3, stride, 1)
    wg = jnp.transpose(w_oihw, (2, 3, 1, 0)).reshape(9 * cin, cout)
    y = pallas_matmul(a, wg, compute_dtype=compute_dtype, out_dtype=out_dtype)
    return y.reshape(x.shape[0], ho, wo, cout)


def conv1x1(x, w_oihw, stride, compute_dtype=jnp.float32):
    cout, cin, _, _ = w_oihw.shape
    xs = x[:, ::stride, ::stride, :]
    n, ho, wo, _ = xs.shape
    wg = jnp.transpose(w_oihw, (2, 3, 1, 0)).reshape(cin, cout)
    y = pallas_matmul(xs.reshape(n * ho * wo, cin), wg,
                      compute_dtype=compute_dtype)
    return y.reshape(n, ho, wo, cout)


# ----------------------------------------------------------------------------
# PreActBlock forward
# ----------------------------------------------------------------------------
@functools.partial(jax.jit, static_argnames=("stride", "use_bf16"))
def preact_block_forward(x_nchw, params, stride, use_bf16=False):
    # use_bf16: bf16 MXU operands with f32 accumulation -- beneficial on v5e,
    # v6e and v7x alike (the MXU is native bf16 on all three); BN math, batch
    # statistics and the residual add stay f32.  Default False only so the
    # strict f32 correctness check below is meaningful.
    cd = jnp.bfloat16 if use_bf16 else jnp.float32
    x = jnp.transpose(x_nchw, (0, 2, 3, 1)).astype(jnp.float32)   # NCHW -> NHWC

    # BN1 (training-mode batch stats) + ReLU, materialized once.
    s1, sq1, cnt1 = bn_stats(x)
    scale1, shift1 = _bn_scale_shift(params["bn1_gamma"], params["bn1_beta"],
                                     s1, sq1, cnt1)
    a1 = bn_apply_relu(x, scale1, shift1, out_dtype=cd)

    if "shortcut_w" in params:
        shortcut = conv1x1(a1, params["shortcut_w"], stride, cd)
    else:
        shortcut = x

    if stride == 1:
        # Direct conv with BN2 statistics fused into the epilogue.
        y1, s2, sq2, cnt2 = conv3x3_s1_direct(
            a1, params["conv1_w"], compute_stats=True,
            compute_dtype=cd, out_dtype=cd)
    else:
        y1 = conv3x3_im2col(a1, params["conv1_w"], stride, cd, out_dtype=cd)
        s2, sq2, cnt2 = bn_stats(y1)

    scale2, shift2 = _bn_scale_shift(params["bn2_gamma"], params["bn2_beta"],
                                     s2, sq2, cnt2)

    # conv2: BN2 normalize+ReLU fused into the prologue, residual fused into the
    # epilogue (residual buffer aliased to the output).
    out = conv3x3_s1_direct(y1, params["conv2_w"], scale=scale2, shift=shift2,
                            residual=shortcut, compute_dtype=cd,
                            out_dtype=jnp.float32)
    return jnp.transpose(out, (0, 3, 1, 2))                        # NHWC -> NCHW


def init_params(key, in_planes, planes, stride):
    ks = jax.random.split(key, 7)
    params = {
        "bn1_gamma": jax.random.uniform(ks[0], (in_planes,), jnp.float32, 0.5, 1.5),
        "bn1_beta": 0.1 * jax.random.normal(ks[1], (in_planes,), jnp.float32),
        "conv1_w": jax.random.normal(ks[2], (planes, in_planes, 3, 3), jnp.float32)
        * (1.0 / (9 * in_planes)) ** 0.5,
        "bn2_gamma": jax.random.uniform(ks[3], (planes,), jnp.float32, 0.5, 1.5),
        "bn2_beta": 0.1 * jax.random.normal(ks[4], (planes,), jnp.float32),
        "conv2_w": jax.random.normal(ks[5], (planes, planes, 3, 3), jnp.float32)
        * (1.0 / (9 * planes)) ** 0.5,
    }
    if stride != 1 or in_planes != planes:
        params["shortcut_w"] = (
            jax.random.normal(ks[6], (planes, in_planes, 1, 1), jnp.float32)
            * (1.0 / in_planes) ** 0.5
        )
    return params


# ----------------------------------------------------------------------------
# Pure-JAX reference (correctness checking only)
# ----------------------------------------------------------------------------
def _ref_bn_relu(x, g, b):
    mean = x.mean(axis=(0, 1, 2), keepdims=True)
    var = jnp.square(x - mean).mean(axis=(0, 1, 2), keepdims=True)
    y = (x - mean) * lax.rsqrt(var + BN_EPS) * g.reshape(1, 1, 1, -1) \
        + b.reshape(1, 1, 1, -1)
    return jnp.maximum(y, 0.0)


def _ref_conv(x, w_oihw, stride, pad):
    w = jnp.transpose(w_oihw, (2, 3, 1, 0))
    return lax.conv_general_dilated(
        x, w, (stride, stride), [(pad, pad), (pad, pad)],
        dimension_numbers=("NHWC", "HWIO", "NHWC"))


def ref_forward(x_nchw, params, stride):
    x = jnp.transpose(x_nchw, (0, 2, 3, 1))
    out = _ref_bn_relu(x, params["bn1_gamma"], params["bn1_beta"])
    if "shortcut_w" in params:
        shortcut = _ref_conv(out, params["shortcut_w"], stride, 0)
    else:
        shortcut = x
    out = _ref_conv(out, params["conv1_w"], stride, 1)
    out = _ref_bn_relu(out, params["bn2_gamma"], params["bn2_beta"])
    out = _ref_conv(out, params["conv2_w"], 1, 1) + shortcut
    return jnp.transpose(out, (0, 3, 1, 2))


if __name__ == "__main__":
    key = jax.random.PRNGKey(0)
    kx, kp1, kp2 = jax.random.split(key, 3)
    x = jax.random.normal(kx, (2, 4, 16, 16), jnp.float32)   # NCHW, like PyTorch

    # Config A: in_planes=4 -> planes=8, stride=2 (1x1-conv shortcut, im2col conv1)
    p_a = init_params(kp1, 4, 8, 2)
    y_a = jax.block_until_ready(preact_block_forward(x, p_a, stride=2))
    r_a = ref_forward(x, p_a, 2)
    assert y_a.shape == (2, 8, 8, 8), y_a.shape
    assert jnp.allclose(y_a, r_a, atol=2e-3, rtol=2e-3), \
        float(jnp.max(jnp.abs(y_a - r_a)))

    # Config B: in_planes=planes=4, stride=1 (identity shortcut, direct convs)
    p_b = init_params(kp2, 4, 4, 1)
    y_b = jax.block_until_ready(preact_block_forward(x, p_b, stride=1))
    r_b = ref_forward(x, p_b, 1)
    assert y_b.shape == (2, 4, 16, 16), y_b.shape
    assert jnp.allclose(y_b, r_b, atol=2e-3, rtol=2e-3), \
        float(jnp.max(jnp.abs(y_b - r_b)))

    # bf16 MXU operands, f32 accumulation -- loose check against the f32 reference.
    y_bf = jax.block_until_ready(preact_block_forward(x, p_a, stride=2, use_bf16=True))
    assert y_bf.shape == (2, 8, 8, 8), y_bf.shape
    assert jnp.allclose(y_bf, r_a, atol=1e-1, rtol=1e-1)

    print("KERNEL_OK")
</pallas_src>

<mosaic_0001>
module attributes {stable_mosaic.version = 11 : i64} {
  func.func @_bn_stats_kernel(%arg0: i32, %arg1: i32, %arg2: memref<8x512xf32, #tpu.memory_space<vmem>>, %arg3: memref<8x512xf32, #tpu.memory_space<vmem>>, %arg4: memref<8x512xf32, #tpu.memory_space<vmem>>) attributes {dimension_semantics = [#tpu.dimension_semantics<parallel>, #tpu.dimension_semantics<arbitrary>], iteration_bounds = array<i64: 2, 1>, scalar_prefetch = 0 : i64, scratch_operands = 0 : i64, tpu.core_type = #tpu.core_type<tc>, window_params = [{transform_indices = @transform_0, window_bounds = array<i64: 8, 512>}, {transform_indices = @transform_1, window_bounds = array<i64: 8, 512>}, {transform_indices = @transform_2, window_bounds = array<i64: 8, 512>}]} {
    %c0_i32 = arith.constant 0 : i32
    %0 = arith.cmpi eq, %arg1, %c0_i32 : i32
    %1 = arith.extui %0 : i1 to i32
    %c0_i32_0 = arith.constant 0 : i32
    %2 = arith.cmpi ne, %1, %c0_i32_0 : i32
    scf.if %2 {
      %cst_11 = arith.constant 0.000000e+00 : f32
      %17 = vector.broadcast %cst_11 : f32 to vector<8x512xf32>
      %c0_12 = arith.constant 0 : index
      %c0_13 = arith.constant 0 : index
      %18 = vector.load %arg3[%c0_12, %c0_13] : memref<8x512xf32, #tpu.memory_space<vmem>>, vector<8x512xf32>
      tpu.vector_store %arg3[%c0_12, %c0_13], %17 {strides = array<i32>} : memref<8x512xf32, #tpu.memory_space<vmem>>, vector<8x512xf32>,
      %cst_14 = arith.constant 0.000000e+00 : f32
      %19 = vector.broadcast %cst_14 : f32 to vector<8x512xf32>
      %c0_15 = arith.constant 0 : index
      %c0_16 = arith.constant 0 : index
      %20 = vector.load %arg4[%c0_15, %c0_16] : memref<8x512xf32, #tpu.memory_space<vmem>>, vector<8x512xf32>
      tpu.vector_store %arg4[%c0_15, %c0_16], %19 {strides = array<i32>} : memref<8x512xf32, #tpu.memory_space<vmem>>, vector<8x512xf32>,
    } else {
    }
    %c0 = arith.constant 0 : index
    %c0_1 = arith.constant 0 : index
    %3 = vector.load %arg2[%c0, %c0_1] : memref<8x512xf32, #tpu.memory_space<vmem>>, vector<8x512xf32>
    %c0_2 = arith.constant 0 : index
    %c0_3 = arith.constant 0 : index
    %4 = vector.load %arg3[%c0_2, %c0_3] : memref<8x512xf32, #tpu.memory_space<vmem>>, vector<8x512xf32>
    %cst = arith.constant dense<0.000000e+00> : vector<512xf32>
    %5 = vector.multi_reduction <add>, %3, %cst [0] : vector<8x512xf32> to vector<512xf32>
    %6 = vector.shape_cast %5 : vector<512xf32> to vector<1x512xf32>
    %7 = vector.broadcast %6 : vector<1x512xf32> to vector<8x512xf32>
    %8 = arith.addf %4, %7 : vector<8x512xf32>
    %c0_4 = arith.constant 0 : index
    %c0_5 = arith.constant 0 : index
    %9 = vector.load %arg3[%c0_4, %c0_5] : memref<8x512xf32, #tpu.memory_space<vmem>>, vector<8x512xf32>
    tpu.vector_store %arg3[%c0_4, %c0_5], %8 {strides = array<i32>} : memref<8x512xf32, #tpu.memory_space<vmem>>, vector<8x512xf32>,
    %c0_6 = arith.constant 0 : index
    %c0_7 = arith.constant 0 : index
    %10 = vector.load %arg4[%c0_6, %c0_7] : memref<8x512xf32, #tpu.memory_space<vmem>>, vector<8x512xf32>
    %11 = arith.mulf %3, %3 : vector<8x512xf32>
    %cst_8 = arith.constant dense<0.000000e+00> : vector<512xf32>
    %12 = vector.multi_reduction <add>, %11, %cst_8 [0] : vector<8x512xf32> to vector<512xf32>
    %13 = vector.shape_cast %12 : vector<512xf32> to vector<1x512xf32>
    %14 = vector.broadcast %13 : vector<1x512xf32> to vector<8x512xf32>
    %15 = arith.addf %10, %14 : vector<8x512xf32>
    %c0_9 = arith.constant 0 : index
    %c0_10 = arith.constant 0 : index
    %16 = vector.load %arg4[%c0_9, %c0_10] : memref<8x512xf32, #tpu.memory_space<vmem>>, vector<8x512xf32>
    tpu.vector_store %arg4[%c0_9, %c0_10], %15 {strides = array<i32>} : memref<8x512xf32, #tpu.memory_space<vmem>>, vector<8x512xf32>,
    return
  }
  func.func @transform_0(%arg0: i32, %arg1: i32) -> (i32, i32) {
    %c1_i32 = arith.constant 1 : i32
    %0 = arith.muli %arg0, %c1_i32 : i32
    %1 = arith.addi %0, %arg1 : i32
    %c0_i32 = arith.constant 0 : i32
    %c0_i32_0 = arith.constant 0 : i32
    return %1, %c0_i32 : i32, i32
  }
  func.func @transform_1(%arg0: i32, %arg1: i32) -> (i32, i32) {
    %c0_i32 = arith.constant 0 : i32
    %c0_i32_0 = arith.constant 0 : i32
    return %arg0, %c0_i32 : i32, i32
  }
  func.func @transform_2(%arg0: i32, %arg1: i32) -> (i32, i32) {
    %c0_i32 = arith.constant 0 : i32
    %c0_i32_0 = arith.constant 0 : i32
    return %arg0, %c0_i32 : i32, i32
  }
}

module attributes {stable_mosaic.version = 11 : i64} {
  func.func @_bn_apply_kernel(%arg0: i32, %arg1: memref<8x512xf32, #tpu.memory_space<vmem>>, %arg2: memref<1x512xf32, #tpu.memory_space<vmem>>, %arg3: memref<1x512xf32, #tpu.memory_space<vmem>>, %arg4: memref<8x512xf32, #tpu.memory_space<vmem>>) attributes {dimension_semantics = [#tpu.dimension_semantics<parallel>], iteration_bounds = array<i64: 1>, scalar_prefetch = 0 : i64, scratch_operands = 0 : i64, tpu.core_type = #tpu.core_type<tc>, window_params = [{transform_indices = @transform_0, window_bounds = array<i64: 8, 512>}, {pipeline_mode = #tpu.pipeline_mode<synchronous>, transform_indices = @transform_1, window_bounds = array<i64: 1, 512>}, {pipeline_mode = #tpu.pipeline_mode<synchronous>, transform_indices = @transform_2, window_bounds = array<i64: 1, 512>}, {transform_indices = @transform_3, window_bounds = array<i64: 8, 512>}]} {
    %c0 = arith.constant 0 : index
    %c0_0 = arith.constant 0 : index
    %0 = vector.load %arg1[%c0, %c0_0] : memref<8x512xf32, #tpu.memory_space<vmem>>, vector<8x512xf32>
    %c0_1 = arith.constant 0 : index
    %c0_2 = arith.constant 0 : index
    %1 = vector.load %arg2[%c0_1, %c0_2] : memref<1x512xf32, #tpu.memory_space<vmem>>, vector<1x512xf32>
    %2 = vector.broadcast %1 : vector<1x512xf32> to vector<8x512xf32>
    %3 = arith.mulf %0, %2 : vector<8x512xf32>
    %c0_3 = arith.constant 0 : index
    %c0_4 = arith.constant 0 : index
    %4 = vector.load %arg3[%c0_3, %c0_4] : memref<1x512xf32, #tpu.memory_space<vmem>>, vector<1x512xf32>
    %5 = vector.broadcast %4 : vector<1x512xf32> to vector<8x512xf32>
    %6 = arith.addf %3, %5 : vector<8x512xf32>
    %cst = arith.constant 0.000000e+00 : f32
    %7 = vector.broadcast %cst : f32 to vector<8x512xf32>
    %8 = arith.maximumf %6, %7 : vector<8x512xf32>
    %c0_5 = arith.constant 0 : index
    %c0_6 = arith.constant 0 : index
    %9 = vector.load %arg4[%c0_5, %c0_6] : memref<8x512xf32, #tpu.memory_space<vmem>>, vector<8x512xf32>
    tpu.vector_store %arg4[%c0_5, %c0_6], %8 {strides = array<i32>} : memref<8x512xf32, #tpu.memory_space<vmem>>, vector<8x512xf32>,
    return
  }
  func.func @transform_0(%arg0: i32) -> (i32, i32) {
    %c0_i32 = arith.constant 0 : i32
    %c0_i32_0 = arith.constant 0 : i32
    return %arg0, %c0_i32 : i32, i32
  }
  func.func @transform_1(%arg0: i32) -> (i32, i32) {
    %c0_i32 = arith.constant 0 : i32
    %c0_i32_0 = arith.constant 0 : i32
    %c0_i32_1 = arith.constant 0 : i32
    return %c0_i32, %c0_i32_0 : i32, i32
  }
  func.func @transform_2(%arg0: i32) -> (i32, i32) {
    %c0_i32 = arith.constant 0 : i32
    %c0_i32_0 = arith.constant 0 : i32
    %c0_i32_1 = arith.constant 0 : i32
    return %c0_i32, %c0_i32_0 : i32, i32
  }
  func.func @transform_3(%arg0: i32) -> (i32, i32) {
    %c0_i32 = arith.constant 0 : i32
    %c0_i32_0 = arith.constant 0 : i32
    return %arg0, %c0_i32 : i32, i32
  }
}

module attributes {stable_mosaic.version = 11 : i64} {
  func.func @kernel(%arg0: i32, %arg1: i32, %arg2: i32, %arg3: memref<128x4xf32, #tpu.memory_space<vmem>>, %arg4: memref<4x128xf32, #tpu.memory_space<vmem>>, %arg5: memref<128x128xf32, #tpu.memory_space<vmem>>, %arg6: memref<128x128xf32, #tpu.memory_space<vmem>>) attributes {dimension_semantics = [#tpu.dimension_semantics<parallel>, #tpu.dimension_semantics<parallel>, #tpu.dimension_semantics<arbitrary>], iteration_bounds = array<i64: 1, 1, 1>, scalar_prefetch = 0 : i64, scratch_operands = 1 : i64, tpu.core_type = #tpu.core_type<tc>, window_params = [{transform_indices = @transform_0, window_bounds = array<i64: 128, 4>}, {transform_indices = @transform_1, window_bounds = array<i64: 4, 128>}, {transform_indices = @transform_2, window_bounds = array<i64: 128, 128>}]} {
    %c0_i32 = arith.constant 0 : i32
    %0 = arith.cmpi eq, %arg2, %c0_i32 : i32
    %1 = arith.extui %0 : i1 to i32
    %c0_i32_0 = arith.constant 0 : i32
    %2 = arith.cmpi ne, %1, %c0_i32_0 : i32
    scf.if %2 {
      %cst_10 = arith.constant 0.000000e+00 : f32
      %12 = vector.broadcast %cst_10 : f32 to vector<128x128xf32>
      %c0_11 = arith.constant 0 : index
      %c0_12 = arith.constant 0 : index
      %13 = vector.load %arg6[%c0_11, %c0_12] : memref<128x128xf32, #tpu.memory_space<vmem>>, vector<128x128xf32>
      tpu.vector_store %arg6[%c0_11, %c0_12], %12 {strides = array<i32>} : memref<128x128xf32, #tpu.memory_space<vmem>>, vector<128x128xf32>,
    } else {
    }
    %c0 = arith.constant 0 : index
    %c0_1 = arith.constant 0 : index
    %3 = vector.load %arg4[%c0, %c0_1] : memref<4x128xf32, #tpu.memory_space<vmem>>, vector<4x128xf32>
    %c0_2 = arith.constant 0 : index
    %c0_3 = arith.constant 0 : index
    %4 = vector.load %arg6[%c0_2, %c0_3] : memref<128x128xf32, #tpu.memory_space<vmem>>, vector<128x128xf32>
    %c0_4 = arith.constant 0 : index
    %c0_5 = arith.constant 0 : index
    %5 = vector.load %arg3[%c0_4, %c0_5] : memref<128x4xf32, #tpu.memory_space<vmem>>, vector<128x4xf32>
    %cst = arith.constant dense<0.000000e+00> : vector<128x128xf32>
    %6 = tpu.matmul %5, %3, %cst {dimension_numbers = #tpu.dot_dimension_numbers<[1], [0], [0], [1], [0, 0, 1, 1], [], []>} : vector<128x4xf32>, vector<4x128xf32>, vector<128x128xf32> -> vector<128x128xf32>
    %7 = arith.addf %4, %6 : vector<128x128xf32>
    %c0_6 = arith.constant 0 : index
    %c0_7 = arith.constant 0 : index
    %8 = vector.load %arg6[%c0_6, %c0_7] : memref<128x128xf32, #tpu.memory_space<vmem>>, vector<128x128xf32>
    tpu.vector_store %arg6[%c0_6, %c0_7], %7 {strides = array<i32>} : memref<128x128xf32, #tpu.memory_space<vmem>>, vector<128x128xf32>,
    %c0_i32_8 = arith.constant 0 : i32
    %9 = arith.cmpi eq, %arg2, %c0_i32_8 : i32
    %10 = arith.extui %9 : i1 to i32
    %c0_i32_9 = arith.constant 0 : i32
    %11 = arith.cmpi ne, %10, %c0_i32_9 : i32
    scf.if %11 {
      %c0_10 = arith.constant 0 : index
      %c0_11 = arith.constant 0 : index
      %12 = vector.load %arg6[%c0_10, %c0_11] : memref<128x128xf32, #tpu.memory_space<vmem>>, vector<128x128xf32>
      %c0_12 = arith.constant 0 : index
      %c0_13 = arith.constant 0 : index
      %13 = vector.load %arg5[%c0_12, %c0_13] : memref<128x128xf32, #tpu.memory_space<vmem>>, vector<128x128xf32>
      tpu.vector_store %arg5[%c0_12, %c0_13], %12 {strides = array<i32>} : memref<128x128xf32, #tpu.memory_space<vmem>>, vector<128x128xf32>,
    } else {
    }
    return
  }
  func.func @transform_0(%arg0: i32, %arg1: i32, %arg2: i32) -> (i32, i32) {
    %c0_i32 = arith.constant 0 : i32
    return %arg1, %arg2 : i32, i32
  }
  func.func @transform_1(%arg0: i32, %arg1: i32, %arg2: i32) -> (i32, i32) {
    %c0_i32 = arith.constant 0 : i32
    %c0_i32_0 = arith.constant 0 : i32
    return %c0_i32, %arg0 : i32, i32
  }
  func.func @transform_2(%arg0: i32, %arg1: i32, %arg2: i32) -> (i32, i32) {
    %c0_i32 = arith.constant 0 : i32
    return %arg1, %arg0 : i32, i32
  }
}

module attributes {stable_mosaic.version = 11 : i64} {
  func.func @kernel(%arg0: i32, %arg1: i32, %arg2: i32, %arg3: memref<128x36xf32, #tpu.memory_space<vmem>>, %arg4: memref<36x128xf32, #tpu.memory_space<vmem>>, %arg5: memref<128x128xf32, #tpu.memory_space<vmem>>, %arg6: memref<128x128xf32, #tpu.memory_space<vmem>>) attributes {dimension_semantics = [#tpu.dimension_semantics<parallel>, #tpu.dimension_semantics<parallel>, #tpu.dimension_semantics<arbitrary>], iteration_bounds = array<i64: 1, 1, 1>, scalar_prefetch = 0 : i64, scratch_operands = 1 : i64, tpu.core_type = #tpu.core_type<tc>, window_params = [{transform_indices = @transform_0, window_bounds = array<i64: 128, 36>}, {transform_indices = @transform_1, window_bounds = array<i64: 36, 128>}, {transform_indices = @transform_2, window_bounds = array<i64: 128, 128>}]} {
    %c0_i32 = arith.constant 0 : i32
    %0 = arith.cmpi eq, %arg2, %c0_i32 : i32
    %1 = arith.extui %0 : i1 to i32
    %c0_i32_0 = arith.constant 0 : i32
    %2 = arith.cmpi ne, %1, %c0_i32_0 : i32
    scf.if %2 {
      %cst_10 = arith.constant 0.000000e+00 : f32
      %12 = vector.broadcast %cst_10 : f32 to vector<128x128xf32>
      %c0_11 = arith.constant 0 : index
      %c0_12 = arith.constant 0 : index
      %13 = vector.load %arg6[%c0_11, %c0_12] : memref<128x128xf32, #tpu.memory_space<vmem>>, vector<128x128xf32>
      tpu.vector_store %arg6[%c0_11, %c0_12], %12 {strides = array<i32>} : memref<128x128xf32, #tpu.memory_space<vmem>>, vector<128x128xf32>,
    } else {
    }
    %c0 = arith.constant 0 : index
    %c0_1 = arith.constant 0 : index
    %3 = vector.load %arg4[%c0, %c0_1] : memref<36x128xf32, #tpu.memory_space<vmem>>, vector<36x128xf32>
    %c0_2 = arith.constant 0 : index
    %c0_3 = arith.constant 0 : index
    %4 = vector.load %arg6[%c0_2, %c0_3] : memref<128x128xf32, #tpu.memory_space<vmem>>, vector<128x128xf32>
    %c0_4 = arith.constant 0 : index
    %c0_5 = arith.constant 0 : index
    %5 = vector.load %arg3[%c0_4, %c0_5] : memref<128x36xf32, #tpu.memory_space<vmem>>, vector<128x36xf32>
    %cst = arith.constant dense<0.000000e+00> : vector<128x128xf32>
    %6 = tpu.matmul %5, %3, %cst {dimension_numbers = #tpu.dot_dimension_numbers<[1], [0], [0], [1], [0, 0, 1, 1], [], []>} : vector<128x36xf32>, vector<36x128xf32>, vector<128x128xf32> -> vector<128x128xf32>
    %7 = arith.addf %4, %6 : vector<128x128xf32>
    %c0_6 = arith.constant 0 : index
    %c0_7 = arith.constant 0 : index
    %8 = vector.load %arg6[%c0_6, %c0_7] : memref<128x128xf32, #tpu.memory_space<vmem>>, vector<128x128xf32>
    tpu.vector_store %arg6[%c0_6, %c0_7], %7 {strides = array<i32>} : memref<128x128xf32, #tpu.memory_space<vmem>>, vector<128x128xf32>,
    %c0_i32_8 = arith.constant 0 : i32
    %9 = arith.cmpi eq, %arg2, %c0_i32_8 : i32
    %10 = arith.extui %9 : i1 to i32
    %c0_i32_9 = arith.constant 0 : i32
    %11 = arith.cmpi ne, %10, %c0_i32_9 : i32
    scf.if %11 {
      %c0_10 = arith.constant 0 : index
      %c0_11 = arith.constant 0 : index
      %12 = vector.load %arg6[%c0_10, %c0_11] : memref<128x128xf32, #tpu.memory_space<vmem>>, vector<128x128xf32>
      %c0_12 = arith.constant 0 : index
      %c0_13 = arith.constant 0 : index
      %13 = vector.load %arg5[%c0_12, %c0_13] : memref<128x128xf32, #tpu.memory_space<vmem>>, vector<128x128xf32>
      tpu.vector_store %arg5[%c0_12, %c0_13], %12 {strides = array<i32>} : memref<128x128xf32, #tpu.memory_space<vmem>>, vector<128x128xf32>,
    } else {
    }
    return
  }
  func.func @transform_0(%arg0: i32, %arg1: i32, %arg2: i32) -> (i32, i32) {
    %c0_i32 = arith.constant 0 : i32
    return %arg1, %arg2 : i32, i32
  }
  func.func @transform_1(%arg0: i32, %arg1: i32, %arg2: i32) -> (i32, i32) {
    %c0_i32 = arith.constant 0 : i32
    %c0_i32_0 = arith.constant 0 : i32
    return %c0_i32, %arg0 : i32, i32
  }
  func.func @transform_2(%arg0: i32, %arg1: i32, %arg2: i32) -> (i32, i32) {
    %c0_i32 = arith.constant 0 : i32
    return %arg1, %arg0 : i32, i32
  }
}

module attributes {stable_mosaic.version = 11 : i64} {
  func.func @kernel(%arg0: i32, %arg1: memref<144x8xf32, #tpu.memory_space<vmem>>, %arg2: memref<9x8x128xf32, #tpu.memory_space<vmem>>, %arg3: memref<1x8xf32, #tpu.memory_space<vmem>>, %arg4: memref<1x8xf32, #tpu.memory_space<vmem>>, %arg5: memref<144x1xf32, #tpu.memory_space<vmem>>, %arg6: memref<112x128xf32, #tpu.memory_space<vmem>>, %arg7: memref<112x128xf32, #tpu.memory_space<vmem>>, %arg8: memref<144x8xf32, #tpu.memory_space<vmem>>, %arg9: memref<112x128xf32, #tpu.memory_space<vmem>>) attributes {dimension_semantics = [#tpu.dimension_semantics<parallel>], iteration_bounds = array<i64: 2>, scalar_prefetch = 0 : i64, scratch_operands = 2 : i64, tpu.core_type = #tpu.core_type<tc>, window_params = [{transform_indices = @transform_0, window_bounds = array<i64: 144, 8>}, {pipeline_mode = #tpu.pipeline_mode<synchronous>, transform_indices = @transform_1, window_bounds = array<i64: 9, 8, 128>}, {pipeline_mode = #tpu.pipeline_mode<synchronous>, transform_indices = @transform_2, window_bounds = array<i64: 1, 8>}, {pipeline_mode = #tpu.pipeline_mode<synchronous>, transform_indices = @transform_3, window_bounds = array<i64: 1, 8>}, {pipeline_mode = #tpu.pipeline_mode<synchronous>, transform_indices = @transform_4, window_bounds = array<i64: 144, 1>}, {transform_indices = @transform_5, window_bounds = array<i64: 112, 128>}, {transform_indices = @transform_6, window_bounds = array<i64: 112, 128>}]} {
    %c0 = arith.constant 0 : index
    %c0_0 = arith.constant 0 : index
    %0 = vector.load %arg1[%c0, %c0_0] : memref<144x8xf32, #tpu.memory_space<vmem>>, vector<144x8xf32>
    %c0_1 = arith.constant 0 : index
    %c0_2 = arith.constant 0 : index
    %1 = vector.load %arg3[%c0_1, %c0_2] : memref<1x8xf32, #tpu.memory_space<vmem>>, vector<1x8xf32>
    %2 = vector.broadcast %1 : vector<1x8xf32> to vector<144x8xf32>
    %3 = arith.mulf %0, %2 : vector<144x8xf32>
    %c0_3 = arith.constant 0 : index
    %c0_4 = arith.constant 0 : index
    %4 = vector.load %arg4[%c0_3, %c0_4] : memref<1x8xf32, #tpu.memory_space<vmem>>, vector<1x8xf32>
    %5 = vector.broadcast %4 : vector<1x8xf32> to vector<144x8xf32>
    %6 = arith.addf %3, %5 : vector<144x8xf32>
    %cst = arith.constant 0.000000e+00 : f32
    %7 = vector.broadcast %cst : f32 to vector<144x8xf32>
    %8 = arith.maximumf %6, %7 : vector<144x8xf32>
    %c0_5 = arith.constant 0 : index
    %c0_6 = arith.constant 0 : index
    %9 = vector.load %arg5[%c0_5, %c0_6] : memref<144x1xf32, #tpu.memory_space<vmem>>, vector<144x1xf32>
    %10 = vector.broadcast %9 : vector<144x1xf32> to vector<144x8xf32>
    %11 = arith.mulf %8, %10 : vector<144x8xf32>
    %c0_7 = arith.constant 0 : index
    %c0_8 = arith.constant 0 : index
    %12 = vector.load %arg8[%c0_7, %c0_8] : memref<144x8xf32, #tpu.memory_space<vmem>>, vector<144x8xf32>
    tpu.vector_store %arg8[%c0_7, %c0_8], %11 {strides = array<i32>} : memref<144x8xf32, #tpu.memory_space<vmem>>, vector<144x8xf32>,
    %cst_9 = arith.constant 0.000000e+00 : f32
    %13 = vector.broadcast %cst_9 : f32 to vector<112x128xf32>
    %c0_10 = arith.constant 0 : index
    %c0_11 = arith.constant 0 : index
    %14 = vector.load %arg9[%c0_10, %c0_11] : memref<112x128xf32, #tpu.memory_space<vmem>>, vector<112x128xf32>
    tpu.vector_store %arg9[%c0_10, %c0_11], %13 {strides = array<i32>} : memref<112x128xf32, #tpu.memory_space<vmem>>, vector<112x128xf32>,
    %c0_12 = arith.constant 0 : index
    %c0_13 = arith.constant 0 : index
    %15 = vector.load %arg9[%c0_12, %c0_13] : memref<112x128xf32, #tpu.memory_space<vmem>>, vector<112x128xf32>
    %c0_14 = arith.constant 0 : index
    %c0_15 = arith.constant 0 : index
    %16 = vector.load %arg8[%c0_14, %c0_15] : memref<144x8xf32, #tpu.memory_space<vmem>>, vector<112x8xf32>
    %c0_16 = arith.constant 0 : index
    %c0_17 = arith.constant 0 : index
    %c0_18 = arith.constant 0 : index
    %17 = vector.load %arg2[%c0_16, %c0_17, %c0_18] : memref<9x8x128xf32, #tpu.memory_space<vmem>>, vector<1x8x128xf32>
    %18 = vector.shape_cast %17 : vector<1x8x128xf32> to vector<8x128xf32>
    %cst_19 = arith.constant dense<0.000000e+00> : vector<112x128xf32>
    %19 = tpu.matmul %16, %18, %cst_19 {dimension_numbers = #tpu.dot_dimension_numbers<[1], [0], [0], [1], [0, 0, 1, 1], [], []>} : vector<112x8xf32>, vector<8x128xf32>, vector<112x128xf32> -> vector<112x128xf32>
    %20 = arith.addf %15, %19 : vector<112x128xf32>
    %c0_20 = arith.constant 0 : index
    %c0_21 = arith.constant 0 : index
    %21 = vector.load %arg9[%c0_20, %c0_21] : memref<112x128xf32, #tpu.memory_space<vmem>>, vector<112x128xf32>
    tpu.vector_store %arg9[%c0_20, %c0_21], %20 {strides = array<i32>} : memref<112x128xf32, #tpu.memory_space<vmem>>, vector<112x128xf32>,
    %c0_22 = arith.constant 0 : index
    %c0_23 = arith.constant 0 : index
    %22 = vector.load %arg9[%c0_22, %c0_23] : memref<112x128xf32, #tpu.memory_space<vmem>>, vector<112x128xf32>
    %c1 = arith.constant 1 : index
    %c0_24 = arith.constant 0 : index
    %23 = vector.load %arg8[%c1, %c0_24] : memref<144x8xf32, #tpu.memory_space<vmem>>, vector<112x8xf32>
    %c1_25 = arith.constant 1 : index
    %c0_26 = arith.constant 0 : index
    %c0_27 = arith.constant 0 : index
    %24 = vector.load %arg2[%c1_25, %c0_26, %c0_27] : memref<9x8x128xf32, #tpu.memory_space<vmem>>, vector<1x8x128xf32>
    %25 = vector.shape_cast %24 : vector<1x8x128xf32> to vector<8x128xf32>
    %cst_28 = arith.constant dense<0.000000e+00> : vector<112x128xf32>
    %26 = tpu.matmul %23, %25, %cst_28 {dimension_numbers = #tpu.dot_dimension_numbers<[1], [0], [0], [1], [0, 0, 1, 1], [], []>} : vector<112x8xf32>, vector<8x128xf32>, vector<112x128xf32> -> vector<112x128xf32>
    %27 = arith.addf %22, %26 : vector<112x128xf32>
    %c0_29 = arith.constant 0 : index
    %c0_30 = arith.constant 0 : index
    %28 = vector.load %arg9[%c0_29, %c0_30] : memref<112x128xf32, #tpu.memory_space<vmem>>, vector<112x128xf32>
    tpu.vector_store %arg9[%c0_29, %c0_30], %27 {strides = array<i32>} : memref<112x128xf32, #tpu.memory_space<vmem>>, vector<112x128xf32>,
    %c0_31 = arith.constant 0 : index
    %c0_32 = arith.constant 0 : index
    %29 = vector.load %arg9[%c0_31, %c0_32] : memref<112x128xf32, #tpu.memory_space<vmem>>, vector<112x128xf32>
    %c2 = arith.constant 2 : index
    %c0_33 = arith.constant 0 : index
    %30 = vector.load %arg8[%c2, %c0_33] : memref<144x8xf32, #tpu.memory_space<vmem>>, vector<112x8xf32>
    %c2_34 = arith.constant 2 : index
    %c0_35 = arith.constant 0 : index
    %c0_36 = arith.constant 0 : index
    %31 = vector.load %arg2[%c2_34, %c0_35, %c0_36] : memref<9x8x128xf32, #tpu.memory_space<vmem>>, vector<1x8x128xf32>
    %32 = vector.shape_cast %31 : vector<1x8x128xf32> to vector<8x128xf32>
    %cst_37 = arith.constant dense<0.000000e+00> : vector<112x128xf32>
    %33 = tpu.matmul %30, %32, %cst_37 {dimension_numbers = #tpu.dot_dimension_numbers<[1], [0], [0], [1], [0, 0, 1, 1], [], []>} : vector<112x8xf32>, vector<8x128xf32>, vector<112x128xf32> -> vector<112x128xf32>
    %34 = arith.addf %29, %33 : vector<112x128xf32>
    %c0_38 = arith.constant 0 : index
    %c0_39 = arith.constant 0 : index
    %35 = vector.load %arg9[%c0_38, %c0_39] : memref<112x128xf32, #tpu.memory_space<vmem>>, vector<112x128xf32>
    tpu.vector_store %arg9[%c0_38, %c0_39], %34 {strides = array<i32>} : memref<112x128xf32, #tpu.memory_space<vmem>>, vector<112x128xf32>,
    %c0_40 = arith.constant 0 : index
    %c0_41 = arith.constant 0 : index
    %36 = vector.load %arg9[%c0_40, %c0_41] : memref<112x128xf32, #tpu.memory_space<vmem>>, vector<112x128xf32>
    %c10 = arith.constant 10 : index
    %c0_42 = arith.constant 0 : index
    %37 = vector.load %arg8[%c10, %c0_42] : memref<144x8xf32, #tpu.memory_space<vmem>>, vector<112x8xf32>
    %c3 = arith.constant 3 : index
    %c0_43 = arith.constant 0 : index
    %c0_44 = arith.constant 0 : index
    %38 = vector.load %arg2[%c3, %c0_43, %c0_44] : memref<9x8x128xf32, #tpu.memory_space<vmem>>, vector<1x8x128xf32>
    %39 = vector.shape_cast %38 : vector<1x8x128xf32> to vector<8x128xf32>
    %cst_45 = arith.constant dense<0.000000e+00> : vector<112x128xf32>
    %40 = tpu.matmul %37, %39, %cst_45 {dimension_numbers = #tpu.dot_dimension_numbers<[1], [0], [0], [1], [0, 0, 1, 1], [], []>} : vector<112x8xf32>, vector<8x128xf32>, vector<112x128xf32> -> vector<112x128xf32>
    %41 = arith.addf %36, %40 : vector<112x128xf32>
    %c0_46 = arith.constant 0 : index
    %c0_47 = arith.constant 0 : index
    %42 = vector.load %arg9[%c0_46, %c0_47] : memref<112x128xf32, #tpu.memory_space<vmem>>, vector<112x128xf32>
    tpu.vector_store %arg9[%c0_46, %c0_47], %41 {strides = array<i32>} : memref<112x128xf32, #tpu.memory_space<vmem>>, vector<112x128xf32>,
    %c0_48 = arith.constant 0 : index
    %c0_49 = arith.constant 0 : index
    %43 = vector.load %arg9[%c0_48, %c0_49] : memref<112x128xf32, #tpu.memory_space<vmem>>, vector<112x128xf32>
    %c11 = arith.constant 11 : index
    %c0_50 = arith.constant 0 : index
    %44 = vector.load %arg8[%c11, %c0_50] : memref<144x8xf32, #tpu.memory_space<vmem>>, vector<112x8xf32>
    %c4 = arith.constant 4 : index
    %c0_51 = arith.constant 0 : index
    %c0_52 = arith.constant 0 : index
    %45 = vector.load %arg2[%c4, %c0_51, %c0_52] : memref<9x8x128xf32, #tpu.memory_space<vmem>>, vector<1x8x128xf32>
    %46 = vector.shape_cast %45 : vector<1x8x128xf32> to vector<8x128xf32>
    %cst_53 = arith.constant dense<0.000000e+00> : vector<112x128xf32>
    %47 = tpu.matmul %44, %46, %cst_53 {dimension_numbers = #tpu.dot_dimension_numbers<[1], [0], [0], [1], [0, 0, 1, 1], [], []>} : vector<112x8xf32>, vector<8x128xf32>, vector<112x128xf32> -> vector<112x128xf32>
    %48 = arith.addf %43, %47 : vector<112x128xf32>
    %c0_54 = arith.constant 0 : index
    %c0_55 = arith.constant 0 : index
    %49 = vector.load %arg9[%c0_54, %c0_55] : memref<112x128xf32, #tpu.memory_space<vmem>>, vector<112x128xf32>
    tpu.vector_store %arg9[%c0_54, %c0_55], %48 {strides = array<i32>} : memref<112x128xf32, #tpu.memory_space<vmem>>, vector<112x128xf32>,
    %c0_56 = arith.constant 0 : index
    %c0_57 = arith.constant 0 : index
    %50 = vector.load %arg9[%c0_56, %c0_57] : memref<112x128xf32, #tpu.memory_space<vmem>>, vector<112x128xf32>
    %c12 = arith.constant 12 : index
    %c0_58 = arith.constant 0 : index
    %51 = vector.load %arg8[%c12, %c0_58] : memref<144x8xf32, #tpu.memory_space<vmem>>, vector<112x8xf32>
    %c5 = arith.constant 5 : index
    %c0_59 = arith.constant 0 : index
    %c0_60 = arith.constant 0 : index
    %52 = vector.load %arg2[%c5, %c0_59, %c0_60] : memref<9x8x128xf32, #tpu.memory_space<vmem>>, vector<1x8x128xf32>
    %53 = vector.shape_cast %52 : vector<1x8x128xf32> to vector<8x128xf32>
    %cst_61 = arith.constant dense<0.000000e+00> : vector<112x128xf32>
    %54 = tpu.matmul %51, %53, %cst_61 {dimension_numbers = #tpu.dot_dimension_numbers<[1], [0], [0], [1], [0, 0, 1, 1], [], []>} : vector<112x8xf32>, vector<8x128xf32>, vector<112x128xf32> -> vector<112x128xf32>
    %55 = arith.addf %50, %54 : vector<112x128xf32>
    %c0_62 = arith.constant 0 : index
    %c0_63 = arith.constant 0 : index
    %56 = vector.load %arg9[%c0_62, %c0_63] : memref<112x128xf32, #tpu.memory_space<vmem>>, vector<112x128xf32>
    tpu.vector_store %arg9[%c0_62, %c0_63], %55 {strides = array<i32>} : memref<112x128xf32, #tpu.memory_space<vmem>>, vector<112x128xf32>,
    %c0_64 = arith.constant 0 : index
    %c0_65 = arith.constant 0 : index
    %57 = vector.load %arg9[%c0_64, %c0_65] : memref<112x128xf32, #tpu.memory_space<vmem>>, vector<112x128xf32>
    %c20 = arith.constant 20 : index
    %c0_66 = arith.constant 0 : index
    %58 = vector.load %arg8[%c20, %c0_66] : memref<144x8xf32, #tpu.memory_space<vmem>>, vector<112x8xf32>
    %c6 = arith.constant 6 : index
    %c0_67 = arith.constant 0 : index
    %c0_68 = arith.constant 0 : index
    %59 = vector.load %arg2[%c6, %c0_67, %c0_68] : memref<9x8x128xf32, #tpu.memory_space<vmem>>, vector<1x8x128xf32>
    %60 = vector.shape_cast %59 : vector<1x8x128xf32> to vector<8x128xf32>
    %cst_69 = arith.constant dense<0.000000e+00> : vector<112x128xf32>
    %61 = tpu.matmul %58, %60, %cst_69 {dimension_numbers = #tpu.dot_dimension_numbers<[1], [0], [0], [1], [0, 0, 1, 1], [], []>} : vector<112x8xf32>, vector<8x128xf32>, vector<112x128xf32> -> vector<112x128xf32>
    %62 = arith.addf %57, %61 : vector<112x128xf32>
    %c0_70 = arith.constant 0 : index
    %c0_71 = arith.constant 0 : index
    %63 = vector.load %arg9[%c0_70, %c0_71] : memref<112x128xf32, #tpu.memory_space<vmem>>, vector<112x128xf32>
    tpu.vector_store %arg9[%c0_70, %c0_71], %62 {strides = array<i32>} : memref<112x128xf32, #tpu.memory_space<vmem>>, vector<112x128xf32>,
    %c0_72 = arith.constant 0 : index
    %c0_73 = arith.constant 0 : index
    %64 = vector.load %arg9[%c0_72, %c0_73] : memref<112x128xf32, #tpu.memory_space<vmem>>, vector<112x128xf32>
    %c21 = arith.constant 21 : index
    %c0_74 = arith.constant 0 : index
    %65 = vector.load %arg8[%c21, %c0_74] : memref<144x8xf32, #tpu.memory_space<vmem>>, vector<112x8xf32>
    %c7 = arith.constant 7 : index
    %c0_75 = arith.constant 0 : index
    %c0_76 = arith.constant 0 : index
    %66 = vector.load %arg2[%c7, %c0_75, %c0_76] : memref<9x8x128xf32, #tpu.memory_space<vmem>>, vector<1x8x128xf32>
    %67 = vector.shape_cast %66 : vector<1x8x128xf32> to vector<8x128xf32>
    %cst_77 = arith.constant dense<0.000000e+00> : vector<112x128xf32>
    %68 = tpu.matmul %65, %67, %cst_77 {dimension_numbers = #tpu.dot_dimension_numbers<[1], [0], [0], [1], [0, 0, 1, 1], [], []>} : vector<112x8xf32>, vector<8x128xf32>, vector<112x128xf32> -> vector<112x128xf32>
    %69 = arith.addf %64, %68 : vector<112x128xf32>
    %c0_78 = arith.constant 0 : index
    %c0_79 = arith.constant 0 : index
    %70 = vector.load %arg9[%c0_78, %c0_79] : memref<112x128xf32, #tpu.memory_space<vmem>>, vector<112x128xf32>
    tpu.vector_store %arg9[%c0_78, %c0_79], %69 {strides = array<i32>} : memref<112x128xf32, #tpu.memory_space<vmem>>, vector<112x128xf32>,
    %c0_80 = arith.constant 0 : index
    %c0_81 = arith.constant 0 : index
    %71 = vector.load %arg9[%c0_80, %c0_81] : memref<112x128xf32, #tpu.memory_space<vmem>>, vector<112x128xf32>
    %c22 = arith.constant 22 : index
    %c0_82 = arith.constant 0 : index
    %72 = vector.load %arg8[%c22, %c0_82] : memref<144x8xf32, #tpu.memory_space<vmem>>, vector<112x8xf32>
    %c8 = arith.constant 8 : index
    %c0_83 = arith.constant 0 : index
    %c0_84 = arith.constant 0 : index
    %73 = vector.load %arg2[%c8, %c0_83, %c0_84] : memref<9x8x128xf32, #tpu.memory_space<vmem>>, vector<1x8x128xf32>
    %74 = vector.shape_cast %73 : vector<1x8x128xf32> to vector<8x128xf32>
    %cst_85 = arith.constant dense<0.000000e+00> : vector<112x128xf32>
    %75 = tpu.matmul %72, %74, %cst_85 {dimension_numbers = #tpu.dot_dimension_numbers<[1], [0], [0], [1], [0, 0, 1, 1], [], []>} : vector<112x8xf32>, vector<8x128xf32>, vector<112x128xf32> -> vector<112x128xf32>
    %76 = arith.addf %71, %75 : vector<112x128xf32>
    %c0_86 = arith.constant 0 : index
    %c0_87 = arith.constant 0 : index
    %77 = vector.load %arg9[%c0_86, %c0_87] : memref<112x128xf32, #tpu.memory_space<vmem>>, vector<112x128xf32>
    tpu.vector_store %arg9[%c0_86, %c0_87], %76 {strides = array<i32>} : memref<112x128xf32, #tpu.memory_space<vmem>>, vector<112x128xf32>,
    %c0_88 = arith.constant 0 : index
    %c0_89 = arith.constant 0 : index
    %78 = vector.load %arg9[%c0_88, %c0_89] : memref<112x128xf32, #tpu.memory_space<vmem>>, vector<112x128xf32>
    %c0_90 = arith.constant 0 : index
    %c0_91 = arith.constant 0 : index
    %79 = vector.load %arg6[%c0_90, %c0_91] : memref<112x128xf32, #tpu.memory_space<vmem>>, vector<112x128xf32>
    %80 = arith.addf %78, %79 : vector<112x128xf32>
    %c0_92 = arith.constant 0 : index
    %c0_93 = arith.constant 0 : index
    %81 = vector.load %arg7[%c0_92, %c0_93] : memref<112x128xf32, #tpu.memory_space<vmem>>, vector<112x128xf32>
    tpu.vector_store %arg7[%c0_92, %c0_93], %80 {strides = array<i32>} : memref<112x128xf32, #tpu.memory_space<vmem>>, vector<112x128xf32>,
    return
  }
  func.func @transform_0(%arg0: i32) -> (i32, i32) {
    %c0_i32 = arith.constant 0 : i32
    %c0_i32_0 = arith.constant 0 : i32
    return %arg0, %c0_i32 : i32, i32
  }
  func.func @transform_1(%arg0: i32) -> (i32, i32, i32) {
    %c0_i32 = arith.constant 0 : i32
    %c0_i32_0 = arith.constant 0 : i32
    %c0_i32_1 = arith.constant 0 : i32
    %c0_i32_2 = arith.constant 0 : i32
    return %c0_i32, %c0_i32_0, %c0_i32_1 : i32, i32, i32
  }
  func.func @transform_2(%arg0: i32) -> (i32, i32) {
    %c0_i32 = arith.constant 0 : i32
    %c0_i32_0 = arith.constant 0 : i32
    %c0_i32_1 = arith.constant 0 : i32
    return %c0_i32, %c0_i32_0 : i32, i32
  }
  func.func @transform_3(%arg0: i32) -> (i32, i32) {
    %c0_i32 = arith.constant 0 : i32
    %c0_i32_0 = arith.constant 0 : i32
    %c0_i32_1 = arith.constant 0 : i32
    return %c0_i32, %c0_i32_0 : i32, i32
  }
  func.func @transform_4(%arg0: i32) -> (i32, i32) {
    %c0_i32 = arith.constant 0 : i32
    %c0_i32_0 = arith.constant 0 : i32
    %c0_i32_1 = arith.constant 0 : i32
    return %c0_i32, %c0_i32_0 : i32, i32
  }
  func.func @transform_5(%arg0: i32) -> (i32, i32) {
    %c0_i32 = arith.constant 0 : i32
    %c0_i32_0 = arith.constant 0 : i32
    return %arg0, %c0_i32 : i32, i32
  }
  func.func @transform_6(%arg0: i32) -> (i32, i32) {
    %c0_i32 = arith.constant 0 : i32
    %c0_i32_0 = arith.constant 0 : i32
    return %arg0, %c0_i32 : i32, i32
  }
}

</mosaic_0001>

<llo_original>
// kernel: tile.18
$region0: #{tile.18}
  #allocation0 [shape = 's32[1]{0}', space=sflag, size = 0x4, scoped, tag = 'scoped memory for tile.18']
  %s0 = inlined_call_operand.vmem [shape: f32[4], index: 0, kind: input, shape index: {}]
  %s1 = inlined_call_operand.vmem [shape: f32[128,4], index: 1, kind: output, shape index: {}]
  // Predicated region
  $region2: #{tile.18} parent=0 // pred_check
    _
  $region3: #{tile.18} parent=0 // pred_check_branch
    %3 = sbr.rel (0) target = $region5
  $region4: #{tile.18} parent=0 // pred_region
    _
  $region5: #{tile.18} parent=0 // pred_fallthru
    _
  %v4 = vld [vmem:[%s0] ss:$0 sm:$0xff]
  %5 = vst [vmem:[%s1] sm:$0xff] %v4
  %s6 = scalar_lea.vmem %s1, 8
  %7 = vst [vmem:[%s6] sm:$0xff] %v4
  %s8 = scalar_lea.vmem %s1, 16
  %9 = vst [vmem:[%s8] sm:$0xff] %v4
  %s10 = scalar_lea.vmem %s1, 24
  %11 = vst [vmem:[%s10] sm:$0xff] %v4
  %s12 = scalar_lea.vmem %s1, 32
  %13 = vst [vmem:[%s12] sm:$0xff] %v4
  %s14 = scalar_lea.vmem %s1, 40
  %15 = vst [vmem:[%s14] sm:$0xff] %v4
  %s16 = scalar_lea.vmem %s1, 48
  %17 = vst [vmem:[%s16] sm:$0xff] %v4
  %s18 = scalar_lea.vmem %s1, 56
  %19 = vst [vmem:[%s18] sm:$0xff] %v4
  %s20 = scalar_lea.vmem %s1, 64
  %21 = vst [vmem:[%s20] sm:$0xff] %v4
  %s22 = scalar_lea.vmem %s1, 72
  %23 = vst [vmem:[%s22] sm:$0xff] %v4
  %s24 = scalar_lea.vmem %s1, 80
  %25 = vst [vmem:[%s24] sm:$0xff] %v4
  %s26 = scalar_lea.vmem %s1, 88
  %27 = vst [vmem:[%s26] sm:$0xff] %v4
  %s28 = scalar_lea.vmem %s1, 96
  %29 = vst [vmem:[%s28] sm:$0xff] %v4
  %s30 = scalar_lea.vmem %s1, 104
  %31 = vst [vmem:[%s30] sm:$0xff] %v4
  %s32 = scalar_lea.vmem %s1, 112
  %33 = vst [vmem:[%s32] sm:$0xff] %v4
  %s34 = scalar_lea.vmem %s1, 120
  %35 = vst [vmem:[%s34] sm:$0xff] %v4

// kernel: tile.19
$region0: #{tile.19}
  %s0 = inlined_call_operand.vmem [shape: f32[128,4], index: 0, kind: input, shape index: {}]
  %s1 = inlined_call_operand.vmem [shape: f32[1,512], index: 1, kind: output, shape index: {}]
  $region1: #{tile.19} parent=0
    #allocation0 [shape = 'u8[16384]{0}', space=vmem, size = 0x4000, scoped, tag = 'scoped mem for output reshape']
    %v2 = vld [vmem:[%s0] sm:$0x1]
    %s3 = scalar_lea.vmem %s0, 31
    %v4 = vld [vmem:[%s3] sm:$0x2]
    %vm5 = vcmask 1041409
    %v6 = vsel %vm5, %v4, %v2
    %s7 = scalar_lea.vmem %s0, 62
    %v8 = vld [vmem:[%s7] sm:$0x4]
    %vm9 = vcmask 1042434
    %v10 = vsel %vm9, %v8, %v6
    %s11 = scalar_lea.vmem %s0, 93
    %v12 = vld [vmem:[%s11] sm:$0x8]
    %vm13 = vcmask 1043459
    %v14 = vsel %vm13, %v12, %v10
    %vm15 = vcmask 31744
    %16 = vst.msk [vmem:[#allocation0] ss:$8 sm:$0xf] %vm15, %v14
    %s17 = scalar_lea.vmem %s0, 31
    %v18 = vld [vmem:[%s17] sm:$0x1]
    %s19 = scalar_lea.vmem %s0, 62
    %v20 = vld [vmem:[%s19] sm:$0x2]
    %vm21 = vcmask 1041409
    %v22 = vsel %vm21, %v20, %v18
    %s23 = scalar_lea.vmem %s0, 93
    %v24 = vld [vmem:[%s23] sm:$0x4]
    %vm25 = vcmask 1042434
    %v26 = vsel %vm25, %v24, %v22
    %s27 = scalar_lea.vmem %s0, 124
    %v28 = vld [vmem:[%s27] sm:$0x8]
    %vm29 = vcmask 1043459
    %v30 = vsel %vm29, %v28, %v26
    %31 = vrot.lane.b32.xlu0 %v30, 124
    %v32 = vpop.permute.xlu0 %31
    %vm33 = vcmask 1048544
    %34 = vst.msk [vmem:[#allocation0] ss:$8 sm:$0xf] %vm33, %v32
    %s35 = scalar_lea.vmem %s0, 30
    %v36 = vld [vmem:[%s35] sm:$0x1]
    %s37 = scalar_lea.vmem %s0, 61
    %v38 = vld [vmem:[%s37] sm:$0x2]
    %vm39 = vcmask 1041409
    %v40 = vsel %vm39, %v38, %v36
    %s41 = scalar_lea.vmem %s0, 92
    %v42 = vld [vmem:[%s41] sm:$0x4]
    %vm43 = vcmask 1042434
    %v44 = vsel %vm43, %v42, %v40
    %s45 = scalar_lea.vmem %s0, 123
    %v46 = vld [vmem:[%s45] sm:$0x8]
    %vm47 = vcmask 1043459
    %v48 = vsel %vm47, %v46, %v44
    %49 = vrot.lane.b32.xlu0 %v48, 120
    %v50 = vpop.permute.xlu0 %49
    %vm51 = vcmask 1015744
    %52 = vst.msk [vmem:[#allocation0] ss:$8 sm:$0xf] %vm51, %v50
    %s53 = scalar_lea.vmem %s0, 29
    %v54 = vld [vmem:[%s53] sm:$0x1]
    %s55 = scalar_lea.vmem %s0, 60
    %v56 = vld [vmem:[%s55] sm:$0x2]
    %vm57 = vcmask 1041409
    %v58 = vsel %vm57, %v56, %v54
    %s59 = scalar_lea.vmem %s0, 91
    %v60 = vld [vmem:[%s59] sm:$0x4]
    %vm61 = vcmask 1042434
    %v62 = vsel %vm61, %v60, %v58
    %s63 = scalar_lea.vmem %s0, 122
    %v64 = vld [vmem:[%s63] sm:$0x8]
    %vm65 = vcmask 1043459
    %v66 = vsel %vm65, %v64, %v62
    %67 = vrot.lane.b32.xlu0 %v66, 116
    %v68 = vpop.permute.xlu0 %67
    %vm69 = vcmask 982944
    %70 = vst.msk [vmem:[#allocation0] ss:$8 sm:$0xf] %vm69, %v68
    %s71 = scalar_lea.vmem %s0, 28
    %v72 = vld [vmem:[%s71] sm:$0x1]
    %s73 = scalar_lea.vmem %s0, 59
    %v74 = vld [vmem:[%s73] sm:$0x2]
    %vm75 = vcmask 1041409
    %v76 = vsel %vm75, %v74, %v72
    %s77 = scalar_lea.vmem %s0, 90
    %v78 = vld [vmem:[%s77] sm:$0x4]
    %vm79 = vcmask 1042434
    %v80 = vsel %vm79, %v78, %v76
    %s81 = scalar_lea.vmem %s0, 121
    %v82 = vld [vmem:[%s81] sm:$0x8]
    %vm83 = vcmask 1043459
    %v84 = vsel %vm83, %v82, %v80
    %85 = vrot.lane.b32.xlu0 %v84, 112
    %v86 = vpop.permute.xlu0 %85
    %vm87 = vcmask 950144
    %88 = vst.msk [vmem:[#allocation0] ss:$8 sm:$0xf] %vm87, %v86
    %s89 = scalar_lea.vmem %s0, 27
    %v90 = vld [vmem:[%s89] sm:$0x1]
    %s91 = scalar_lea.vmem %s0, 58
    %v92 = vld [vmem:[%s91] sm:$0x2]
    %vm93 = vcmask 1041409
    %v94 = vsel %vm93, %v92, %v90
    %s95 = scalar_lea.vmem %s0, 89
    %v96 = vld [vmem:[%s95] sm:$0x4]
    %vm97 = vcmask 1042434
    %v98 = vsel %vm97, %v96, %v94
    %s99 = scalar_lea.vmem %s0, 120
    %v100 = vld [vmem:[%s99] sm:$0x8]
    %vm101 = vcmask 1043459
    %v102 = vsel %vm101, %v100, %v98
    %103 = vrot.lane.b32.xlu0 %v102, 108
    %v104 = vpop.permute.xlu0 %103
    %vm105 = vcmask 917344
    %106 = vst.msk [vmem:[#allocation0] ss:$8 sm:$0xf] %vm105, %v104
    %s107 = scalar_lea.vmem %s0, 26
    %v108 = vld [vmem:[%s107] sm:$0x1]
    %s109 = scalar_lea.vmem %s0, 57
    %v110 = vld [vmem:[%s109] sm:$0x2]
    %vm111 = vcmask 1041409
    %v112 = vsel %vm111, %v110, %v108
    %s113 = scalar_lea.vmem %s0, 88
    %v114 = vld [vmem:[%s113] sm:$0x4]
    %vm115 = vcmask 1042434
    %v116 = vsel %vm115, %v114, %v112
    %s117 = scalar_lea.vmem %s0, 119
    %v118 = vld [vmem:[%s117] sm:$0x8]
    %vm119 = vcmask 1043459
    %v120 = vsel %vm119, %v118, %v116
    %121 = vrot.lane.b32.xlu0 %v120, 104
    %v122 = vpop.permute.xlu0 %121
    %vm123 = vcmask 884544
    %124 = vst.msk [vmem:[#allocation0] ss:$8 sm:$0xf] %vm123, %v122
    %s125 = scalar_lea.vmem %s0, 25
    %v126 = vld [vmem:[%s125] sm:$0x1]
    %s127 = scalar_lea.vmem %s0, 56
    %v128 = vld [vmem:[%s127] sm:$0x2]
    %vm129 = vcmask 1041409
    %v130 = vsel %vm129, %v128, %v126
    %s131 = scalar_lea.vmem %s0, 87
    %v132 = vld [vmem:[%s131] sm:$0x4]
    %vm133 = vcmask 1042434
    %v134 = vsel %vm133, %v132, %v130
    %s135 = scalar_lea.vmem %s0, 118
    %v136 = vld [vmem:[%s135] sm:$0x8]
    %vm137 = vcmask 1043459
    %v138 = vsel %vm137, %v136, %v134
    %139 = vrot.lane.b32.xlu0 %v138, 100
    %v140 = vpop.permute.xlu0 %139
    %vm141 = vcmask 851744
    %142 = vst.msk [vmem:[#allocation0] ss:$8 sm:$0xf] %vm141, %v140
    %s143 = scalar_lea.vmem %s0, 24
    %v144 = vld [vmem:[%s143] sm:$0x1]
    %s145 = scalar_lea.vmem %s0, 55
    %v146 = vld [vmem:[%s145] sm:$0x2]
    %vm147 = vcmask 1041409
    %v148 = vsel %vm147, %v146, %v144
    %s149 = scalar_lea.vmem %s0, 86
    %v150 = vld [vmem:[%s149] sm:$0x4]
    %vm151 = vcmask 1042434
    %v152 = vsel %vm151, %v150, %v148
    %s153 = scalar_lea.vmem %s0, 117
    %v154 = vld [vmem:[%s153] sm:$0x8]
    %vm155 = vcmask 1043459
    %v156 = vsel %vm155, %v154, %v152
    %157 = vrot.lane.b32.xlu0 %v156, 96
    %v158 = vpop.permute.xlu0 %157
    %vm159 = vcmask 818944
    %160 = vst.msk [vmem:[#allocation0] ss:$8 sm:$0xf] %vm159, %v158
    %s161 = scalar_lea.vmem %s0, 23
    %v162 = vld [vmem:[%s161] sm:$0x1]
    %s163 = scalar_lea.vmem %s0, 54
    %v164 = vld [vmem:[%s163] sm:$0x2]
    %vm165 = vcmask 1041409
    %v166 = vsel %vm165, %v164, %v162
    %s167 = scalar_lea.vmem %s0, 85
    %v168 = vld [vmem:[%s167] sm:$0x4]
    %vm169 = vcmask 1042434
    %v170 = vsel %vm169, %v168, %v166
    %s171 = scalar_lea.vmem %s0, 116
    %v172 = vld [vmem:[%s171] sm:$0x8]
    %vm173 = vcmask 1043459
    %v174 = vsel %vm173, %v172, %v170
    %175 = vrot.lane.b32.xlu0 %v174, 92
    %v176 = vpop.permute.xlu0 %175
    %vm177 = vcmask 786144
    %178 = vst.msk [vmem:[#allocation0] ss:$8 sm:$0xf] %vm177, %v176
    %s179 = scalar_lea.vmem %s0, 22
    %v180 = vld [vmem:[%s179] sm:$0x1]
    %s181 = scalar_lea.vmem %s0, 53
    %v182 = vld [vmem:[%s181] sm:$0x2]
    %vm183 = vcmask 1041409
    %v184 = vsel %vm183, %v182, %v180
    %s185 = scalar_lea.vmem %s0, 84
    %v186 = vld [vmem:[%s185] sm:$0x4]
    %vm187 = vcmask 1042434
    %v188 = vsel %vm187, %v186, %v184
    %s189 = scalar_lea.vmem %s0, 115
    %v190 = vld [vmem:[%s189] sm:$0x8]
    %vm191 = vcmask 1043459
    %v192 = vsel %vm191, %v190, %v188
    %193 = vrot.lane.b32.xlu0 %v192, 88
    %v194 = vpop.permute.xlu0 %193
    %vm195 = vcmask 753344
    %196 = vst.msk [vmem:[#allocation0] ss:$8 sm:$0xf] %vm195, %v194
    %s197 = scalar_lea.vmem %s0, 21
    %v198 = vld [vmem:[%s197] sm:$0x1]
    %s199 = scalar_lea.vmem %s0, 52
    %v200 = vld [vmem:[%s199] sm:$0x2]
    %vm201 = vcmask 1041409
    %v202 = vsel %vm201, %v200, %v198
    %s203 = scalar_lea.vmem %s0, 83
    %v204 = vld [vmem:[%s203] sm:$0x4]
    %vm205 = vcmask 1042434
    %v206 = vsel %vm205, %v204, %v202
    %s207 = scalar_lea.vmem %s0, 114
    %v208 = vld [vmem:[%s207] sm:$0x8]
    %vm209 = vcmask 1043459
    %v210 = vsel %vm209, %v208, %v206
    %211 = vrot.lane.b32.xlu0 %v210, 84
    %v212 = vpop.permute.xlu0 %211
    %vm213 = vcmask 720544
    %214 = vst.msk [vmem:[#allocation0] ss:$8 sm:$0xf] %vm213, %v212
    %s215 = scalar_lea.vmem %s0, 20
    %v216 = vld [vmem:[%s215] sm:$0x1]
    %s217 = scalar_lea.vmem %s0, 51
    %v218 = vld [vmem:[%s217] sm:$0x2]
    %vm219 = vcmask 1041409
    %v220 = vsel %vm219, %v218, %v216
    %s221 = scalar_lea.vmem %s0, 82
    %v222 = vld [vmem:[%s221] sm:$0x4]
    %vm223 = vcmask 1042434
    %v224 = vsel %vm223, %v222, %v220
    %s225 = scalar_lea.vmem %s0, 113
    %v226 = vld [vmem:[%s225] sm:$0x8]
    %vm227 = vcmask 1043459
    %v228 = vsel %vm227, %v226, %v224
    %229 = vrot.lane.b32.xlu0 %v228, 80
    %v230 = vpop.permute.xlu0 %229
    %vm231 = vcmask 687744
    %232 = vst.msk [vmem:[#allocation0] ss:$8 sm:$0xf] %vm231, %v230
    %s233 = scalar_lea.vmem %s0, 19
    %v234 = vld [vmem:[%s233] sm:$0x1]
    %s235 = scalar_lea.vmem %s0, 50
    %v236 = vld [vmem:[%s235] sm:$0x2]
    %vm237 = vcmask 1041409
    %v238 = vsel %vm237, %v236, %v234
    %s239 = scalar_lea.vmem %s0, 81
    %v240 = vld [vmem:[%s239] sm:$0x4]
    %vm241 = vcmask 1042434
    %v242 = vsel %vm241, %v240, %v238
    %s243 = scalar_lea.vmem %s0, 112
    %v244 = vld [vmem:[%s243] sm:$0x8]
    %vm245 = vcmask 1043459
    %v246 = vsel %vm245, %v244, %v242
    %247 = vrot.lane.b32.xlu0 %v246, 76
    %v248 = vpop.permute.xlu0 %247
    %vm249 = vcmask 654944
    %250 = vst.msk [vmem:[#allocation0] ss:$8 sm:$0xf] %vm249, %v248
    %s251 = scalar_lea.vmem %s0, 18
    %v252 = vld [vmem:[%s251] sm:$0x1]
    %s253 = scalar_lea.vmem %s0, 49
    %v254 = vld [vmem:[%s253] sm:$0x2]
    %vm255 = vcmask 1041409
    %v256 = vsel %vm255, %v254, %v252
    %s257 = scalar_lea.vmem %s0, 80
    %v258 = vld [vmem:[%s257] sm:$0x4]
    %vm259 = vcmask 1042434
    %v260 = vsel %vm259, %v258, %v256
    %s261 = scalar_lea.vmem %s0, 111
    %v262 = vld [vmem:[%s261] sm:$0x8]
    %vm263 = vcmask 1043459
    %v264 = vsel %vm263, %v262, %v260
    %265 = vrot.lane.b32.xlu0 %v264, 72
    %v266 = vpop.permute.xlu0 %265
    %vm267 = vcmask 622144
    %268 = vst.msk [vmem:[#allocation0] ss:$8 sm:$0xf] %vm267, %v266
    %s269 = scalar_lea.vmem %s0, 17
    %v270 = vld [vmem:[%s269] sm:$0x1]
    %s271 = scalar_lea.vmem %s0, 48
    %v272 = vld [vmem:[%s271] sm:$0x2]
    %vm273 = vcmask 1041409
    %v274 = vsel %vm273, %v272, %v270
    %s275 = scalar_lea.vmem %s0, 79
    %v276 = vld [vmem:[%s275] sm:$0x4]
    %vm277 = vcmask 1042434
    %v278 = vsel %vm277, %v276, %v274
    %s279 = scalar_lea.vmem %s0, 110
    %v280 = vld [vmem:[%s279] sm:$0x8]
    %vm281 = vcmask 1043459
    %v282 = vsel %vm281, %v280, %v278
    %283 = vrot.lane.b32.xlu0 %v282, 68
    %v284 = vpop.permute.xlu0 %283
    %vm285 = vcmask 589344
    %286 = vst.msk [vmem:[#allocation0] ss:$8 sm:$0xf] %vm285, %v284
    %s287 = scalar_lea.vmem %s0, 16
    %v288 = vld [vmem:[%s287] sm:$0x1]
    %s289 = scalar_lea.vmem %s0, 47
    %v290 = vld [vmem:[%s289] sm:$0x2]
    %vm291 = vcmask 1041409
    %v292 = vsel %vm291, %v290, %v288
    %s293 = scalar_lea.vmem %s0, 78
    %v294 = vld [vmem:[%s293] sm:$0x4]
    %vm295 = vcmask 1042434
    %v296 = vsel %vm295, %v294, %v292
    %s297 = scalar_lea.vmem %s0, 109
    %v298 = vld [vmem:[%s297] sm:$0x8]
    %vm299 = vcmask 1043459
    %v300 = vsel %vm299, %v298, %v296
    %301 = vrot.lane.b32.xlu0 %v300, 64
    %v302 = vpop.permute.xlu0 %301
    %vm303 = vcmask 556544
    %304 = vst.msk [vmem:[#allocation0] ss:$8 sm:$0xf] %vm303, %v302
    %s305 = scalar_lea.vmem %s0, 15
    %v306 = vld [vmem:[%s305] sm:$0x1]
    %s307 = scalar_lea.vmem %s0, 46
    %v308 = vld [vmem:[%s307] sm:$0x2]
    %vm309 = vcmask 1041409
    %v310 = vsel %vm309, %v308, %v306
    %s311 = scalar_lea.vmem %s0, 77
    %v312 = vld [vmem:[%s311] sm:$0x4]
    %vm313 = vcmask 1042434
    %v314 = vsel %vm313, %v312, %v310
    %s315 = scalar_lea.vmem %s0, 108
    %v316 = vld [vmem:[%s315] sm:$0x8]
    %vm317 = vcmask 1043459
    %v318 = vsel %vm317, %v316, %v314
    %319 = vrot.lane.b32.xlu0 %v318, 60
    %v320 = vpop.permute.xlu0 %319
    %vm321 = vcmask 523744
    %322 = vst.msk [vmem:[#allocation0] ss:$8 sm:$0xf] %vm321, %v320
    %s323 = scalar_lea.vmem %s0, 14
    %v324 = vld [vmem:[%s323] sm:$0x1]
    %s325 = scalar_lea.vmem %s0, 45
    %v326 = vld [vmem:[%s325] sm:$0x2]
    %vm327 = vcmask 1041409
    %v328 = vsel %vm327, %v326, %v324
    %s329 = scalar_lea.vmem %s0, 76
    %v330 = vld [vmem:[%s329] sm:$0x4]
    %vm331 = vcmask 1042434
    %v332 = vsel %vm331, %v330, %v328
    %s333 = scalar_lea.vmem %s0, 107
    %v334 = vld [vmem:[%s333] sm:$0x8]
    %vm335 = vcmask 1043459
    %v336 = vsel %vm335, %v334, %v332
    %337 = vrot.lane.b32.xlu0 %v336, 56
    %v338 = vpop.permute.xlu0 %337
    %vm339 = vcmask 490944
    %340 = vst.msk [vmem:[#allocation0] ss:$8 sm:$0xf] %vm339, %v338
    %s341 = scalar_lea.vmem %s0, 13
    %v342 = vld [vmem:[%s341] sm:$0x1]
    %s343 = scalar_lea.vmem %s0, 44
    %v344 = vld [vmem:[%s343] sm:$0x2]
    %vm345 = vcmask 1041409
    %v346 = vsel %vm345, %v344, %v342
    %s347 = scalar_lea.vmem %s0, 75
    %v348 = vld [vmem:[%s347] sm:$0x4]
    %vm349 = vcmask 1042434
    %v350 = vsel %vm349, %v348, %v346
    %s351 = scalar_lea.vmem %s0, 106
    %v352 = vld [vmem:[%s351] sm:$0x8]
    %vm353 = vcmask 1043459
    %v354 = vsel %vm353, %v352, %v350
    %355 = vrot.lane.b32.xlu0 %v354, 52
    %v356 = vpop.permute.xlu0 %355
    %vm357 = vcmask 458144
    %358 = vst.msk [vmem:[#allocation0] ss:$8 sm:$0xf] %vm357, %v356
    %s359 = scalar_lea.vmem %s0, 12
    %v360 = vld [vmem:[%s359] sm:$0x1]
    %s361 = scalar_lea.vmem %s0, 43
    %v362 = vld [vmem:[%s361] sm:$0x2]
    %vm363 = vcmask 1041409
    %v364 = vsel %vm363, %v362, %v360
    %s365 = scalar_lea.vmem %s0, 74
    %v366 = vld [vmem:[%s365] sm:$0x4]
    %vm367 = vcmask 1042434
    %v368 = vsel %vm367, %v366, %v364
    %s369 = scalar_lea.vmem %s0, 105
    %v370 = vld [vmem:[%s369] sm:$0x8]
    %vm371 = vcmask 1043459
    %v372 = vsel %vm371, %v370, %v368
    %373 = vrot.lane.b32.xlu0 %v372, 48
    %v374 = vpop.permute.xlu0 %373
    %vm375 = vcmask 425344
    %376 = vst.msk [vmem:[#allocation0] ss:$8 sm:$0xf] %vm375, %v374
    %s377 = scalar_lea.vmem %s0, 11
    %v378 = vld [vmem:[%s377] sm:$0x1]
    %s379 = scalar_lea.vmem %s0, 42
    %v380 = vld [vmem:[%s379] sm:$0x2]
    %vm381 = vcmask 1041409
    %v382 = vsel %vm381, %v380, %v378
    %s383 = scalar_lea.vmem %s0, 73
    %v384 = vld [vmem:[%s383] sm:$0x4]
    %vm385 = vcmask 1042434
    %v386 = vsel %vm385, %v384, %v382
    %s387 = scalar_lea.vmem %s0, 104
    %v388 = vld [vmem:[%s387] sm:$0x8]
    %vm389 = vcmask 1043459
    %v390 = vsel %vm389, %v388, %v386
    %391 = vrot.lane.b32.xlu0 %v390, 44
    %v392 = vpop.permute.xlu0 %391
    %vm393 = vcmask 392544
    %394 = vst.msk [vmem:[#allocation0] ss:$8 sm:$0xf] %vm393, %v392
    %s395 = scalar_lea.vmem %s0, 10
    %v396 = vld [vmem:[%s395] sm:$0x1]
    %s397 = scalar_lea.vmem %s0, 41
    %v398 = vld [vmem:[%s397] sm:$0x2]
    %vm399 = vcmask 1041409
    %v400 = vsel %vm399, %v398, %v396
    %s401 = scalar_lea.vmem %s0, 72
    %v402 = vld [vmem:[%s401] sm:$0x4]
    %vm403 = vcmask 1042434
    %v404 = vsel %vm403, %v402, %v400
    %s405 = scalar_lea.vmem %s0, 103
    %v406 = vld [vmem:[%s405] sm:$0x8]
    %vm407 = vcmask 1043459
    %v408 = vsel %vm407, %v406, %v404
    %409 = vrot.lane.b32.xlu0 %v408, 40
    %v410 = vpop.permute.xlu0 %409
    %vm411 = vcmask 359744
    %412 = vst.msk [vmem:[#allocation0] ss:$8 sm:$0xf] %vm411, %v410
    %s413 = scalar_lea.vmem %s0, 9
    %v414 = vld [vmem:[%s413] sm:$0x1]
    %s415 = scalar_lea.vmem %s0, 40
    %v416 = vld [vmem:[%s415] sm:$0x2]
    %vm417 = vcmask 1041409
    %v418 = vsel %vm417, %v416, %v414
    %s419 = scalar_lea.vmem %s0, 71
    %v420 = vld [vmem:[%s419] sm:$0x4]
    %vm421 = vcmask 1042434
    %v422 = vsel %vm421, %v420, %v418
    %s423 = scalar_lea.vmem %s0, 102
    %v424 = vld [vmem:[%s423] sm:$0x8]
    %vm425 = vcmask 1043459
    %v426 = vsel %vm425, %v424, %v422
    %427 = vrot.lane.b32.xlu0 %v426, 36
    %v428 = vpop.permute.xlu0 %427
    %vm429 = vcmask 326944
    %430 = vst.msk [vmem:[#allocation0] ss:$8 sm:$0xf] %vm429, %v428
    %s431 = scalar_lea.vmem %s0, 8
    %v432 = vld [vmem:[%s431] sm:$0x1]
    %s433 = scalar_lea.vmem %s0, 39
    %v434 = vld [vmem:[%s433] sm:$0x2]
    %vm435 = vcmask 1041409
    %v436 = vsel %vm435, %v434, %v432
    %s437 = scalar_lea.vmem %s0, 70
    %v438 = vld [vmem:[%s437] sm:$0x4]
    %vm439 = vcmask 1042434
    %v440 = vsel %vm439, %v438, %v436
    %s441 = scalar_lea.vmem %s0, 101
    %v442 = vld [vmem:[%s441] sm:$0x8]
    %vm443 = vcmask 1043459
    %v444 = vsel %vm443, %v442, %v440
    %445 = vrot.lane.b32.xlu0 %v444, 32
    %v446 = vpop.permute.xlu0 %445
    %vm447 = vcmask 294144
    %448 = vst.msk [vmem:[#allocation0] ss:$8 sm:$0xf] %vm447, %v446
    %s449 = scalar_lea.vmem %s0, 7
    %v450 = vld [vmem:[%s449] sm:$0x1]
    %s451 = scalar_lea.vmem %s0, 38
    %v452 = vld [vmem:[%s451] sm:$0x2]
    %vm453 = vcmask 1041409
    %v454 = vsel %vm453, %v452, %v450
    %s455 = scalar_lea.vmem %s0, 69
    %v456 = vld [vmem:[%s455] sm:$0x4]
    %vm457 = vcmask 1042434
    %v458 = vsel %vm457, %v456, %v454
    %s459 = scalar_lea.vmem %s0, 100
    %v460 = vld [vmem:[%s459] sm:$0x8]
    %vm461 = vcmask 1043459
    %v462 = vsel %vm461, %v460, %v458
    %463 = vrot.lane.b32.xlu0 %v462, 28
    %v464 = vpop.permute.xlu0 %463
    %vm465 = vcmask 261344
    %466 = vst.msk [vmem:[#allocation0] ss:$8 sm:$0xf] %vm465, %v464
    %s467 = scalar_lea.vmem %s0, 6
    %v468 = vld [vmem:[%s467] sm:$0x1]
    %s469 = scalar_lea.vmem %s0, 37
    %v470 = vld [vmem:[%s469] sm:$0x2]
    %vm471 = vcmask 1041409
    %v472 = vsel %vm471, %v470, %v468
    %s473 = scalar_lea.vmem %s0, 68
    %v474 = vld [vmem:[%s473] sm:$0x4]
    %vm475 = vcmask 1042434
    %v476 = vsel %vm475, %v474, %v472
    %s477 = scalar_lea.vmem %s0, 99
    %v478 = vld [vmem:[%s477] sm:$0x8]
    %vm479 = vcmask 1043459
    %v480 = vsel %vm479, %v478, %v476
    %481 = vrot.lane.b32.xlu0 %v480, 24
    %v482 = vpop.permute.xlu0 %481
    %vm483 = vcmask 228544
    %484 = vst.msk [vmem:[#allocation0] ss:$8 sm:$0xf] %vm483, %v482
    %s485 = scalar_lea.vmem %s0, 5
    %v486 = vld [vmem:[%s485] sm:$0x1]
    %s487 = scalar_lea.vmem %s0, 36
    %v488 = vld [vmem:[%s487] sm:$0x2]
    %vm489 = vcmask 1041409
    %v490 = vsel %vm489, %v488, %v486
    %s491 = scalar_lea.vmem %s0, 67
    %v492 = vld [vmem:[%s491] sm:$0x4]
    %vm493 = vcmask 1042434
    %v494 = vsel %vm493, %v492, %v490
    %s495 = scalar_lea.vmem %s0, 98
    %v496 = vld [vmem:[%s495] sm:$0x8]
    %vm497 = vcmask 1043459
    %v498 = vsel %vm497, %v496, %v494
    %499 = vrot.lane.b32.xlu0 %v498, 20
    %v500 = vpop.permute.xlu0 %499
    %vm501 = vcmask 195744
    %502 = vst.msk [vmem:[#allocation0] ss:$8 sm:$0xf] %vm501, %v500
    %s503 = scalar_lea.vmem %s0, 4
    %v504 = vld [vmem:[%s503] sm:$0x1]
    %s505 = scalar_lea.vmem %s0, 35
    %v506 = vld [vmem:[%s505] sm:$0x2]
    %vm507 = vcmask 1041409
    %v508 = vsel %vm507, %v506, %v504
    %s509 = scalar_lea.vmem %s0, 66
    %v510 = vld [vmem:[%s509] sm:$0x4]
    %vm511 = vcmask 1042434
    %v512 = vsel %vm511, %v510, %v508
    %s513 = scalar_lea.vmem %s0, 97
    %v514 = vld [vmem:[%s513] sm:$0x8]
    %vm515 = vcmask 1043459
    %v516 = vsel %vm515, %v514, %v512
    %517 = vrot.lane.b32.xlu0 %v516, 16
    %v518 = vpop.permute.xlu0 %517
    %vm519 = vcmask 162944
    %520 = vst.msk [vmem:[#allocation0] ss:$8 sm:$0xf] %vm519, %v518
    %s521 = scalar_lea.vmem %s0, 3
    %v522 = vld [vmem:[%s521] sm:$0x1]
    %s523 = scalar_lea.vmem %s0, 34
    %v524 = vld [vmem:[%s523] sm:$0x2]
    %vm525 = vcmask 1041409
    %v526 = vsel %vm525, %v524, %v522
    %s527 = scalar_lea.vmem %s0, 65
    %v528 = vld [vmem:[%s527] sm:$0x4]
    %vm529 = vcmask 1042434
    %v530 = vsel %vm529, %v528, %v526
    %s531 = scalar_lea.vmem %s0, 96
    %v532 = vld [vmem:[%s531] sm:$0x8]
    %vm533 = vcmask 1043459
    %v534 = vsel %vm533, %v532, %v530
    %535 = vrot.lane.b32.xlu0 %v534, 12
    %v536 = vpop.permute.xlu0 %535
    %vm537 = vcmask 130144
    %538 = vst.msk [vmem:[#allocation0] ss:$8 sm:$0xf] %vm537, %v536
    %s539 = scalar_lea.vmem %s0, 2
    %v540 = vld [vmem:[%s539] sm:$0x1]
    %s541 = scalar_lea.vmem %s0, 33
    %v542 = vld [vmem:[%s541] sm:$0x2]
    %vm543 = vcmask 1041409
    %v544 = vsel %vm543, %v542, %v540
    %s545 = scalar_lea.vmem %s0, 64
    %v546 = vld [vmem:[%s545] sm:$0x4]
    %vm547 = vcmask 1042434
    %v548 = vsel %vm547, %v546, %v544
    %s549 = scalar_lea.vmem %s0, 95
    %v550 = vld [vmem:[%s549] sm:$0x8]
    %vm551 = vcmask 1043459
    %v552 = vsel %vm551, %v550, %v548
    %553 = vrot.lane.b32.xlu0 %v552, 8
    %v554 = vpop.permute.xlu0 %553
    %vm555 = vcmask 97344
    %556 = vst.msk [vmem:[#allocation0] ss:$8 sm:$0xf] %vm555, %v554
    %s557 = scalar_lea.vmem %s0, 1
    %v558 = vld [vmem:[%s557] sm:$0x1]
    %s559 = scalar_lea.vmem %s0, 32
    %v560 = vld [vmem:[%s559] sm:$0x2]
    %vm561 = vcmask 1041409
    %v562 = vsel %vm561, %v560, %v558
    %s563 = scalar_lea.vmem %s0, 63
    %v564 = vld [vmem:[%s563] sm:$0x4]
    %vm565 = vcmask 1042434
    %v566 = vsel %vm565, %v564, %v562
    %s567 = scalar_lea.vmem %s0, 94
    %v568 = vld [vmem:[%s567] sm:$0x8]
    %vm569 = vcmask 1043459
    %v570 = vsel %vm569, %v568, %v566
    %571 = vrot.lane.b32.xlu0 %v570, 4
    %v572 = vpop.permute.xlu0 %571
    %vm573 = vcmask 64544
    %574 = vst.msk [vmem:[#allocation0] ss:$8 sm:$0xf] %vm573, %v572
    %s576 = sshll.u32 1, 1
    %s577 = ssub.s32 %s576, 1
    %v579 = vld [vmem:[#allocation0] sm:%s577]
    %s580 = sshll.u32 1, 1
    %s581 = ssub.s32 %s580, 1
    %582 = vst [vmem:[%s1] sm:%s581] %v579
    %s583 = scalar_lea.vmem [#allocation0], 8
    %v584 = vld [vmem:[%s583] sm:%s577]
    %s585 = sshll.u32 1, 1
    %s586 = ssub.s32 %s585, 1
    %s587 = scalar_lea.vmem %s1, 1
    %588 = vst [vmem:[%s587] sm:%s586] %v584
    %s589 = scalar_lea.vmem [#allocation0], 16
    %v590 = vld [vmem:[%s589] sm:%s577]
    %s591 = sshll.u32 1, 1
    %s592 = ssub.s32 %s591, 1
    %s593 = smul.addr 1, 2
    %s594 = scalar_lea.vmem %s1, %s593
    %595 = vst [vmem:[%s594] sm:%s592] %v590
    %s596 = scalar_lea.vmem [#allocation0], 24
    %v597 = vld [vmem:[%s596] sm:%s577]
    %s598 = sshll.u32 1, 1
    %s599 = ssub.s32 %s598, 1
    %s600 = smul.addr 1, 3
    %s601 = scalar_lea.vmem %s1, %s600
    %602 = vst [vmem:[%s601] sm:%s599] %v597

// kernel: preact_block_forward.6
$region0: #{preact_block_forward.6}
  #allocation0 [shape = 'u32[]', space=smem, size = 0x4, offset = 0x4, fixed_abs, tag = 'smem constant byte address 0x4 - core index']
  #allocation1 [shape = 'u32[144,128]{1,0:T(1,128)}', space=vmem, size = 0x12000, scoped, tag = 'internal scratch']
  %s0 = inlined_call_operand.vmem [shape: f32[16,512], index: 0, kind: input, shape index: {}]
  %s1 = inlined_call_operand.vmem [shape: f32[16,512], index: 1, kind: output, shape index: {0}]
  %s2 = inlined_call_operand.vmem [shape: f32[16,512], index: 2, kind: output, shape index: {1}]
  %3 = xla_tuple %s1, %s2
  %s4 = sld [smem:[#allocation0]]
  $region49: #{preact_block_forward.6} parent=0
    _
  %s6 = ssub.s32 1, %s4
  %s7 = scalar_select 0, %s6, %s4
  loop: start=0, step=1, limit=4
  $region2: #{preact_block_forward.6} parent=0 // loop_pre_header
    _
  $region3: #{preact_block_forward.6} parent=0 // loop_header
    %s9 = sphi 0, %s13
    %p10 = scmp.ge.s32.totalorder %s9, 4
    %s16 = sphi 0, %s28
    %s17 = sphi 0, %s24
    %s18 = sphi 0, %s16
    %s19 = sphi 0, %s17
    %s20 = sphi 0, %s18
    %s21 = sphi 0, %s19
    %s33 = sphi 0, %s35
    %s36 = sphi 0, %s33
    %s37 = sphi 0, %s36
    %s53 = sphi 0, %s37
    %s59 = sphi 0, %s61
    %s62 = sphi 0, %s59
    %s63 = sphi 0, %s62
    %s79 = sphi 0, %s63
    %s85 = sphi 0, %s87
    %s88 = sphi 0, %s85
    %s89 = sphi 0, %s88
    %s105 = sphi 0, %s89
  $region4: #{preact_block_forward.6} parent=0 // loop_header_branch
    %12 = sbr.rel (%p10) target = $region8
  $region5: #{preact_block_forward.6} parent=0 // loop_body
    %s14 = ssub.s32 %s9, 1
    %s15 = ssub.s32 %s9, 2
    %s22 = sadd.s32 1, %s17
    %p23 = scmp.ge.s32.totalorder %s22, 1
    %s24 = scalar_select %p23, 0, %s22
    %s25 = sadd.s32 1, %s16
    %s26 = scalar_select %p23, %s25, %s16
    %p27 = scmp.ge.s32.totalorder %s26, 2
    %s28 = scalar_select %p27, 0, %s26
    %s29 = sadd.s32 %s16, %s17
    %s30 = sadd.s32 %s28, %s24
    %s31 = ssub.s32 %s29, %s30
    %p32 = scmp.eq.s32.totalorder %s31, 0
    %s34 = sadd.s32 %s33, 1
    %s35 = scalar_select %p32, %s33, %s34
    %p38 = pneg %p32
    %p39 = scmp.eq.s32.totalorder %s9, 1
    %p40 = por %p38, %p39
    %p41 = scmp.ne.s32.totalorder %s33, %s36
    %p42 = scmp.eq.s32.totalorder %s9, 0
    %p43 = por %p41, %p42
    %p44 = scmp.ne.s32.totalorder %s33, %s36
    %p45 = scmp.eq.s32.totalorder %s14, 1
    %p46 = por %p44, %p45
    %p47 = scmp.ne.s32.totalorder %s36, %s37
    %p48 = scmp.eq.s32.totalorder %s14, 0
    %p49 = por %p47, %p48
    %p50 = scmp.ne.s32.totalorder %s36, %s37
    %p51 = scmp.eq.s32.totalorder %s15, 1
    %p52 = por %p50, %p51
    %p54 = scmp.ne.s32.totalorder %s37, %s53
    %p55 = scmp.eq.s32.totalorder %s15, 0
    %p56 = por %p54, %p55
    %s57 = ssub.s32 %s16, %s28
    %p58 = scmp.eq.s32.totalorder %s57, 0
    %s60 = sadd.s32 %s59, 1
    %s61 = scalar_select %p58, %s59, %s60
    %p64 = pneg %p58
    %p65 = scmp.eq.s32.totalorder %s9, 1
    %p66 = por %p64, %p65
    %p67 = scmp.ne.s32.totalorder %s59, %s62
    %p68 = scmp.eq.s32.totalorder %s9, 0
    %p69 = por %p67, %p68
    %p70 = scmp.ne.s32.totalorder %s59, %s62
    %p71 = scmp.eq.s32.totalorder %s14, 1
    %p72 = por %p70, %p71
    %p73 = scmp.ne.s32.totalorder %s62, %s63
    %p74 = scmp.eq.s32.totalorder %s14, 0
    %p75 = por %p73, %p74
    %p76 = scmp.ne.s32.totalorder %s62, %s63
    %p77 = scmp.eq.s32.totalorder %s15, 1
    %p78 = por %p76, %p77
    %p80 = scmp.ne.s32.totalorder %s63, %s79
    %p81 = scmp.eq.s32.totalorder %s15, 0
    %p82 = por %p80, %p81
    %s83 = ssub.s32 %s16, %s28
    %p84 = scmp.eq.s32.totalorder %s83, 0
    %s86 = sadd.s32 %s85, 1
    %s87 = scalar_select %p84, %s85, %s86
    %p90 = pneg %p84
    %p91 = scmp.eq.s32.totalorder %s9, 1
    %p92 = por %p90, %p91
    %p93 = scmp.ne.s32.totalorder %s85, %s88
    %p94 = scmp.eq.s32.totalorder %s9, 0
    %p95 = por %p93, %p94
    %p96 = scmp.ne.s32.totalorder %s85, %s88
    %p97 = scmp.eq.s32.totalorder %s14, 1
    %p98 = por %p96, %p97
    %p99 = scmp.ne.s32.totalorder %s88, %s89
    %p100 = scmp.eq.s32.totalorder %s14, 0
    %p101 = por %p99, %p100
    %p102 = scmp.ne.s32.totalorder %s88, %s89
    %p103 = scmp.eq.s32.totalorder %s15, 1
    %p104 = por %p102, %p103
    %p106 = scmp.ne.s32.totalorder %s89, %s105
    %p107 = scmp.eq.s32.totalorder %s15, 0
    %p108 = por %p106, %p107
    %p109 = scmp.le.s32.totalorder 1, %s9
    %p110 = scmp.lt.s32.totalorder %s9, 3
    %p111 = pnand %p109, %p110
    %p112 = pneg %p111
    // Predicated region
    $region9: #{preact_block_forward.6} parent=5 // pred_check
      _
    $region10: #{preact_block_forward.6} parent=5 // pred_check_branch
      %114 = sbr.rel (%p111) target = $region12
    $region11: #{preact_block_forward.6} parent=5 // pred_region
      %s115 = ssub.s32 %s9, 1
    $region12: #{preact_block_forward.6} parent=5 // pred_fallthru
      _
    %p116 = scmp.lt.s32.totalorder %s9, 2
    // Predicated region
    $region13: #{preact_block_forward.6} parent=5 // pred_check
      %p117 = pneg %p116
    $region14: #{preact_block_forward.6} parent=5 // pred_check_branch
      %119 = sbr.rel (%p117) target = $region16
    $region15: #{preact_block_forward.6} parent=5 // pred_region
      // Predicated region
      $region17: #{preact_block_forward.6} parent=15 // pred_check
        %p120 = pneg %p43
      $region18: #{preact_block_forward.6} parent=15 // pred_check_branch
        %122 = sbr.rel (%p120) target = $region20
      $region19: #{preact_block_forward.6} parent=15 // pred_region
        %s123 = sadd.s32 %s16, %s17
        %p124 = scmp.lt.s32.totalorder %s123, 1
        %s125 = scalar_select %p124, %s123, 1
        %s126 = smul.addr %s125, 4
        %s127 = smul.addr %s126, 8
        %s128 = scalar_lea.vmem %s0, %s127
        %s129 = sadd.s32 %s16, %s17
      $region20: #{preact_block_forward.6} parent=15 // pred_fallthru
        _
    $region16: #{preact_block_forward.6} parent=5 // pred_fallthru
      _
    %p130 = scmp.le.s32.totalorder 1, %s9
    %p131 = scmp.lt.s32.totalorder %s9, 3
    %p132 = pnand %p130, %p131
    %p133 = pneg %p132
    // Predicated region
    $region21: #{preact_block_forward.6} parent=5 // pred_check
      _
    $region22: #{preact_block_forward.6} parent=5 // pred_check_branch
      %135 = sbr.rel (%p132) target = $region24
    $region23: #{preact_block_forward.6} parent=5 // pred_region
      %s136 = ssub.s32 %s9, 1
      %s137 = sadd.s32 %s18, %s19
      %p138 = scmp.lt.s32.totalorder %s137, 1
      %s139 = scalar_select %p138, %s137, 1
      %s140 = smul.addr %s139, 4
      %s141 = smul.addr %s140, 8
      %s142 = scalar_lea.vmem %s0, %s141
      %p143 = pneg %p49
      %p144 = pneg %p46
      %p145 = pneg %p75
      %p146 = pneg %p72
      %p147 = scmp.lt.s32.totalorder %s18, 1
      %s148 = scalar_select %p147, %s18, 1
      %s149 = smul.addr %s148, 4
      %s150 = smul.addr %s149, 8
      %s151 = scalar_lea.vmem %s1, %s150
      %p152 = pneg %p101
      %p153 = pneg %p98
      %p154 = scmp.lt.s32.totalorder %s18, 1
      %s155 = scalar_select %p154, %s18, 1
      %s156 = smul.addr %s155, 4
      %s157 = smul.addr %s156, 8
      %s158 = scalar_lea.vmem %s2, %s157
      %s159 = sadd.s32 %s18, %s19
      %p160 = scmp.lt.s32.totalorder %s159, 1
      %s161 = scalar_select %p160, %s159, 1
      %s162 = smul.addr %s161, 4
      %s163 = smul.addr %s162, 8
      %s164 = scalar_lea.vmem %s0, %s163
      %s165 = sadd.s32 %s18, %s19
      %p166 = scmp.lt.s32.totalorder %s18, 1
      %s167 = scalar_select %p166, %s18, 1
      %s168 = smul.addr %s167, 4
      %s169 = smul.addr %s168, 8
      %s170 = scalar_lea.vmem %s1, %s169
      %p171 = scmp.lt.s32.totalorder %s18, 1
      %s172 = scalar_select %p171, %s18, 1
      %s173 = smul.addr %s172, 4
      %s174 = smul.addr %s173, 8
      %s175 = scalar_lea.vmem %s2, %s174
      %p176 = scmp.eq.s32.totalorder %s19, 0
      // Predicated region
      $region25: #{preact_block_forward.6} parent=23 // pred_check
        %p177 = pneg %p176
      $region26: #{preact_block_forward.6} parent=23 // pred_check_branch
        %179 = sbr.rel (%p177) target = $region28
      $region27: #{preact_block_forward.6} parent=23 // pred_region
        %180 = vst [vmem:[%s170] sm:$0xff] 0.0
        %181 = vst [vmem:[%s170 + $0x8] sm:$0xff] 0.0
        %182 = vst [vmem:[%s170 + $0x10] sm:$0xff] 0.0
        %183 = vst [vmem:[%s170 + $0x18] sm:$0xff] 0.0
        %184 = vst [vmem:[%s175] sm:$0xff] 0.0
        %185 = vst [vmem:[%s175 + $0x8] sm:$0xff] 0.0
        %186 = vst [vmem:[%s175 + $0x10] sm:$0xff] 0.0
        %187 = vst [vmem:[%s175 + $0x18] sm:$0xff] 0.0
      $region28: #{preact_block_forward.6} parent=23 // pred_fallthru
        _
      %v188 = vld [vmem:[%s164] sm:$0xff]
      %v189 = vld [vmem:[%s164 + $0x8] sm:$0xff]
      %v190 = vld [vmem:[%s164 + $0x10] sm:$0xff]
      %v191 = vld [vmem:[%s164 + $0x18] sm:$0xff]
      %v192 = vld [vmem:[%s170] sm:$0xff]
      %v193 = vld [vmem:[%s170 + $0x8] sm:$0xff]
      %v194 = vld [vmem:[%s170 + $0x10] sm:$0xff]
      %v195 = vld [vmem:[%s170 + $0x18] sm:$0xff]
      %v196 = vrot.slane %v188, 4
      %v197 = vadd.f32 %v188, %v196
      %v198 = vrot.slane %v197, 2
      %v199 = vadd.f32 %v197, %v198
      %v200 = vrot.slane %v199, 1
      %v201 = vadd.f32 %v199, %v200
      %v202 = vrot.slane %v189, 4
      %v203 = vadd.f32 %v189, %v202
      %v204 = vrot.slane %v203, 2
      %v205 = vadd.f32 %v203, %v204
      %v206 = vrot.slane %v205, 1
      %v207 = vadd.f32 %v205, %v206
      %v208 = vrot.slane %v190, 4
      %v209 = vadd.f32 %v190, %v208
      %v210 = vrot.slane %v209, 2
      %v211 = vadd.f32 %v209, %v210
      %v212 = vrot.slane %v211, 1
      %v213 = vadd.f32 %v211, %v212
      %v214 = vrot.slane %v191, 4
      %v215 = vadd.f32 %v191, %v214
      %v216 = vrot.slane %v215, 2
      %v217 = vadd.f32 %v215, %v216
      %v218 = vrot.slane %v217, 1
      %v219 = vadd.f32 %v217, %v218
      %v220 = vadd.f32 %v192, %v201
      %v221 = vadd.f32 %v193, %v207
      %v222 = vadd.f32 %v194, %v213
      %v223 = vadd.f32 %v195, %v219
      %224 = vst [vmem:[%s170] sm:$0xff] %v220
      %225 = vst [vmem:[%s170 + $0x8] sm:$0xff] %v221
      %226 = vst [vmem:[%s170 + $0x10] sm:$0xff] %v222
      %227 = vst [vmem:[%s170 + $0x18] sm:$0xff] %v223
      %v228 = vld [vmem:[%s175] sm:$0xff]
      %v229 = vld [vmem:[%s175 + $0x8] sm:$0xff]
      %v230 = vld [vmem:[%s175 + $0x10] sm:$0xff]
      %v231 = vld [vmem:[%s175 + $0x18] sm:$0xff]
      %v232 = vmul.f32 %v188, %v188
      %v233 = vmul.f32 %v189, %v189
      %v234 = vmul.f32 %v190, %v190
      %v235 = vmul.f32 %v191, %v191
      %v236 = vrot.slane %v232, 4
      %v237 = vadd.f32 %v232, %v236
      %v238 = vrot.slane %v237, 2
      %v239 = vadd.f32 %v237, %v238
      %v240 = vrot.slane %v239, 1
      %v241 = vadd.f32 %v239, %v240
      %v242 = vrot.slane %v233, 4
      %v243 = vadd.f32 %v233, %v242
      %v244 = vrot.slane %v243, 2
      %v245 = vadd.f32 %v243, %v244
      %v246 = vrot.slane %v245, 1
      %v247 = vadd.f32 %v245, %v246
      %v248 = vrot.slane %v234, 4
      %v249 = vadd.f32 %v234, %v248
      %v250 = vrot.slane %v249, 2
      %v251 = vadd.f32 %v249, %v250
      %v252 = vrot.slane %v251, 1
      %v253 = vadd.f32 %v251, %v252
      %v254 = vrot.slane %v235, 4
      %v255 = vadd.f32 %v235, %v254
      %v256 = vrot.slane %v255, 2
      %v257 = vadd.f32 %v255, %v256
      %v258 = vrot.slane %v257, 1
      %v259 = vadd.f32 %v257, %v258
      %v260 = vadd.f32 %v228, %v241
      %v261 = vadd.f32 %v229, %v247
      %v262 = vadd.f32 %v230, %v253
      %v263 = vadd.f32 %v231, %v259
      %264 = vst [vmem:[%s175] sm:$0xff] %v260
      %265 = vst [vmem:[%s175 + $0x8] sm:$0xff] %v261
      %266 = vst [vmem:[%s175 + $0x10] sm:$0xff] %v262
      %267 = vst [vmem:[%s175 + $0x18] sm:$0xff] %v263
      %p268 = scmp.lt.s32.totalorder %s18, 1
      %s269 = scalar_select %p268, %s18, 1
      %s270 = smul.addr %s269, 4
      %s271 = smul.addr %s270, 8
      %s272 = scalar_lea.vmem %s1, %s271
      %p273 = scmp.lt.s32.totalorder %s18, 1
      %s274 = scalar_select %p273, %s18, 1
      %s275 = smul.addr %s274, 4
      %s276 = smul.addr %s275, 8
      %s277 = scalar_lea.vmem %s2, %s276
      // Predicated region
      $region29: #{preact_block_forward.6} parent=23 // pred_check
        %p278 = pneg %p72
      $region30: #{preact_block_forward.6} parent=23 // pred_check_branch
        %280 = sbr.rel (%p278) target = $region32
      $region31: #{preact_block_forward.6} parent=23 // pred_region
        _
      $region32: #{preact_block_forward.6} parent=23 // pred_fallthru
        _
      // Predicated region
      $region33: #{preact_block_forward.6} parent=23 // pred_check
        %p281 = pneg %p98
      $region34: #{preact_block_forward.6} parent=23 // pred_check_branch
        %283 = sbr.rel (%p281) target = $region36
      $region35: #{preact_block_forward.6} parent=23 // pred_region
        _
      $region36: #{preact_block_forward.6} parent=23 // pred_fallthru
        _
    $region24: #{preact_block_forward.6} parent=5 // pred_fallthru
      _
    %p284 = scmp.le.s32.totalorder 2, %s9
    // Predicated region
    $region37: #{preact_block_forward.6} parent=5 // pred_check
      %p285 = pneg %p284
    $region38: #{preact_block_forward.6} parent=5 // pred_check_branch
      %287 = sbr.rel (%p285) target = $region40
    $region39: #{preact_block_forward.6} parent=5 // pred_region
      %s288 = ssub.s32 %s9, 2
      // Predicated region
      $region41: #{preact_block_forward.6} parent=39 // pred_check
        %p289 = pneg %p78
      $region42: #{preact_block_forward.6} parent=39 // pred_check_branch
        %291 = sbr.rel (%p289) target = $region44
      $region43: #{preact_block_forward.6} parent=39 // pred_region
        %p292 = scmp.lt.s32.totalorder %s20, 1
        %s293 = scalar_select %p292, %s20, 1
        %s294 = smul.addr %s293, 4
        %s295 = smul.addr %s294, 8
        %s296 = scalar_lea.vmem %s1, %s295
      $region44: #{preact_block_forward.6} parent=39 // pred_fallthru
        _
      // Predicated region
      $region45: #{preact_block_forward.6} parent=39 // pred_check
        %p297 = pneg %p104
      $region46: #{preact_block_forward.6} parent=39 // pred_check_branch
        %299 = sbr.rel (%p297) target = $region48
      $region47: #{preact_block_forward.6} parent=39 // pred_region
        %p300 = scmp.lt.s32.totalorder %s20, 1
        %s301 = scalar_select %p300, %s20, 1
        %s302 = smul.addr %s301, 4
        %s303 = smul.addr %s302, 8
        %s304 = scalar_lea.vmem %s2, %s303
      $region48: #{preact_block_forward.6} parent=39 // pred_fallthru
        _
    $region40: #{preact_block_forward.6} parent=5 // pred_fallthru
      _
  $region6: #{preact_block_forward.6} parent=0 // loop_footer
    %s13 = sadd.s32 1, %s9
  $region7: #{preact_block_forward.6} parent=0 // loop_footer_branch
    %8 = sbr.rel target = $region3
  $region8: #{preact_block_forward.6} parent=0 // loop_exit
    _

// kernel: preact_block_forward.7
$region0: #{preact_block_forward.7}
  #allocation0 [shape = 'u32[]', space=smem, size = 0x4, offset = 0x4, fixed_abs, tag = 'smem constant byte address 0x4 - core index']
  #allocation1 [shape = 'u32[144,128]{1,0:T(1,128)}', space=vmem, size = 0x12000, scoped, tag = 'internal scratch']
  %s0 = inlined_call_operand.vmem [shape: f32[8,512], index: 0, kind: input, shape index: {}]
  %s1 = inlined_call_operand.vmem [shape: f32[1,512], index: 1, kind: input, shape index: {}]
  %s2 = inlined_call_operand.vmem [shape: f32[1,512], index: 2, kind: input, shape index: {}]
  %s3 = inlined_call_operand.vmem [shape: f32[8,512], index: 3, kind: output, shape index: {}]
  %s4 = sld [smem:[#allocation0]]
  $region22: #{preact_block_forward.7} parent=0
    _
  %s6 = ssub.s32 1, %s4
  %s7 = scalar_select 0, %s6, %s4
  // Predicated region
  $region2: #{preact_block_forward.7} parent=0 // pred_check
    _
  $region3: #{preact_block_forward.7} parent=0 // pred_check_branch
    %9 = sbr.rel (0) target = $region5
  $region4: #{preact_block_forward.7} parent=0 // pred_region
    _
  $region5: #{preact_block_forward.7} parent=0 // pred_fallthru
    _
  // Predicated region
  $region6: #{preact_block_forward.7} parent=0 // pred_check
    _
  $region7: #{preact_block_forward.7} parent=0 // pred_check_branch
    %11 = sbr.rel (0) target = $region9
  $region8: #{preact_block_forward.7} parent=0 // pred_region
    _
  $region9: #{preact_block_forward.7} parent=0 // pred_fallthru
    _
  // Predicated region
  $region10: #{preact_block_forward.7} parent=0 // pred_check
    _
  $region11: #{preact_block_forward.7} parent=0 // pred_check_branch
    %13 = sbr.rel (0) target = $region13
  $region12: #{preact_block_forward.7} parent=0 // pred_region
    _
  $region13: #{preact_block_forward.7} parent=0 // pred_fallthru
    _
  %v14 = vld [vmem:[%s0] sm:$0xff]
  %v15 = vld [vmem:[%s0 + $0x8] sm:$0xff]
  %v16 = vld [vmem:[%s0 + $0x10] sm:$0xff]
  %v17 = vld [vmem:[%s0 + $0x18] sm:$0xff]
  %v18 = vld [vmem:[%s1] sm:$0xf]
  %v20 = vlaneseq
  %v21 = vshrl.u32 %v20, 7
  %v22 = vsub.s32 0, %v21
  %v23 = vrot.slane %v18, %v22
  %v24 = vlaneseq
  %v25 = vshrl.u32 %v24, 7
  %v26 = vsub.s32 1, %v25
  %v27 = vrot.slane %v18, %v26
  %v28 = vlaneseq
  %v29 = vshrl.u32 %v28, 7
  %v30 = vsub.s32 2, %v29
  %v31 = vrot.slane %v18, %v30
  %v32 = vlaneseq
  %v33 = vshrl.u32 %v32, 7
  %v34 = vsub.s32 3, %v33
  %v35 = vrot.slane %v18, %v34
  %v40 = vmul.f32 %v14, %v23
  %v41 = vmul.f32 %v15, %v27
  %v42 = vmul.f32 %v16, %v31
  %v43 = vmul.f32 %v17, %v35
  %v44 = vld [vmem:[%s2] sm:$0xf]
  %v46 = vlaneseq
  %v47 = vshrl.u32 %v46, 7
  %v48 = vsub.s32 0, %v47
  %v49 = vrot.slane %v44, %v48
  %v50 = vlaneseq
  %v51 = vshrl.u32 %v50, 7
  %v52 = vsub.s32 1, %v51
  %v53 = vrot.slane %v44, %v52
  %v54 = vlaneseq
  %v55 = vshrl.u32 %v54, 7
  %v56 = vsub.s32 2, %v55
  %v57 = vrot.slane %v44, %v56
  %v58 = vlaneseq
  %v59 = vshrl.u32 %v58, 7
  %v60 = vsub.s32 3, %v59
  %v61 = vrot.slane %v44, %v60
  %v66 = vadd.f32 %v40, %v49
  %v67 = vadd.f32 %v41, %v53
  %v68 = vadd.f32 %v42, %v57
  %v69 = vadd.f32 %v43, %v61
  %v70 = vmax.f32 %v66, 0.0
  %v71 = vmax.f32 %v67, 0.0
  %v72 = vmax.f32 %v68, 0.0
  %v73 = vmax.f32 %v69, 0.0
  %74 = vst [vmem:[%s3] sm:$0xff] %v70
  %75 = vst [vmem:[%s3 + $0x8] sm:$0xff] %v71
  %76 = vst [vmem:[%s3 + $0x10] sm:$0xff] %v72
  %77 = vst [vmem:[%s3 + $0x18] sm:$0xff] %v73
  // Predicated region
  $region14: #{preact_block_forward.7} parent=0 // pred_check
    _
  $region15: #{preact_block_forward.7} parent=0 // pred_check_branch
    %79 = sbr.rel (0) target = $region17
  $region16: #{preact_block_forward.7} parent=0 // pred_region
    _
  $region17: #{preact_block_forward.7} parent=0 // pred_fallthru
    _
  // Predicated region
  $region18: #{preact_block_forward.7} parent=0 // pred_check
    _
  $region19: #{preact_block_forward.7} parent=0 // pred_check_branch
    %81 = sbr.rel (0) target = $region21
  $region20: #{preact_block_forward.7} parent=0 // pred_region
    _
  $region21: #{preact_block_forward.7} parent=0 // pred_fallthru
    _

// kernel: preact_block_forward.8
$region0: #{preact_block_forward.8}
  #allocation0 [shape = 'u32[]', space=smem, size = 0x4, offset = 0x4, fixed_abs, tag = 'smem constant byte address 0x4 - core index']
  #allocation1 [shape = 'u32[144,128]{1,0:T(1,128)}', space=vmem, size = 0x12000, scoped, tag = 'internal scratch']
  #allocation2 [shape = 'f32[128,128]{1,0:T(8,128)}', space=vmem, size = 0x10000, scoped, tag = 'scratch operand']
  %s0 = inlined_call_operand.vmem [shape: f32[128,4], index: 0, kind: input, shape index: {}]
  %s1 = inlined_call_operand.vmem [shape: f32[4,128], index: 1, kind: input, shape index: {}]
  %s2 = inlined_call_operand.vmem [shape: f32[128,128], index: 2, kind: output, shape index: {}]
  %s3 = sld [smem:[#allocation0]]
  $region26: #{preact_block_forward.8} parent=0
    _
  %s5 = ssub.s32 1, %s3
  %s6 = scalar_select 0, %s5, %s3
  // Predicated region
  $region2: #{preact_block_forward.8} parent=0 // pred_check
    _
  $region3: #{preact_block_forward.8} parent=0 // pred_check_branch
    %8 = sbr.rel (0) target = $region5
  $region4: #{preact_block_forward.8} parent=0 // pred_region
    _
  $region5: #{preact_block_forward.8} parent=0 // pred_fallthru
    _
  // Predicated region
  $region6: #{preact_block_forward.8} parent=0 // pred_check
    _
  $region7: #{preact_block_forward.8} parent=0 // pred_check_branch
    %10 = sbr.rel (0) target = $region9
  $region8: #{preact_block_forward.8} parent=0 // pred_region
    _
  $region9: #{preact_block_forward.8} parent=0 // pred_fallthru
    _
  %p11 = scmp.eq.s32.totalorder 0, 0
  // Predicated region
  $region10: #{preact_block_forward.8} parent=0 // pred_check
    %p12 = pneg %p11
  $region11: #{preact_block_forward.8} parent=0 // pred_check_branch
    %14 = sbr.rel (%p12) target = $region13
  $region12: #{preact_block_forward.8} parent=0 // pred_region
    %15 = vst [vmem:[#allocation2] sm:$0xff] 0.0
    %16 = vst [vmem:[#allocation2 + $0x8] sm:$0xff] 0.0
    %17 = vst [vmem:[#allocation2 + $0x10] sm:$0xff] 0.0
    %18 = vst [vmem:[#allocation2 + $0x18] sm:$0xff] 0.0
    %19 = vst [vmem:[#allocation2 + $0x20] sm:$0xff] 0.0
    %20 = vst [vmem:[#allocation2 + $0x28] sm:$0xff] 0.0
    %21 = vst [vmem:[#allocation2 + $0x30] sm:$0xff] 0.0
    %22 = vst [vmem:[#allocation2 + $0x38] sm:$0xff] 0.0
    %23 = vst [vmem:[#allocation2 + $0x40] sm:$0xff] 0.0
    %24 = vst [vmem:[#allocation2 + $0x48] sm:$0xff] 0.0
    %25 = vst [vmem:[#allocation2 + $0x50] sm:$0xff] 0.0
    %26 = vst [vmem:[#allocation2 + $0x58] sm:$0xff] 0.0
    %27 = vst [vmem:[#allocation2 + $0x60] sm:$0xff] 0.0
    %28 = vst [vmem:[#allocation2 + $0x68] sm:$0xff] 0.0
    %29 = vst [vmem:[#allocation2 + $0x70] sm:$0xff] 0.0
    %30 = vst [vmem:[#allocation2 + $0x78] sm:$0xff] 0.0
  $region13: #{preact_block_forward.8} parent=0 // pred_fallthru
    _
  %v31 = vld [vmem:[%s1] sm:$0xf]
  %v32 = vld [vmem:[#allocation2] sm:$0xff]
  %v33 = vld [vmem:[#allocation2 + $0x8] sm:$0xff]
  %v34 = vld [vmem:[#allocation2 + $0x10] sm:$0xff]
  %v35 = vld [vmem:[#allocation2 + $0x18] sm:$0xff]
  %v36 = vld [vmem:[#allocation2 + $0x20] sm:$0xff]
  %v37 = vld [vmem:[#allocation2 + $0x28] sm:$0xff]
  %v38 = vld [vmem:[#allocation2 + $0x30] sm:$0xff]
  %v39 = vld [vmem:[#allocation2 + $0x38] sm:$0xff]
  %v40 = vld [vmem:[#allocation2 + $0x40] sm:$0xff]
  %v41 = vld [vmem:[#allocation2 + $0x48] sm:$0xff]
  %v42 = vld [vmem:[#allocation2 + $0x50] sm:$0xff]
  %v43 = vld [vmem:[#allocation2 + $0x58] sm:$0xff]
  %v44 = vld [vmem:[#allocation2 + $0x60] sm:$0xff]
  %v45 = vld [vmem:[#allocation2 + $0x68] sm:$0xff]
  %v46 = vld [vmem:[#allocation2 + $0x70] sm:$0xff]
  %v47 = vld [vmem:[#allocation2 + $0x78] sm:$0xff]
  %v48 = vld [vmem:[%s0] sm:$0xff]
  %v49 = vld [vmem:[%s0 + $0x8] sm:$0xff]
  %v50 = vld [vmem:[%s0 + $0x10] sm:$0xff]
  %v51 = vld [vmem:[%s0 + $0x18] sm:$0xff]
  %v52 = vld [vmem:[%s0 + $0x20] sm:$0xff]
  %v53 = vld [vmem:[%s0 + $0x28] sm:$0xff]
  %v54 = vld [vmem:[%s0 + $0x30] sm:$0xff]
  %v55 = vld [vmem:[%s0 + $0x38] sm:$0xff]
  %v56 = vld [vmem:[%s0 + $0x40] sm:$0xff]
  %v57 = vld [vmem:[%s0 + $0x48] sm:$0xff]
  %v58 = vld [vmem:[%s0 + $0x50] sm:$0xff]
  %v59 = vld [vmem:[%s0 + $0x58] sm:$0xff]
  %v60 = vld [vmem:[%s0 + $0x60] sm:$0xff]
  %v61 = vld [vmem:[%s0 + $0x68] sm:$0xff]
  %v62 = vld [vmem:[%s0 + $0x70] sm:$0xff]
  %v63 = vld [vmem:[%s0 + $0x78] sm:$0xff]
  %vm64 = vcmask 31744
  %v66 = vsel %vm64, %v48, 0
  %v69 = vsel %vm64, %v49, 0
  %v72 = vsel %vm64, %v50, 0
  %v75 = vsel %vm64, %v51, 0
  %v78 = vsel %vm64, %v52, 0
  %v81 = vsel %vm64, %v53, 0
  %v84 = vsel %vm64, %v54, 0
  %v87 = vsel %vm64, %v55, 0
  %v90 = vsel %vm64, %v56, 0
  %v93 = vsel %vm64, %v57, 0
  %v96 = vsel %vm64, %v58, 0
  %v99 = vsel %vm64, %v59, 0
  %v102 = vsel %vm64, %v60, 0
  %v105 = vsel %vm64, %v61, 0
  %v108 = vsel %vm64, %v62, 0
  %v111 = vsel %vm64, %v63, 0
  %vm113 = vcmask 1043456
  %v115 = vsel %vm113, %v31, 0
  %117 = vmatprep.subr.mxu0 0.0
  %118 = vmatpush1.msra.mxu0 0.0
  %119 = vmatprep.subr.mxu0 0.0
  %120 = vmatpush1.msra.mxu0 0.0
  %121 = vmatprep.subr.mxu0 0.0
  %122 = vmatpush1.msra.mxu0 0.0
  %123 = vmatprep.subr.mxu0 0.0
  %124 = vmatpush1.msra.mxu0 0.0
  %125 = vmatprep.subr.mxu0 0.0
  %126 = vmatpush1.msra.mxu0 0.0
  %127 = vmatprep.subr.mxu0 0.0
  %128 = vmatpush1.msra.mxu0 0.0
  %129 = vmatprep.subr.mxu0 0.0
  %130 = vmatpush1.msra.mxu0 0.0
  %131 = vmatprep.subr.mxu0 0.0
  %132 = vmatpush1.msra.mxu0 0.0
  %133 = vmatprep.subr.mxu0 0.0
  %134 = vmatpush1.msra.mxu0 0.0
  %135 = vmatprep.subr.mxu0 0.0
  %136 = vmatpush1.msra.mxu0 0.0
  %137 = vmatprep.subr.mxu0 0.0
  %138 = vmatpush1.msra.mxu0 0.0
  %139 = vmatprep.subr.mxu0 0.0
  %140 = vmatpush1.msra.mxu0 0.0
  %141 = vmatprep.subr.mxu0 0.0
  %142 = vmatpush1.msra.mxu0 0.0
  %143 = vmatprep.subr.mxu0 0.0
  %144 = vmatpush1.msra.mxu0 0.0
  %145 = vmatprep.subr.mxu0 0.0
  %146 = vmatpush1.msra.mxu0 0.0
  %147 = vmatprep.subr.mxu0 0.0
  %148 = vmatpush1.msra.mxu0 %v115
  %149 = vmatprep.subr.mxu0 0.0
  %150 = vmatpush2.msra.mxu0 0.0
  %151 = vmatprep.subr.mxu0 0.0
  %152 = vmatpush2.msra.mxu0 0.0
  %153 = vmatprep.subr.mxu0 0.0
  %154 = vmatpush2.msra.mxu0 0.0
  %155 = vmatprep.subr.mxu0 0.0
  %156 = vmatpush2.msra.mxu0 0.0
  %157 = vmatprep.subr.mxu0 0.0
  %158 = vmatpush2.msra.mxu0 0.0
  %159 = vmatprep.subr.mxu0 0.0
  %160 = vmatpush2.msra.mxu0 0.0
  %161 = vmatprep.subr.mxu0 0.0
  %162 = vmatpush2.msra.mxu0 0.0
  %163 = vmatprep.subr.mxu0 0.0
  %164 = vmatpush2.msra.mxu0 0.0
  %165 = vmatprep.subr.mxu0 0.0
  %166 = vmatpush2.msra.mxu0 0.0
  %167 = vmatprep.subr.mxu0 0.0
  %168 = vmatpush2.msra.mxu0 0.0
  %169 = vmatprep.subr.mxu0 0.0
  %170 = vmatpush2.msra.mxu0 0.0
  %171 = vmatprep.subr.mxu0 0.0
  %172 = vmatpush2.msra.mxu0 0.0
  %173 = vmatprep.subr.mxu0 0.0
  %174 = vmatpush2.msra.mxu0 0.0
  %175 = vmatprep.subr.mxu0 0.0
  %176 = vmatpush2.msra.mxu0 0.0
  %177 = vmatprep.subr.mxu0 0.0
  %178 = vmatpush2.msra.mxu0 0.0
  %179 = vmatprep.subr.mxu0 0.0
  %180 = vmatpush2.msra.mxu0 0.0
  %181 = vmatprep.mubr.f32.mxu0 0.0
  %182 = vmatmul.mubr.f32.gmra.mxu0 %v66
  %v183 = vpop.f32.mrf.mxu0
  %v184 = vadd.f32 0.0, %v183
  %v185 = vpop.f32.mrf.mxu0
  %186 = vmatprep.mubr.f32.mxu0 0.0
  %187 = vmatmul.mubr.f32.gmra.mxu0 %v69
  %v188 = vpop.f32.mrf.mxu0
  %v189 = vadd.f32 0.0, %v188
  %v190 = vpop.f32.mrf.mxu0
  %191 = vmatprep.mubr.f32.mxu0 0.0
  %192 = vmatmul.mubr.f32.gmra.mxu0 %v72
  %v193 = vpop.f32.mrf.mxu0
  %v194 = vadd.f32 0.0, %v193
  %v195 = vpop.f32.mrf.mxu0
  %196 = vmatprep.mubr.f32.mxu0 0.0
  %197 = vmatmul.mubr.f32.gmra.mxu0 %v75
  %v198 = vpop.f32.mrf.mxu0
  %v199 = vadd.f32 0.0, %v198
  %v200 = vpop.f32.mrf.mxu0
  %201 = vmatprep.mubr.f32.mxu0 0.0
  %202 = vmatmul.mubr.f32.gmra.mxu0 %v78
  %v203 = vpop.f32.mrf.mxu0
  %v204 = vadd.f32 0.0, %v203
  %v205 = vpop.f32.mrf.mxu0
  %206 = vmatprep.mubr.f32.mxu0 0.0
  %207 = vmatmul.mubr.f32.gmra.mxu0 %v81
  %v208 = vpop.f32.mrf.mxu0
  %v209 = vadd.f32 0.0, %v208
  %v210 = vpop.f32.mrf.mxu0
  %211 = vmatprep.mubr.f32.mxu0 0.0
  %212 = vmatmul.mubr.f32.gmra.mxu0 %v84
  %v213 = vpop.f32.mrf.mxu0
  %v214 = vadd.f32 0.0, %v213
  %v215 = vpop.f32.mrf.mxu0
  %216 = vmatprep.mubr.f32.mxu0 0.0
  %217 = vmatmul.mubr.f32.gmra.mxu0 %v87
  %v218 = vpop.f32.mrf.mxu0
  %v219 = vadd.f32 0.0, %v218
  %v220 = vpop.f32.mrf.mxu0
  %221 = vmatprep.mubr.f32.mxu0 0.0
  %222 = vmatmul.mubr.f32.gmra.mxu0 %v90
  %v223 = vpop.f32.mrf.mxu0
  %v224 = vadd.f32 0.0, %v223
  %v225 = vpop.f32.mrf.mxu0
  %226 = vmatprep.mubr.f32.mxu0 0.0
  %227 = vmatmul.mubr.f32.gmra.mxu0 %v93
  %v228 = vpop.f32.mrf.mxu0
  %v229 = vadd.f32 0.0, %v228
  %v230 = vpop.f32.mrf.mxu0
  %231 = vmatprep.mubr.f32.mxu0 0.0
  %232 = vmatmul.mubr.f32.gmra.mxu0 %v96
  %v233 = vpop.f32.mrf.mxu0
  %v234 = vadd.f32 0.0, %v233
  %v235 = vpop.f32.mrf.mxu0
  %236 = vmatprep.mubr.f32.mxu0 0.0
  %237 = vmatmul.mubr.f32.gmra.mxu0 %v99
  %v238 = vpop.f32.mrf.mxu0
  %v239 = vadd.f32 0.0, %v238
  %v240 = vpop.f32.mrf.mxu0
  %241 = vmatprep.mubr.f32.mxu0 0.0
  %242 = vmatmul.mubr.f32.gmra.mxu0 %v102
  %v243 = vpop.f32.mrf.mxu0
  %v244 = vadd.f32 0.0, %v243
  %v245 = vpop.f32.mrf.mxu0
  %246 = vmatprep.mubr.f32.mxu0 0.0
  %247 = vmatmul.mubr.f32.gmra.mxu0 %v105
  %v248 = vpop.f32.mrf.mxu0
  %v249 = vadd.f32 0.0, %v248
  %v250 = vpop.f32.mrf.mxu0
  %251 = vmatprep.mubr.f32.mxu0 0.0
  %252 = vmatmul.mubr.f32.gmra.mxu0 %v108
  %v253 = vpop.f32.mrf.mxu0
  %v254 = vadd.f32 0.0, %v253
  %v255 = vpop.f32.mrf.mxu0
  %256 = vmatprep.mubr.f32.mxu0 0.0
  %257 = vmatmul.mubr.f32.gmra.mxu0 %v111
  %v258 = vpop.f32.mrf.mxu0
  %v259 = vadd.f32 0.0, %v258
  %v260 = vpop.f32.mrf.mxu0
  %261 = vdwg.mxu0
  %v262 = vadd.f32 %v32, %v184
  %v263 = vadd.f32 %v33, %v189
  %v264 = vadd.f32 %v34, %v194
  %v265 = vadd.f32 %v35, %v199
  %v266 = vadd.f32 %v36, %v204
  %v267 = vadd.f32 %v37, %v209
  %v268 = vadd.f32 %v38, %v214
  %v269 = vadd.f32 %v39, %v219
  %v270 = vadd.f32 %v40, %v224
  %v271 = vadd.f32 %v41, %v229
  %v272 = vadd.f32 %v42, %v234
  %v273 = vadd.f32 %v43, %v239
  %v274 = vadd.f32 %v44, %v244
  %v275 = vadd.f32 %v45, %v249
  %v276 = vadd.f32 %v46, %v254
  %v277 = vadd.f32 %v47, %v259
  %278 = vst [vmem:[#allocation2] sm:$0xff] %v262
  %279 = vst [vmem:[#allocation2 + $0x8] sm:$0xff] %v263
  %280 = vst [vmem:[#allocation2 + $0x10] sm:$0xff] %v264
  %281 = vst [vmem:[#allocation2 + $0x18] sm:$0xff] %v265
  %282 = vst [vmem:[#allocation2 + $0x20] sm:$0xff] %v266
  %283 = vst [vmem:[#allocation2 + $0x28] sm:$0xff] %v267
  %284 = vst [vmem:[#allocation2 + $0x30] sm:$0xff] %v268
  %285 = vst [vmem:[#allocation2 + $0x38] sm:$0xff] %v269
  %286 = vst [vmem:[#allocation2 + $0x40] sm:$0xff] %v270
  %287 = vst [vmem:[#allocation2 + $0x48] sm:$0xff] %v271
  %288 = vst [vmem:[#allocation2 + $0x50] sm:$0xff] %v272
  %289 = vst [vmem:[#allocation2 + $0x58] sm:$0xff] %v273
  %290 = vst [vmem:[#allocation2 + $0x60] sm:$0xff] %v274
  %291 = vst [vmem:[#allocation2 + $0x68] sm:$0xff] %v275
  %292 = vst [vmem:[#allocation2 + $0x70] sm:$0xff] %v276
  %293 = vst [vmem:[#allocation2 + $0x78] sm:$0xff] %v277
  // Predicated region
  $region14: #{preact_block_forward.8} parent=0 // pred_check
    %p294 = pneg %p11
  $region15: #{preact_block_forward.8} parent=0 // pred_check_branch
    %296 = sbr.rel (%p294) target = $region17
  $region16: #{preact_block_forward.8} parent=0 // pred_region
    %v297 = vld [vmem:[#allocation2] sm:$0xff]
    %v298 = vld [vmem:[#allocation2 + $0x8] sm:$0xff]
    %v299 = vld [vmem:[#allocation2 + $0x10] sm:$0xff]
    %v300 = vld [vmem:[#allocation2 + $0x18] sm:$0xff]
    %v301 = vld [vmem:[#allocation2 + $0x20] sm:$0xff]
    %v302 = vld [vmem:[#allocation2 + $0x28] sm:$0xff]
    %v303 = vld [vmem:[#allocation2 + $0x30] sm:$0xff]
    %v304 = vld [vmem:[#allocation2 + $0x38] sm:$0xff]
    %v305 = vld [vmem:[#allocation2 + $0x40] sm:$0xff]
    %v306 = vld [vmem:[#allocation2 + $0x48] sm:$0xff]
    %v307 = vld [vmem:[#allocation2 + $0x50] sm:$0xff]
    %v308 = vld [vmem:[#allocation2 + $0x58] sm:$0xff]
    %v309 = vld [vmem:[#allocation2 + $0x60] sm:$0xff]
    %v310 = vld [vmem:[#allocation2 + $0x68] sm:$0xff]
    %v311 = vld [vmem:[#allocation2 + $0x70] sm:$0xff]
    %v312 = vld [vmem:[#allocation2 + $0x78] sm:$0xff]
    %313 = vst [vmem:[%s2] sm:$0xff] %v297
    %314 = vst [vmem:[%s2 + $0x8] sm:$0xff] %v298
    %315 = vst [vmem:[%s2 + $0x10] sm:$0xff] %v299
    %316 = vst [vmem:[%s2 + $0x18] sm:$0xff] %v300
    %317 = vst [vmem:[%s2 + $0x20] sm:$0xff] %v301
    %318 = vst [vmem:[%s2 + $0x28] sm:$0xff] %v302
    %319 = vst [vmem:[%s2 + $0x30] sm:$0xff] %v303
    %320 = vst [vmem:[%s2 + $0x38] sm:$0xff] %v304
    %321 = vst [vmem:[%s2 + $0x40] sm:$0xff] %v305
    %322 = vst [vmem:[%s2 + $0x48] sm:$0xff] %v306
    %323 = vst [vmem:[%s2 + $0x50] sm:$0xff] %v307
    %324 = vst [vmem:[%s2 + $0x58] sm:$0xff] %v308
    %325 = vst [vmem:[%s2 + $0x60] sm:$0xff] %v309
    %326 = vst [vmem:[%s2 + $0x68] sm:$0xff] %v310
    %327 = vst [vmem:[%s2 + $0x70] sm:$0xff] %v311
    %328 = vst [vmem:[%s2 + $0x78] sm:$0xff] %v312
  $region17: #{preact_block_forward.8} parent=0 // pred_fallthru
    _
  // Predicated region
  $region18: #{preact_block_forward.8} parent=0 // pred_check
    _
  $region19: #{preact_block_forward.8} parent=0 // pred_check_branch
    %330 = sbr.rel (0) target = $region21
  $region20: #{preact_block_forward.8} parent=0 // pred_region
    _
  $region21: #{preact_block_forward.8} parent=0 // pred_fallthru
    _
  // Predicated region
  $region22: #{preact_block_forward.8} parent=0 // pred_check
    _
  $region23: #{preact_block_forward.8} parent=0 // pred_check_branch
    %332 = sbr.rel (0) target = $region25
  $region24: #{preact_block_forward.8} parent=0 // pred_region
    _
  $region25: #{preact_block_forward.8} parent=0 // pred_fallthru
    _

// kernel: preact_block_forward.9
$region0: #{preact_block_forward.9}
  #allocation0 [shape = 'u32[]', space=smem, size = 0x4, offset = 0x4, fixed_abs, tag = 'smem constant byte address 0x4 - core index']
  #allocation1 [shape = 'u32[144,128]{1,0:T(1,128)}', space=vmem, size = 0x12000, scoped, tag = 'internal scratch']
  #allocation2 [shape = 'f32[128,128]{1,0:T(8,128)}', space=vmem, size = 0x10000, scoped, tag = 'scratch operand']
  %s0 = inlined_call_operand.vmem [shape: f32[128,36], index: 0, kind: input, shape index: {}]
  %s1 = inlined_call_operand.vmem [shape: f32[36,128], index: 1, kind: input, shape index: {}]
  %s2 = inlined_call_operand.vmem [shape: f32[128,128], index: 2, kind: output, shape index: {}]
  %s3 = sld [smem:[#allocation0]]
  $region26: #{preact_block_forward.9} parent=0
    _
  %s5 = ssub.s32 1, %s3
  %s6 = scalar_select 0, %s5, %s3
  // Predicated region
  $region2: #{preact_block_forward.9} parent=0 // pred_check
    _
  $region3: #{preact_block_forward.9} parent=0 // pred_check_branch
    %8 = sbr.rel (0) target = $region5
  $region4: #{preact_block_forward.9} parent=0 // pred_region
    _
  $region5: #{preact_block_forward.9} parent=0 // pred_fallthru
    _
  // Predicated region
  $region6: #{preact_block_forward.9} parent=0 // pred_check
    _
  $region7: #{preact_block_forward.9} parent=0 // pred_check_branch
    %10 = sbr.rel (0) target = $region9
  $region8: #{preact_block_forward.9} parent=0 // pred_region
    _
  $region9: #{preact_block_forward.9} parent=0 // pred_fallthru
    _
  %p11 = scmp.eq.s32.totalorder 0, 0
  // Predicated region
  $region10: #{preact_block_forward.9} parent=0 // pred_check
    %p12 = pneg %p11
  $region11: #{preact_block_forward.9} parent=0 // pred_check_branch
    %14 = sbr.rel (%p12) target = $region13
  $region12: #{preact_block_forward.9} parent=0 // pred_region
    %15 = vst [vmem:[#allocation2] sm:$0xff] 0.0
    %16 = vst [vmem:[#allocation2 + $0x8] sm:$0xff] 0.0
    %17 = vst [vmem:[#allocation2 + $0x10] sm:$0xff] 0.0
    %18 = vst [vmem:[#allocation2 + $0x18] sm:$0xff] 0.0
    %19 = vst [vmem:[#allocation2 + $0x20] sm:$0xff] 0.0
    %20 = vst [vmem:[#allocation2 + $0x28] sm:$0xff] 0.0
    %21 = vst [vmem:[#allocation2 + $0x30] sm:$0xff] 0.0
    %22 = vst [vmem:[#allocation2 + $0x38] sm:$0xff] 0.0
    %23 = vst [vmem:[#allocation2 + $0x40] sm:$0xff] 0.0
    %24 = vst [vmem:[#allocation2 + $0x48] sm:$0xff] 0.0
    %25 = vst [vmem:[#allocation2 + $0x50] sm:$0xff] 0.0
    %26 = vst [vmem:[#allocation2 + $0x58] sm:$0xff] 0.0
    %27 = vst [vmem:[#allocation2 + $0x60] sm:$0xff] 0.0
    %28 = vst [vmem:[#allocation2 + $0x68] sm:$0xff] 0.0
    %29 = vst [vmem:[#allocation2 + $0x70] sm:$0xff] 0.0
    %30 = vst [vmem:[#allocation2 + $0x78] sm:$0xff] 0.0
  $region13: #{preact_block_forward.9} parent=0 // pred_fallthru
    _
  %v31 = vld [vmem:[%s1] sm:$0xff]
  %v32 = vld [vmem:[%s1 + $0x8] sm:$0xff]
  %v33 = vld [vmem:[%s1 + $0x10] sm:$0xff]
  %v34 = vld [vmem:[%s1 + $0x18] sm:$0xff]
  %v35 = vld [vmem:[%s1 + $0x20] sm:$0xf]
  %v36 = vld [vmem:[#allocation2] sm:$0xff]
  %v37 = vld [vmem:[#allocation2 + $0x8] sm:$0xff]
  %v38 = vld [vmem:[#allocation2 + $0x10] sm:$0xff]
  %v39 = vld [vmem:[#allocation2 + $0x18] sm:$0xff]
  %v40 = vld [vmem:[#allocation2 + $0x20] sm:$0xff]
  %v41 = vld [vmem:[#allocation2 + $0x28] sm:$0xff]
  %v42 = vld [vmem:[#allocation2 + $0x30] sm:$0xff]
  %v43 = vld [vmem:[#allocation2 + $0x38] sm:$0xff]
  %v44 = vld [vmem:[#allocation2 + $0x40] sm:$0xff]
  %v45 = vld [vmem:[#allocation2 + $0x48] sm:$0xff]
  %v46 = vld [vmem:[#allocation2 + $0x50] sm:$0xff]
  %v47 = vld [vmem:[#allocation2 + $0x58] sm:$0xff]
  %v48 = vld [vmem:[#allocation2 + $0x60] sm:$0xff]
  %v49 = vld [vmem:[#allocation2 + $0x68] sm:$0xff]
  %v50 = vld [vmem:[#allocation2 + $0x70] sm:$0xff]
  %v51 = vld [vmem:[#allocation2 + $0x78] sm:$0xff]
  %v52 = vld [vmem:[%s0] sm:$0xff]
  %v53 = vld [vmem:[%s0 + $0x8] sm:$0xff]
  %v54 = vld [vmem:[%s0 + $0x10] sm:$0xff]
  %v55 = vld [vmem:[%s0 + $0x18] sm:$0xff]
  %v56 = vld [vmem:[%s0 + $0x20] sm:$0xff]
  %v57 = vld [vmem:[%s0 + $0x28] sm:$0xff]
  %v58 = vld [vmem:[%s0 + $0x30] sm:$0xff]
  %v59 = vld [vmem:[%s0 + $0x38] sm:$0xff]
  %v60 = vld [vmem:[%s0 + $0x40] sm:$0xff]
  %v61 = vld [vmem:[%s0 + $0x48] sm:$0xff]
  %v62 = vld [vmem:[%s0 + $0x50] sm:$0xff]
  %v63 = vld [vmem:[%s0 + $0x58] sm:$0xff]
  %v64 = vld [vmem:[%s0 + $0x60] sm:$0xff]
  %v65 = vld [vmem:[%s0 + $0x68] sm:$0xff]
  %v66 = vld [vmem:[%s0 + $0x70] sm:$0xff]
  %v67 = vld [vmem:[%s0 + $0x78] sm:$0xff]
  %vm68 = vcmask 293888
  %v70 = vsel %vm68, %v52, 0
  %v73 = vsel %vm68, %v53, 0
  %v76 = vsel %vm68, %v54, 0
  %v79 = vsel %vm68, %v55, 0
  %v82 = vsel %vm68, %v56, 0
  %v85 = vsel %vm68, %v57, 0
  %v88 = vsel %vm68, %v58, 0
  %v91 = vsel %vm68, %v59, 0
  %v94 = vsel %vm68, %v60, 0
  %v97 = vsel %vm68, %v61, 0
  %v100 = vsel %vm68, %v62, 0
  %v103 = vsel %vm68, %v63, 0
  %v106 = vsel %vm68, %v64, 0
  %v109 = vsel %vm68, %v65, 0
  %v112 = vsel %vm68, %v66, 0
  %v115 = vsel %vm68, %v67, 0
  %vm117 = vcmask 1043456
  %v119 = vsel %vm117, %v35, 0
  %121 = vmatprep.subr.mxu0 0.0
  %122 = vmatpush1.msra.mxu0 0.0
  %123 = vmatprep.subr.mxu0 0.0
  %124 = vmatpush1.msra.mxu0 0.0
  %125 = vmatprep.subr.mxu0 0.0
  %126 = vmatpush1.msra.mxu0 0.0
  %127 = vmatprep.subr.mxu0 0.0
  %128 = vmatpush1.msra.mxu0 0.0
  %129 = vmatprep.subr.mxu0 0.0
  %130 = vmatpush1.msra.mxu0 0.0
  %131 = vmatprep.subr.mxu0 0.0
  %132 = vmatpush1.msra.mxu0 0.0
  %133 = vmatprep.subr.mxu0 0.0
  %134 = vmatpush1.msra.mxu0 0.0
  %135 = vmatprep.subr.mxu0 0.0
  %136 = vmatpush1.msra.mxu0 0.0
  %137 = vmatprep.subr.mxu0 0.0
  %138 = vmatpush1.msra.mxu0 0.0
  %139 = vmatprep.subr.mxu0 0.0
  %140 = vmatpush1.msra.mxu0 0.0
  %141 = vmatprep.subr.mxu0 0.0
  %142 = vmatpush1.msra.mxu0 0.0
  %143 = vmatprep.subr.mxu0 0.0
  %144 = vmatpush1.msra.mxu0 %v119
  %145 = vmatprep.subr.mxu0 0.0
  %146 = vmatpush1.msra.mxu0 %v34
  %147 = vmatprep.subr.mxu0 0.0
  %148 = vmatpush1.msra.mxu0 %v33
  %149 = vmatprep.subr.mxu0 0.0
  %150 = vmatpush1.msra.mxu0 %v32
  %151 = vmatprep.subr.mxu0 0.0
  %152 = vmatpush1.msra.mxu0 %v31
  %153 = vmatprep.subr.mxu0 0.0
  %154 = vmatpush2.msra.mxu0 0.0
  %155 = vmatprep.subr.mxu0 0.0
  %156 = vmatpush2.msra.mxu0 0.0
  %157 = vmatprep.subr.mxu0 0.0
  %158 = vmatpush2.msra.mxu0 0.0
  %159 = vmatprep.subr.mxu0 0.0
  %160 = vmatpush2.msra.mxu0 0.0
  %161 = vmatprep.subr.mxu0 0.0
  %162 = vmatpush2.msra.mxu0 0.0
  %163 = vmatprep.subr.mxu0 0.0
  %164 = vmatpush2.msra.mxu0 0.0
  %165 = vmatprep.subr.mxu0 0.0
  %166 = vmatpush2.msra.mxu0 0.0
  %167 = vmatprep.subr.mxu0 0.0
  %168 = vmatpush2.msra.mxu0 0.0
  %169 = vmatprep.subr.mxu0 0.0
  %170 = vmatpush2.msra.mxu0 0.0
  %171 = vmatprep.subr.mxu0 0.0
  %172 = vmatpush2.msra.mxu0 0.0
  %173 = vmatprep.subr.mxu0 0.0
  %174 = vmatpush2.msra.mxu0 0.0
  %175 = vmatprep.subr.mxu0 0.0
  %176 = vmatpush2.msra.mxu0 0.0
  %177 = vmatprep.subr.mxu0 0.0
  %178 = vmatpush2.msra.mxu0 0.0
  %179 = vmatprep.subr.mxu0 0.0
  %180 = vmatpush2.msra.mxu0 0.0
  %181 = vmatprep.subr.mxu0 0.0
  %182 = vmatpush2.msra.mxu0 0.0
  %183 = vmatprep.subr.mxu0 0.0
  %184 = vmatpush2.msra.mxu0 0.0
  %185 = vmatprep.mubr.f32.mxu0 0.0
  %186 = vmatmul.mubr.f32.gmra.mxu0 %v70
  %v187 = vpop.f32.mrf.mxu0
  %v188 = vadd.f32 0.0, %v187
  %v189 = vpop.f32.mrf.mxu0
  %190 = vmatprep.mubr.f32.mxu0 0.0
  %191 = vmatmul.mubr.f32.gmra.mxu0 %v73
  %v192 = vpop.f32.mrf.mxu0
  %v193 = vadd.f32 0.0, %v192
  %v194 = vpop.f32.mrf.mxu0
  %195 = vmatprep.mubr.f32.mxu0 0.0
  %196 = vmatmul.mubr.f32.gmra.mxu0 %v76
  %v197 = vpop.f32.mrf.mxu0
  %v198 = vadd.f32 0.0, %v197
  %v199 = vpop.f32.mrf.mxu0
  %200 = vmatprep.mubr.f32.mxu0 0.0
  %201 = vmatmul.mubr.f32.gmra.mxu0 %v79
  %v202 = vpop.f32.mrf.mxu0
  %v203 = vadd.f32 0.0, %v202
  %v204 = vpop.f32.mrf.mxu0
  %205 = vmatprep.mubr.f32.mxu0 0.0
  %206 = vmatmul.mubr.f32.gmra.mxu0 %v82
  %v207 = vpop.f32.mrf.mxu0
  %v208 = vadd.f32 0.0, %v207
  %v209 = vpop.f32.mrf.mxu0
  %210 = vmatprep.mubr.f32.mxu0 0.0
  %211 = vmatmul.mubr.f32.gmra.mxu0 %v85
  %v212 = vpop.f32.mrf.mxu0
  %v213 = vadd.f32 0.0, %v212
  %v214 = vpop.f32.mrf.mxu0
  %215 = vmatprep.mubr.f32.mxu0 0.0
  %216 = vmatmul.mubr.f32.gmra.mxu0 %v88
  %v217 = vpop.f32.mrf.mxu0
  %v218 = vadd.f32 0.0, %v217
  %v219 = vpop.f32.mrf.mxu0
  %220 = vmatprep.mubr.f32.mxu0 0.0
  %221 = vmatmul.mubr.f32.gmra.mxu0 %v91
  %v222 = vpop.f32.mrf.mxu0
  %v223 = vadd.f32 0.0, %v222
  %v224 = vpop.f32.mrf.mxu0
  %225 = vmatprep.mubr.f32.mxu0 0.0
  %226 = vmatmul.mubr.f32.gmra.mxu0 %v94
  %v227 = vpop.f32.mrf.mxu0
  %v228 = vadd.f32 0.0, %v227
  %v229 = vpop.f32.mrf.mxu0
  %230 = vmatprep.mubr.f32.mxu0 0.0
  %231 = vmatmul.mubr.f32.gmra.mxu0 %v97
  %v232 = vpop.f32.mrf.mxu0
  %v233 = vadd.f32 0.0, %v232
  %v234 = vpop.f32.mrf.mxu0
  %235 = vmatprep.mubr.f32.mxu0 0.0
  %236 = vmatmul.mubr.f32.gmra.mxu0 %v100
  %v237 = vpop.f32.mrf.mxu0
  %v238 = vadd.f32 0.0, %v237
  %v239 = vpop.f32.mrf.mxu0
  %240 = vmatprep.mubr.f32.mxu0 0.0
  %241 = vmatmul.mubr.f32.gmra.mxu0 %v103
  %v242 = vpop.f32.mrf.mxu0
  %v243 = vadd.f32 0.0, %v242
  %v244 = vpop.f32.mrf.mxu0
  %245 = vmatprep.mubr.f32.mxu0 0.0
  %246 = vmatmul.mubr.f32.gmra.mxu0 %v106
  %v247 = vpop.f32.mrf.mxu0
  %v248 = vadd.f32 0.0, %v247
  %v249 = vpop.f32.mrf.mxu0
  %250 = vmatprep.mubr.f32.mxu0 0.0
  %251 = vmatmul.mubr.f32.gmra.mxu0 %v109
  %v252 = vpop.f32.mrf.mxu0
  %v253 = vadd.f32 0.0, %v252
  %v254 = vpop.f32.mrf.mxu0
  %255 = vmatprep.mubr.f32.mxu0 0.0
  %256 = vmatmul.mubr.f32.gmra.mxu0 %v112
  %v257 = vpop.f32.mrf.mxu0
  %v258 = vadd.f32 0.0, %v257
  %v259 = vpop.f32.mrf.mxu0
  %260 = vmatprep.mubr.f32.mxu0 0.0
  %261 = vmatmul.mubr.f32.gmra.mxu0 %v115
  %v262 = vpop.f32.mrf.mxu0
  %v263 = vadd.f32 0.0, %v262
  %v264 = vpop.f32.mrf.mxu0
  %265 = vdwg.mxu0
  %v266 = vadd.f32 %v36, %v188
  %v267 = vadd.f32 %v37, %v193
  %v268 = vadd.f32 %v38, %v198
  %v269 = vadd.f32 %v39, %v203
  %v270 = vadd.f32 %v40, %v208
  %v271 = vadd.f32 %v41, %v213
  %v272 = vadd.f32 %v42, %v218
  %v273 = vadd.f32 %v43, %v223
  %v274 = vadd.f32 %v44, %v228
  %v275 = vadd.f32 %v45, %v233
  %v276 = vadd.f32 %v46, %v238
  %v277 = vadd.f32 %v47, %v243
  %v278 = vadd.f32 %v48, %v248
  %v279 = vadd.f32 %v49, %v253
  %v280 = vadd.f32 %v50, %v258
  %v281 = vadd.f32 %v51, %v263
  %282 = vst [vmem:[#allocation2] sm:$0xff] %v266
  %283 = vst [vmem:[#allocation2 + $0x8] sm:$0xff] %v267
  %284 = vst [vmem:[#allocation2 + $0x10] sm:$0xff] %v268
  %285 = vst [vmem:[#allocation2 + $0x18] sm:$0xff] %v269
  %286 = vst [vmem:[#allocation2 + $0x20] sm:$0xff] %v270
  %287 = vst [vmem:[#allocation2 + $0x28] sm:$0xff] %v271
  %288 = vst [vmem:[#allocation2 + $0x30] sm:$0xff] %v272
  %289 = vst [vmem:[#allocation2 + $0x38] sm:$0xff] %v273
  %290 = vst [vmem:[#allocation2 + $0x40] sm:$0xff] %v274
  %291 = vst [vmem:[#allocation2 + $0x48] sm:$0xff] %v275
  %292 = vst [vmem:[#allocation2 + $0x50] sm:$0xff] %v276
  %293 = vst [vmem:[#allocation2 + $0x58] sm:$0xff] %v277
  %294 = vst [vmem:[#allocation2 + $0x60] sm:$0xff] %v278
  %295 = vst [vmem:[#allocation2 + $0x68] sm:$0xff] %v279
  %296 = vst [vmem:[#allocation2 + $0x70] sm:$0xff] %v280
  %297 = vst [vmem:[#allocation2 + $0x78] sm:$0xff] %v281
  // Predicated region
  $region14: #{preact_block_forward.9} parent=0 // pred_check
    %p298 = pneg %p11
  $region15: #{preact_block_forward.9} parent=0 // pred_check_branch
    %300 = sbr.rel (%p298) target = $region17
  $region16: #{preact_block_forward.9} parent=0 // pred_region
    %v301 = vld [vmem:[#allocation2] sm:$0xff]
    %v302 = vld [vmem:[#allocation2 + $0x8] sm:$0xff]
    %v303 = vld [vmem:[#allocation2 + $0x10] sm:$0xff]
    %v304 = vld [vmem:[#allocation2 + $0x18] sm:$0xff]
    %v305 = vld [vmem:[#allocation2 + $0x20] sm:$0xff]
    %v306 = vld [vmem:[#allocation2 + $0x28] sm:$0xff]
    %v307 = vld [vmem:[#allocation2 + $0x30] sm:$0xff]
    %v308 = vld [vmem:[#allocation2 + $0x38] sm:$0xff]
    %v309 = vld [vmem:[#allocation2 + $0x40] sm:$0xff]
    %v310 = vld [vmem:[#allocation2 + $0x48] sm:$0xff]
    %v311 = vld [vmem:[#allocation2 + $0x50] sm:$0xff]
    %v312 = vld [vmem:[#allocation2 + $0x58] sm:$0xff]
    %v313 = vld [vmem:[#allocation2 + $0x60] sm:$0xff]
    %v314 = vld [vmem:[#allocation2 + $0x68] sm:$0xff]
    %v315 = vld [vmem:[#allocation2 + $0x70] sm:$0xff]
    %v316 = vld [vmem:[#allocation2 + $0x78] sm:$0xff]
    %317 = vst [vmem:[%s2] sm:$0xff] %v301
    %318 = vst [vmem:[%s2 + $0x8] sm:$0xff] %v302
    %319 = vst [vmem:[%s2 + $0x10] sm:$0xff] %v303
    %320 = vst [vmem:[%s2 + $0x18] sm:$0xff] %v304
    %321 = vst [vmem:[%s2 + $0x20] sm:$0xff] %v305
    %322 = vst [vmem:[%s2 + $0x28] sm:$0xff] %v306
    %323 = vst [vmem:[%s2 + $0x30] sm:$0xff] %v307
    %324 = vst [vmem:[%s2 + $0x38] sm:$0xff] %v308
    %325 = vst [vmem:[%s2 + $0x40] sm:$0xff] %v309
    %326 = vst [vmem:[%s2 + $0x48] sm:$0xff] %v310
    %327 = vst [vmem:[%s2 + $0x50] sm:$0xff] %v311
    %328 = vst [vmem:[%s2 + $0x58] sm:$0xff] %v312
    %329 = vst [vmem:[%s2 + $0x60] sm:$0xff] %v313
    %330 = vst [vmem:[%s2 + $0x68] sm:$0xff] %v314
    %331 = vst [vmem:[%s2 + $0x70] sm:$0xff] %v315
    %332 = vst [vmem:[%s2 + $0x78] sm:$0xff] %v316
  $region17: #{preact_block_forward.9} parent=0 // pred_fallthru
    _
  // Predicated region
  $region18: #{preact_block_forward.9} parent=0 // pred_check
    _
  $region19: #{preact_block_forward.9} parent=0 // pred_check_branch
    %334 = sbr.rel (0) target = $region21
  $region20: #{preact_block_forward.9} parent=0 // pred_region
    _
  $region21: #{preact_block_forward.9} parent=0 // pred_fallthru
    _
  // Predicated region
  $region22: #{preact_block_forward.9} parent=0 // pred_check
    _
  $region23: #{preact_block_forward.9} parent=0 // pred_check_branch
    %336 = sbr.rel (0) target = $region25
  $region24: #{preact_block_forward.9} parent=0 // pred_region
    _
  $region25: #{preact_block_forward.9} parent=0 // pred_fallthru
    _

// kernel: preact_block_forward.11
$region0: #{preact_block_forward.11}
  #allocation0 [shape = 'u32[]', space=smem, size = 0x4, offset = 0x4, fixed_abs, tag = 'smem constant byte address 0x4 - core index']
  #allocation1 [shape = 'u32[144,128]{1,0:T(1,128)}', space=vmem, size = 0x12000, scoped, tag = 'internal scratch']
  #allocation2 [shape = 'f32[144,8]{1,0:T(8,128)}', space=vmem, size = 0x12000, scoped, tag = 'scratch operand']
  #allocation3 [shape = 'f32[112,128]{1,0:T(8,128)}', space=vmem, size = 0xe000, scoped, tag = 'scratch operand']
  %s0 = inlined_call_operand.vmem [shape: f32[288,8], index: 0, kind: input, shape index: {}]
  %s1 = inlined_call_operand.vmem [shape: f32[9,8,128], index: 1, kind: input, shape index: {}]
  %s2 = inlined_call_operand.vmem [shape: f32[1,8], index: 2, kind: input, shape index: {}]
  %s3 = inlined_call_operand.vmem [shape: f32[1,8], index: 3, kind: input, shape index: {}]
  %s4 = inlined_call_operand.vmem [shape: f32[144,1], index: 4, kind: input, shape index: {}]
  %s5 = inlined_call_operand.vmem [shape: f32[224,128], index: 5, kind: input, shape index: {}, may-alias: {5,6}]
  %s6 = inlined_call_operand.vmem [shape: f32[224,128], index: 6, kind: output, shape index: {}, may-alias: {5,6}]
  %s7 = sld [smem:[#allocation0]]
  $region57: #{preact_block_forward.11} parent=0
    _
  %s9 = ssub.s32 1, %s7
  %s10 = scalar_select 0, %s9, %s7
  loop: start=0, step=1, limit=4
  $region2: #{preact_block_forward.11} parent=0 // loop_pre_header
    _
  $region3: #{preact_block_forward.11} parent=0 // loop_header
    %s12 = sphi 0, %s16
    %p13 = scmp.ge.s32.totalorder %s12, 4
    %s22 = sphi 0, %s24
    %s25 = sphi 0, %s22
    %s26 = sphi 0, %s25
    %s42 = sphi 0, %s26
    %s46 = sphi 0, %s46
    %s48 = sphi 0, %s46
    %s49 = sphi 0, %s48
    %s63 = sphi 0, %s49
    %s67 = sphi 0, %s67
    %s69 = sphi 0, %s67
    %s70 = sphi 0, %s69
    %s84 = sphi 0, %s70
    %s88 = sphi 0, %s88
    %s90 = sphi 0, %s88
    %s91 = sphi 0, %s90
    %s105 = sphi 0, %s91
    %s109 = sphi 0, %s109
    %s111 = sphi 0, %s109
    %s112 = sphi 0, %s111
    %s126 = sphi 0, %s112
    %s132 = sphi 0, %s134
    %s135 = sphi 0, %s132
    %s136 = sphi 0, %s135
    %s152 = sphi 0, %s136
    %s158 = sphi 0, %s160
    %s161 = sphi 0, %s158
    %s162 = sphi 0, %s161
    %s178 = sphi 0, %s162
  $region4: #{preact_block_forward.11} parent=0 // loop_header_branch
    %15 = sbr.rel (%p13) target = $region8
  $region5: #{preact_block_forward.11} parent=0 // loop_body
    %s17 = ssub.s32 %s12, 1
    %s18 = ssub.s32 %s12, 2
    %s19 = sadd.s32 %s12, 1
    %s20 = ssub.s32 %s12, %s19
    %p21 = scmp.eq.s32.totalorder %s20, 0
    %s23 = sadd.s32 %s22, 1
    %s24 = scalar_select %p21, %s22, %s23
    %p27 = pneg %p21
    %p28 = scmp.eq.s32.totalorder %s12, 1
    %p29 = por %p27, %p28
    %p30 = scmp.ne.s32.totalorder %s22, %s25
    %p31 = scmp.eq.s32.totalorder %s12, 0
    %p32 = por %p30, %p31
    %p33 = scmp.ne.s32.totalorder %s22, %s25
    %p34 = scmp.eq.s32.totalorder %s17, 1
    %p35 = por %p33, %p34
    %p36 = scmp.ne.s32.totalorder %s25, %s26
    %p37 = scmp.eq.s32.totalorder %s17, 0
    %p38 = por %p36, %p37
    %p39 = scmp.ne.s32.totalorder %s25, %s26
    %p40 = scmp.eq.s32.totalorder %s18, 1
    %p41 = por %p39, %p40
    %p43 = scmp.ne.s32.totalorder %s26, %s42
    %p44 = scmp.eq.s32.totalorder %s18, 0
    %p45 = por %p43, %p44
    %s47 = sadd.s32 %s46, 1
    %p50 = scmp.eq.s32.totalorder %s12, 1
    %p51 = scmp.ne.s32.totalorder %s46, %s48
    %p52 = scmp.eq.s32.totalorder %s12, 0
    %p53 = por %p51, %p52
    %p54 = scmp.ne.s32.totalorder %s46, %s48
    %p55 = scmp.eq.s32.totalorder %s17, 1
    %p56 = por %p54, %p55
    %p57 = scmp.ne.s32.totalorder %s48, %s49
    %p58 = scmp.eq.s32.totalorder %s17, 0
    %p59 = por %p57, %p58
    %p60 = scmp.ne.s32.totalorder %s48, %s49
    %p61 = scmp.eq.s32.totalorder %s18, 1
    %p62 = por %p60, %p61
    %p64 = scmp.ne.s32.totalorder %s49, %s63
    %p65 = scmp.eq.s32.totalorder %s18, 0
    %p66 = por %p64, %p65
    %s68 = sadd.s32 %s67, 1
    %p71 = scmp.eq.s32.totalorder %s12, 1
    %p72 = scmp.ne.s32.totalorder %s67, %s69
    %p73 = scmp.eq.s32.totalorder %s12, 0
    %p74 = por %p72, %p73
    %p75 = scmp.ne.s32.totalorder %s67, %s69
    %p76 = scmp.eq.s32.totalorder %s17, 1
    %p77 = por %p75, %p76
    %p78 = scmp.ne.s32.totalorder %s69, %s70
    %p79 = scmp.eq.s32.totalorder %s17, 0
    %p80 = por %p78, %p79
    %p81 = scmp.ne.s32.totalorder %s69, %s70
    %p82 = scmp.eq.s32.totalorder %s18, 1
    %p83 = por %p81, %p82
    %p85 = scmp.ne.s32.totalorder %s70, %s84
    %p86 = scmp.eq.s32.totalorder %s18, 0
    %p87 = por %p85, %p86
    %s89 = sadd.s32 %s88, 1
    %p92 = scmp.eq.s32.totalorder %s12, 1
    %p93 = scmp.ne.s32.totalorder %s88, %s90
    %p94 = scmp.eq.s32.totalorder %s12, 0
    %p95 = por %p93, %p94
    %p96 = scmp.ne.s32.totalorder %s88, %s90
    %p97 = scmp.eq.s32.totalorder %s17, 1
    %p98 = por %p96, %p97
    %p99 = scmp.ne.s32.totalorder %s90, %s91
    %p100 = scmp.eq.s32.totalorder %s17, 0
    %p101 = por %p99, %p100
    %p102 = scmp.ne.s32.totalorder %s90, %s91
    %p103 = scmp.eq.s32.totalorder %s18, 1
    %p104 = por %p102, %p103
    %p106 = scmp.ne.s32.totalorder %s91, %s105
    %p107 = scmp.eq.s32.totalorder %s18, 0
    %p108 = por %p106, %p107
    %s110 = sadd.s32 %s109, 1
    %p113 = scmp.eq.s32.totalorder %s12, 1
    %p114 = scmp.ne.s32.totalorder %s109, %s111
    %p115 = scmp.eq.s32.totalorder %s12, 0
    %p116 = por %p114, %p115
    %p117 = scmp.ne.s32.totalorder %s109, %s111
    %p118 = scmp.eq.s32.totalorder %s17, 1
    %p119 = por %p117, %p118
    %p120 = scmp.ne.s32.totalorder %s111, %s112
    %p121 = scmp.eq.s32.totalorder %s17, 0
    %p122 = por %p120, %p121
    %p123 = scmp.ne.s32.totalorder %s111, %s112
    %p124 = scmp.eq.s32.totalorder %s18, 1
    %p125 = por %p123, %p124
    %p127 = scmp.ne.s32.totalorder %s112, %s126
    %p128 = scmp.eq.s32.totalorder %s18, 0
    %p129 = por %p127, %p128
    %s130 = ssub.s32 %s12, %s19
    %p131 = scmp.eq.s32.totalorder %s130, 0
    %s133 = sadd.s32 %s132, 1
    %s134 = scalar_select %p131, %s132, %s133
    %p137 = pneg %p131
    %p138 = scmp.eq.s32.totalorder %s12, 1
    %p139 = por %p137, %p138
    %p140 = scmp.ne.s32.totalorder %s132, %s135
    %p141 = scmp.eq.s32.totalorder %s12, 0
    %p142 = por %p140, %p141
    %p143 = scmp.ne.s32.totalorder %s132, %s135
    %p144 = scmp.eq.s32.totalorder %s17, 1
    %p145 = por %p143, %p144
    %p146 = scmp.ne.s32.totalorder %s135, %s136
    %p147 = scmp.eq.s32.totalorder %s17, 0
    %p148 = por %p146, %p147
    %p149 = scmp.ne.s32.totalorder %s135, %s136
    %p150 = scmp.eq.s32.totalorder %s18, 1
    %p151 = por %p149, %p150
    %p153 = scmp.ne.s32.totalorder %s136, %s152
    %p154 = scmp.eq.s32.totalorder %s18, 0
    %p155 = por %p153, %p154
    %s156 = ssub.s32 %s12, %s19
    %p157 = scmp.eq.s32.totalorder %s156, 0
    %s159 = sadd.s32 %s158, 1
    %s160 = scalar_select %p157, %s158, %s159
    %p163 = pneg %p157
    %p164 = scmp.eq.s32.totalorder %s12, 1
    %p165 = por %p163, %p164
    %p166 = scmp.ne.s32.totalorder %s158, %s161
    %p167 = scmp.eq.s32.totalorder %s12, 0
    %p168 = por %p166, %p167
    %p169 = scmp.ne.s32.totalorder %s158, %s161
    %p170 = scmp.eq.s32.totalorder %s17, 1
    %p171 = por %p169, %p170
    %p172 = scmp.ne.s32.totalorder %s161, %s162
    %p173 = scmp.eq.s32.totalorder %s17, 0
    %p174 = por %p172, %p173
    %p175 = scmp.ne.s32.totalorder %s161, %s162
    %p176 = scmp.eq.s32.totalorder %s18, 1
    %p177 = por %p175, %p176
    %p179 = scmp.ne.s32.totalorder %s162, %s178
    %p180 = scmp.eq.s32.totalorder %s18, 0
    %p181 = por %p179, %p180
    %p182 = scmp.le.s32.totalorder 1, %s12
    %p183 = scmp.lt.s32.totalorder %s12, 3
    %p184 = pnand %p182, %p183
    %p185 = pneg %p184
    // Predicated region
    $region9: #{preact_block_forward.11} parent=5 // pred_check
      _
    $region10: #{preact_block_forward.11} parent=5 // pred_check_branch
      %187 = sbr.rel (%p184) target = $region12
    $region11: #{preact_block_forward.11} parent=5 // pred_region
      %s188 = ssub.s32 %s12, 1
      // Predicated region
      $region13: #{preact_block_forward.11} parent=11 // pred_check
        %p189 = pneg %p59
      $region14: #{preact_block_forward.11} parent=11 // pred_check_branch
        %191 = sbr.rel (%p189) target = $region16
      $region15: #{preact_block_forward.11} parent=11 // pred_region
        _
      $region16: #{preact_block_forward.11} parent=11 // pred_fallthru
        _
      // Predicated region
      $region17: #{preact_block_forward.11} parent=11 // pred_check
        %p192 = pneg %p80
      $region18: #{preact_block_forward.11} parent=11 // pred_check_branch
        %194 = sbr.rel (%p192) target = $region20
      $region19: #{preact_block_forward.11} parent=11 // pred_region
        _
      $region20: #{preact_block_forward.11} parent=11 // pred_fallthru
        _
      // Predicated region
      $region21: #{preact_block_forward.11} parent=11 // pred_check
        %p195 = pneg %p101
      $region22: #{preact_block_forward.11} parent=11 // pred_check_branch
        %197 = sbr.rel (%p195) target = $region24
      $region23: #{preact_block_forward.11} parent=11 // pred_region
        _
      $region24: #{preact_block_forward.11} parent=11 // pred_fallthru
        _
      // Predicated region
      $region25: #{preact_block_forward.11} parent=11 // pred_check
        %p198 = pneg %p122
      $region26: #{preact_block_forward.11} parent=11 // pred_check_branch
        %200 = sbr.rel (%p198) target = $region28
      $region27: #{preact_block_forward.11} parent=11 // pred_region
        _
      $region28: #{preact_block_forward.11} parent=11 // pred_fallthru
        _
    $region12: #{preact_block_forward.11} parent=5 // pred_fallthru
      _
    %p201 = scmp.lt.s32.totalorder %s12, 2
    // Predicated region
    $region29: #{preact_block_forward.11} parent=5 // pred_check
      %p202 = pneg %p201
    $region30: #{preact_block_forward.11} parent=5 // pred_check_branch
      %204 = sbr.rel (%p202) target = $region32
    $region31: #{preact_block_forward.11} parent=5 // pred_region
      // Predicated region
      $region33: #{preact_block_forward.11} parent=31 // pred_check
        %p205 = pneg %p32
      $region34: #{preact_block_forward.11} parent=31 // pred_check_branch
        %207 = sbr.rel (%p205) target = $region36
      $region35: #{preact_block_forward.11} parent=31 // pred_region
        %s208 = smul.u32 18, %s12
        %p209 = scmp.lt.s32.totalorder %s208, 35
        %s210 = scalar_select %p209, %s208, 35
        %s211 = smul.addr %s210, 8
        %s212 = scalar_lea.vmem %s0, %s211
        %s213 = smul.u32 18, %s12
      $region36: #{preact_block_forward.11} parent=31 // pred_fallthru
        _
      // Predicated region
      $region37: #{preact_block_forward.11} parent=31 // pred_check
        %p214 = pneg %p142
      $region38: #{preact_block_forward.11} parent=31 // pred_check_branch
        %216 = sbr.rel (%p214) target = $region40
      $region39: #{preact_block_forward.11} parent=31 // pred_region
        %s217 = smul.u32 14, %s12
        %p218 = scmp.lt.s32.totalorder %s217, 27
        %s219 = scalar_select %p218, %s217, 27
        %s220 = smul.addr %s219, 8
        %s221 = scalar_lea.vmem %s5, %s220
        %s222 = smul.u32 14, %s12
      $region40: #{preact_block_forward.11} parent=31 // pred_fallthru
        _
    $region32: #{preact_block_forward.11} parent=5 // pred_fallthru
      _
    %p223 = scmp.le.s32.totalorder 1, %s12
    %p224 = scmp.lt.s32.totalorder %s12, 3
    %p225 = pnand %p223, %p224
    %p226 = pneg %p225
    // Predicated region
    $region41: #{preact_block_forward.11} parent=5 // pred_check
      _
    $region42: #{preact_block_forward.11} parent=5 // pred_check_branch
      %228 = sbr.rel (%p225) target = $region44
    $region43: #{preact_block_forward.11} parent=5 // pred_region
      %s229 = ssub.s32 %s12, 1
      %s230 = smul.u32 18, %s17
      %p231 = scmp.lt.s32.totalorder %s230, 35
      %s232 = scalar_select %p231, %s230, 35
      %s233 = smul.addr %s232, 8
      %s234 = scalar_lea.vmem %s0, %s233
      %p235 = pneg %p38
      %p236 = pneg %p35
      %p237 = pneg %p59
      %p238 = pneg %p56
      %p239 = pneg %p80
      %p240 = pneg %p77
      %p241 = pneg %p101
      %p242 = pneg %p98
      %p243 = pneg %p122
      %p244 = pneg %p119
      %s245 = smul.u32 14, %s17
      %p246 = scmp.lt.s32.totalorder %s245, 27
      %s247 = scalar_select %p246, %s245, 27
      %s248 = smul.addr %s247, 8
      %s249 = scalar_lea.vmem %s5, %s248
      %p250 = pneg %p148
      %p251 = pneg %p145
      %p252 = pneg %p174
      %p253 = pneg %p171
      %s254 = smul.u32 14, %s17
      %p255 = scmp.lt.s32.totalorder %s254, 27
      %s256 = scalar_select %p255, %s254, 27
      %s257 = smul.addr %s256, 8
      %s258 = scalar_lea.vmem %s6, %s257
      %s259 = smul.u32 18, %s17
      %p260 = scmp.lt.s32.totalorder %s259, 35
      %s261 = scalar_select %p260, %s259, 35
      %s262 = smul.addr %s261, 8
      %s263 = scalar_lea.vmem %s0, %s262
      %s264 = smul.u32 18, %s17
      %s265 = smul.u32 14, %s17
      %p266 = scmp.lt.s32.totalorder %s265, 27
      %s267 = scalar_select %p266, %s265, 27
      %s268 = smul.addr %s267, 8
      %s269 = scalar_lea.vmem %s5, %s268
      %s270 = smul.u32 14, %s17
      %s271 = smul.u32 14, %s17
      %p272 = scmp.lt.s32.totalorder %s271, 27
      %s273 = scalar_select %p272, %s271, 27
      %s274 = smul.addr %s273, 8
      %s275 = scalar_lea.vmem %s6, %s274
      %s276 = smul.u32 14, %s17
      %v277 = vld [vmem:[%s263] sm:$0xff]
      %v278 = vld [vmem:[%s263 + $0x8] sm:$0xff]
      %v279 = vld [vmem:[%s263 + $0x10] sm:$0xff]
      %v280 = vld [vmem:[%s263 + $0x18] sm:$0xff]
      %v281 = vld [vmem:[%s263 + $0x20] sm:$0xff]
      %v282 = vld [vmem:[%s263 + $0x28] sm:$0xff]
      %v283 = vld [vmem:[%s263 + $0x30] sm:$0xff]
      %v284 = vld [vmem:[%s263 + $0x38] sm:$0xff]
      %v285 = vld [vmem:[%s263 + $0x40] sm:$0xff]
      %v286 = vld [vmem:[%s263 + $0x48] sm:$0xff]
      %v287 = vld [vmem:[%s263 + $0x50] sm:$0xff]
      %v288 = vld [vmem:[%s263 + $0x58] sm:$0xff]
      %v289 = vld [vmem:[%s263 + $0x60] sm:$0xff]
      %v290 = vld [vmem:[%s263 + $0x68] sm:$0xff]
      %v291 = vld [vmem:[%s263 + $0x70] sm:$0xff]
      %v292 = vld [vmem:[%s263 + $0x78] sm:$0xff]
      %v293 = vld [vmem:[%s263 + $0x80] sm:$0xff]
      %v294 = vld [vmem:[%s263 + $0x88] sm:$0xff]
      %v295 = vld [vmem:[%s2] sm:$0x1]
      %v297 = vlaneseq
      %v298 = vshrl.u32 %v297, 7
      %v299 = vsub.s32 0, %v298
      %v300 = vrot.slane %v295, %v299
      %v302 = vmul.f32 %v277, %v300
      %v303 = vmul.f32 %v278, %v300
      %v304 = vmul.f32 %v279, %v300
      %v305 = vmul.f32 %v280, %v300
      %v306 = vmul.f32 %v281, %v300
      %v307 = vmul.f32 %v282, %v300
      %v308 = vmul.f32 %v283, %v300
      %v309 = vmul.f32 %v284, %v300
      %v310 = vmul.f32 %v285, %v300
      %v311 = vmul.f32 %v286, %v300
      %v312 = vmul.f32 %v287, %v300
      %v313 = vmul.f32 %v288, %v300
      %v314 = vmul.f32 %v289, %v300
      %v315 = vmul.f32 %v290, %v300
      %v316 = vmul.f32 %v291, %v300
      %v317 = vmul.f32 %v292, %v300
      %v318 = vmul.f32 %v293, %v300
      %v319 = vmul.f32 %v294, %v300
      %v320 = vld [vmem:[%s3] sm:$0x1]
      %v322 = vlaneseq
      %v323 = vshrl.u32 %v322, 7
      %v324 = vsub.s32 0, %v323
      %v325 = vrot.slane %v320, %v324
      %v327 = vadd.f32 %v302, %v325
      %v328 = vadd.f32 %v303, %v325
      %v329 = vadd.f32 %v304, %v325
      %v330 = vadd.f32 %v305, %v325
      %v331 = vadd.f32 %v306, %v325
      %v332 = vadd.f32 %v307, %v325
      %v333 = vadd.f32 %v308, %v325
      %v334 = vadd.f32 %v309, %v325
      %v335 = vadd.f32 %v310, %v325
      %v336 = vadd.f32 %v311, %v325
      %v337 = vadd.f32 %v312, %v325
      %v338 = vadd.f32 %v313, %v325
      %v339 = vadd.f32 %v314, %v325
      %v340 = vadd.f32 %v315, %v325
      %v341 = vadd.f32 %v316, %v325
      %v342 = vadd.f32 %v317, %v325
      %v343 = vadd.f32 %v318, %v325
      %v344 = vadd.f32 %v319, %v325
      %v345 = vmax.f32 %v327, 0.0
      %v346 = vmax.f32 %v328, 0.0
      %v347 = vmax.f32 %v329, 0.0
      %v348 = vmax.f32 %v330, 0.0
      %v349 = vmax.f32 %v331, 0.0
      %v350 = vmax.f32 %v332, 0.0
      %v351 = vmax.f32 %v333, 0.0
      %v352 = vmax.f32 %v334, 0.0
      %v353 = vmax.f32 %v335, 0.0
      %v354 = vmax.f32 %v336, 0.0
      %v355 = vmax.f32 %v337, 0.0
      %v356 = vmax.f32 %v338, 0.0
      %v357 = vmax.f32 %v339, 0.0
      %v358 = vmax.f32 %v340, 0.0
      %v359 = vmax.f32 %v341, 0.0
      %v360 = vmax.f32 %v342, 0.0
      %v361 = vmax.f32 %v343, 0.0
      %v362 = vmax.f32 %v344, 0.0
      %v363 = vld [vmem:[%s4] sm:$0xff]
      %v364 = vld [vmem:[%s4 + $0x8] sm:$0xff]
      %v365 = vld [vmem:[%s4 + $0x10] sm:$0xff]
      %v366 = vld [vmem:[%s4 + $0x18] sm:$0xff]
      %v367 = vld [vmem:[%s4 + $0x20] sm:$0xff]
      %v368 = vld [vmem:[%s4 + $0x28] sm:$0xff]
      %v369 = vld [vmem:[%s4 + $0x30] sm:$0xff]
      %v370 = vld [vmem:[%s4 + $0x38] sm:$0xff]
      %v371 = vld [vmem:[%s4 + $0x40] sm:$0xff]
      %v372 = vld [vmem:[%s4 + $0x48] sm:$0xff]
      %v373 = vld [vmem:[%s4 + $0x50] sm:$0xff]
      %v374 = vld [vmem:[%s4 + $0x58] sm:$0xff]
      %v375 = vld [vmem:[%s4 + $0x60] sm:$0xff]
      %v376 = vld [vmem:[%s4 + $0x68] sm:$0xff]
      %v377 = vld [vmem:[%s4 + $0x70] sm:$0xff]
      %v378 = vld [vmem:[%s4 + $0x78] sm:$0xff]
      %v379 = vld [vmem:[%s4 + $0x80] sm:$0xff]
      %v380 = vld [vmem:[%s4 + $0x88] sm:$0xff]
      %382 = vset.pattern.permute.xlu0 0
      %383 = vperm.xlu0 %382, %v363
      %v384 = vpop.permute.xlu0 %383
      %387 = vset.pattern.permute.xlu0 0
      %388 = vperm.xlu0 %387, %v364
      %v389 = vpop.permute.xlu0 %388
      %392 = vset.pattern.permute.xlu0 0
      %393 = vperm.xlu0 %392, %v365
      %v394 = vpop.permute.xlu0 %393
      %397 = vset.pattern.permute.xlu0 0
      %398 = vperm.xlu0 %397, %v366
      %v399 = vpop.permute.xlu0 %398
      %402 = vset.pattern.permute.xlu0 0
      %403 = vperm.xlu0 %402, %v367
      %v404 = vpop.permute.xlu0 %403
      %407 = vset.pattern.permute.xlu0 0
      %408 = vperm.xlu0 %407, %v368
      %v409 = vpop.permute.xlu0 %408
      %412 = vset.pattern.permute.xlu0 0
      %413 = vperm.xlu0 %412, %v369
      %v414 = vpop.permute.xlu0 %413
      %417 = vset.pattern.permute.xlu0 0
      %418 = vperm.xlu0 %417, %v370
      %v419 = vpop.permute.xlu0 %418
      %422 = vset.pattern.permute.xlu0 0
      %423 = vperm.xlu0 %422, %v371
      %v424 = vpop.permute.xlu0 %423
      %427 = vset.pattern.permute.xlu0 0
      %428 = vperm.xlu0 %427, %v372
      %v429 = vpop.permute.xlu0 %428
      %432 = vset.pattern.permute.xlu0 0
      %433 = vperm.xlu0 %432, %v373
      %v434 = vpop.permute.xlu0 %433
      %437 = vset.pattern.permute.xlu0 0
      %438 = vperm.xlu0 %437, %v374
      %v439 = vpop.permute.xlu0 %438
      %442 = vset.pattern.permute.xlu0 0
      %443 = vperm.xlu0 %442, %v375
      %v444 = vpop.permute.xlu0 %443
      %447 = vset.pattern.permute.xlu0 0
      %448 = vperm.xlu0 %447, %v376
      %v449 = vpop.permute.xlu0 %448
      %452 = vset.pattern.permute.xlu0 0
      %453 = vperm.xlu0 %452, %v377
      %v454 = vpop.permute.xlu0 %453
      %457 = vset.pattern.permute.xlu0 0
      %458 = vperm.xlu0 %457, %v378
      %v459 = vpop.permute.xlu0 %458
      %462 = vset.pattern.permute.xlu0 0
      %463 = vperm.xlu0 %462, %v379
      %v464 = vpop.permute.xlu0 %463
      %467 = vset.pattern.permute.xlu0 0
      %468 = vperm.xlu0 %467, %v380
      %v469 = vpop.permute.xlu0 %468
      %v471 = vmul.f32 %v345, %v384
      %v472 = vmul.f32 %v346, %v389
      %v473 = vmul.f32 %v347, %v394
      %v474 = vmul.f32 %v348, %v399
      %v475 = vmul.f32 %v349, %v404
      %v476 = vmul.f32 %v350, %v409
      %v477 = vmul.f32 %v351, %v414
      %v478 = vmul.f32 %v352, %v419
      %v479 = vmul.f32 %v353, %v424
      %v480 = vmul.f32 %v354, %v429
      %v481 = vmul.f32 %v355, %v434
      %v482 = vmul.f32 %v356, %v439
      %v483 = vmul.f32 %v357, %v444
      %v484 = vmul.f32 %v358, %v449
      %v485 = vmul.f32 %v359, %v454
      %v486 = vmul.f32 %v360, %v459
      %v487 = vmul.f32 %v361, %v464
      %v488 = vmul.f32 %v362, %v469
      %vm489 = vcmask 64512
      %490 = vst.msk [vmem:[#allocation2] sm:$0xff] %vm489, %v471
      %491 = vst.msk [vmem:[#allocation2 + $0x8] sm:$0xff] %vm489, %v472
      %492 = vst.msk [vmem:[#allocation2 + $0x10] sm:$0xff] %vm489, %v473
      %493 = vst.msk [vmem:[#allocation2 + $0x18] sm:$0xff] %vm489, %v474
      %494 = vst.msk [vmem:[#allocation2 + $0x20] sm:$0xff] %vm489, %v475
      %495 = vst.msk [vmem:[#allocation2 + $0x28] sm:$0xff] %vm489, %v476
      %496 = vst.msk [vmem:[#allocation2 + $0x30] sm:$0xff] %vm489, %v477
      %497 = vst.msk [vmem:[#allocation2 + $0x38] sm:$0xff] %vm489, %v478
      %498 = vst.msk [vmem:[#allocation2 + $0x40] sm:$0xff] %vm489, %v479
      %499 = vst.msk [vmem:[#allocation2 + $0x48] sm:$0xff] %vm489, %v480
      %500 = vst.msk [vmem:[#allocation2 + $0x50] sm:$0xff] %vm489, %v481
      %501 = vst.msk [vmem:[#allocation2 + $0x58] sm:$0xff] %vm489, %v482
      %502 = vst.msk [vmem:[#allocation2 + $0x60] sm:$0xff] %vm489, %v483
      %503 = vst.msk [vmem:[#allocation2 + $0x68] sm:$0xff] %vm489, %v484
      %504 = vst.msk [vmem:[#allocation2 + $0x70] sm:$0xff] %vm489, %v485
      %505 = vst.msk [vmem:[#allocation2 + $0x78] sm:$0xff] %vm489, %v486
      %506 = vst.msk [vmem:[#allocation2 + $0x80] sm:$0xff] %vm489, %v487
      %507 = vst.msk [vmem:[#allocation2 + $0x88] sm:$0xff] %vm489, %v488
      %508 = vst [vmem:[#allocation3] sm:$0xff] 0.0
      %509 = vst [vmem:[#allocation3 + $0x8] sm:$0xff] 0.0
      %510 = vst [vmem:[#allocation3 + $0x10] sm:$0xff] 0.0
      %511 = vst [vmem:[#allocation3 + $0x18] sm:$0xff] 0.0
      %512 = vst [vmem:[#allocation3 + $0x20] sm:$0xff] 0.0
      %513 = vst [vmem:[#allocation3 + $0x28] sm:$0xff] 0.0
      %514 = vst [vmem:[#allocation3 + $0x30] sm:$0xff] 0.0
      %515 = vst [vmem:[#allocation3 + $0x38] sm:$0xff] 0.0
      %516 = vst [vmem:[#allocation3 + $0x40] sm:$0xff] 0.0
      %517 = vst [vmem:[#allocation3 + $0x48] sm:$0xff] 0.0
      %518 = vst [vmem:[#allocation3 + $0x50] sm:$0xff] 0.0
      %519 = vst [vmem:[#allocation3 + $0x58] sm:$0xff] 0.0
      %520 = vst [vmem:[#allocation3 + $0x60] sm:$0xff] 0.0
      %521 = vst [vmem:[#allocation3 + $0x68] sm:$0xff] 0.0
      %v522 = vld [vmem:[#allocation3] sm:$0xff]
      %v523 = vld [vmem:[#allocation3 + $0x8] sm:$0xff]
      %v524 = vld [vmem:[#allocation3 + $0x10] sm:$0xff]
      %v525 = vld [vmem:[#allocation3 + $0x18] sm:$0xff]
      %v526 = vld [vmem:[#allocation3 + $0x20] sm:$0xff]
      %v527 = vld [vmem:[#allocation3 + $0x28] sm:$0xff]
      %v528 = vld [vmem:[#allocation3 + $0x30] sm:$0xff]
      %v529 = vld [vmem:[#allocation3 + $0x38] sm:$0xff]
      %v530 = vld [vmem:[#allocation3 + $0x40] sm:$0xff]
      %v531 = vld [vmem:[#allocation3 + $0x48] sm:$0xff]
      %v532 = vld [vmem:[#allocation3 + $0x50] sm:$0xff]
      %v533 = vld [vmem:[#allocation3 + $0x58] sm:$0xff]
      %v534 = vld [vmem:[#allocation3 + $0x60] sm:$0xff]
      %v535 = vld [vmem:[#allocation3 + $0x68] sm:$0xff]
      %v536 = vld [vmem:[#allocation2] sm:$0xff]
      %v537 = vld [vmem:[#allocation2 + $0x8] sm:$0xff]
      %v538 = vld [vmem:[#allocation2 + $0x10] sm:$0xff]
      %v539 = vld [vmem:[#allocation2 + $0x18] sm:$0xff]
      %v540 = vld [vmem:[#allocation2 + $0x20] sm:$0xff]
      %v541 = vld [vmem:[#allocation2 + $0x28] sm:$0xff]
      %v542 = vld [vmem:[#allocation2 + $0x30] sm:$0xff]
      %v543 = vld [vmem:[#allocation2 + $0x38] sm:$0xff]
      %v544 = vld [vmem:[#allocation2 + $0x40] sm:$0xff]
      %v545 = vld [vmem:[#allocation2 + $0x48] sm:$0xff]
      %v546 = vld [vmem:[#allocation2 + $0x50] sm:$0xff]
      %v547 = vld [vmem:[#allocation2 + $0x58] sm:$0xff]
      %v548 = vld [vmem:[#allocation2 + $0x60] sm:$0xff]
      %v549 = vld [vmem:[#allocation2 + $0x68] sm:$0xff]
      %v550 = vld [vmem:[%s1] sm:$0xff]
      %v552 = vsel %vm489, %v536, 0
      %v555 = vsel %vm489, %v537, 0
      %v558 = vsel %vm489, %v538, 0
      %v561 = vsel %vm489, %v539, 0
      %v564 = vsel %vm489, %v540, 0
      %v567 = vsel %vm489, %v541, 0
      %v570 = vsel %vm489, %v542, 0
      %v573 = vsel %vm489, %v543, 0
      %v576 = vsel %vm489, %v544, 0
      %v579 = vsel %vm489, %v545, 0
      %v582 = vsel %vm489, %v546, 0
      %v585 = vsel %vm489, %v547, 0
      %v588 = vsel %vm489, %v548, 0
      %v591 = vsel %vm489, %v549, 0
      %593 = vmatprep.subr.mxu0 0.0
      %594 = vmatpush1.msra.mxu0 0.0
      %595 = vmatprep.subr.mxu0 0.0
      %596 = vmatpush1.msra.mxu0 0.0
      %597 = vmatprep.subr.mxu0 0.0
      %598 = vmatpush1.msra.mxu0 0.0
      %599 = vmatprep.subr.mxu0 0.0
      %600 = vmatpush1.msra.mxu0 0.0
      %601 = vmatprep.subr.mxu0 0.0
      %602 = vmatpush1.msra.mxu0 0.0
      %603 = vmatprep.subr.mxu0 0.0
      %604 = vmatpush1.msra.mxu0 0.0
      %605 = vmatprep.subr.mxu0 0.0
      %606 = vmatpush1.msra.mxu0 0.0
      %607 = vmatprep.subr.mxu0 0.0
      %608 = vmatpush1.msra.mxu0 0.0
      %609 = vmatprep.subr.mxu0 0.0
      %610 = vmatpush1.msra.mxu0 0.0
      %611 = vmatprep.subr.mxu0 0.0
      %612 = vmatpush1.msra.mxu0 0.0
      %613 = vmatprep.subr.mxu0 0.0
      %614 = vmatpush1.msra.mxu0 0.0
      %615 = vmatprep.subr.mxu0 0.0
      %616 = vmatpush1.msra.mxu0 0.0
      %617 = vmatprep.subr.mxu0 0.0
      %618 = vmatpush1.msra.mxu0 0.0
      %619 = vmatprep.subr.mxu0 0.0
      %620 = vmatpush1.msra.mxu0 0.0
      %621 = vmatprep.subr.mxu0 0.0
      %622 = vmatpush1.msra.mxu0 0.0
      %623 = vmatprep.subr.mxu0 0.0
      %624 = vmatpush1.msra.mxu0 %v550
      %625 = vmatprep.subr.mxu0 0.0
      %626 = vmatpush2.msra.mxu0 0.0
      %627 = vmatprep.subr.mxu0 0.0
      %628 = vmatpush2.msra.mxu0 0.0
      %629 = vmatprep.subr.mxu0 0.0
      %630 = vmatpush2.msra.mxu0 0.0
      %631 = vmatprep.subr.mxu0 0.0
      %632 = vmatpush2.msra.mxu0 0.0
      %633 = vmatprep.subr.mxu0 0.0
      %634 = vmatpush2.msra.mxu0 0.0
      %635 = vmatprep.subr.mxu0 0.0
      %636 = vmatpush2.msra.mxu0 0.0
      %637 = vmatprep.subr.mxu0 0.0
      %638 = vmatpush2.msra.mxu0 0.0
      %639 = vmatprep.subr.mxu0 0.0
      %640 = vmatpush2.msra.mxu0 0.0
      %641 = vmatprep.subr.mxu0 0.0
      %642 = vmatpush2.msra.mxu0 0.0
      %643 = vmatprep.subr.mxu0 0.0
      %644 = vmatpush2.msra.mxu0 0.0
      %645 = vmatprep.subr.mxu0 0.0
      %646 = vmatpush2.msra.mxu0 0.0
      %647 = vmatprep.subr.mxu0 0.0
      %648 = vmatpush2.msra.mxu0 0.0
      %649 = vmatprep.subr.mxu0 0.0
      %650 = vmatpush2.msra.mxu0 0.0
      %651 = vmatprep.subr.mxu0 0.0
      %652 = vmatpush2.msra.mxu0 0.0
      %653 = vmatprep.subr.mxu0 0.0
      %654 = vmatpush2.msra.mxu0 0.0
      %655 = vmatprep.subr.mxu0 0.0
      %656 = vmatpush2.msra.mxu0 0.0
      %657 = vmatprep.mubr.f32.mxu0 0.0
      %658 = vmatmul.mubr.f32.gmra.mxu0 %v552
      %v659 = vpop.f32.mrf.mxu0
      %v660 = vadd.f32 0.0, %v659
      %v661 = vpop.f32.mrf.mxu0
      %662 = vmatprep.mubr.f32.mxu0 0.0
      %663 = vmatmul.mubr.f32.gmra.mxu0 %v555
      %v664 = vpop.f32.mrf.mxu0
      %v665 = vadd.f32 0.0, %v664
      %v666 = vpop.f32.mrf.mxu0
      %667 = vmatprep.mubr.f32.mxu0 0.0
      %668 = vmatmul.mubr.f32.gmra.mxu0 %v558
      %v669 = vpop.f32.mrf.mxu0
      %v670 = vadd.f32 0.0, %v669
      %v671 = vpop.f32.mrf.mxu0
      %672 = vmatprep.mubr.f32.mxu0 0.0
      %673 = vmatmul.mubr.f32.gmra.mxu0 %v561
      %v674 = vpop.f32.mrf.mxu0
      %v675 = vadd.f32 0.0, %v674
      %v676 = vpop.f32.mrf.mxu0
      %677 = vmatprep.mubr.f32.mxu0 0.0
      %678 = vmatmul.mubr.f32.gmra.mxu0 %v564
      %v679 = vpop.f32.mrf.mxu0
      %v680 = vadd.f32 0.0, %v679
      %v681 = vpop.f32.mrf.mxu0
      %682 = vmatprep.mubr.f32.mxu0 0.0
      %683 = vmatmul.mubr.f32.gmra.mxu0 %v567
      %v684 = vpop.f32.mrf.mxu0
      %v685 = vadd.f32 0.0, %v684
      %v686 = vpop.f32.mrf.mxu0
      %687 = vmatprep.mubr.f32.mxu0 0.0
      %688 = vmatmul.mubr.f32.gmra.mxu0 %v570
      %v689 = vpop.f32.mrf.mxu0
      %v690 = vadd.f32 0.0, %v689
      %v691 = vpop.f32.mrf.mxu0
      %692 = vmatprep.mubr.f32.mxu0 0.0
      %693 = vmatmul.mubr.f32.gmra.mxu0 %v573
      %v694 = vpop.f32.mrf.mxu0
      %v695 = vadd.f32 0.0, %v694
      %v696 = vpop.f32.mrf.mxu0
      %697 = vmatprep.mubr.f32.mxu0 0.0
      %698 = vmatmul.mubr.f32.gmra.mxu0 %v576
      %v699 = vpop.f32.mrf.mxu0
      %v700 = vadd.f32 0.0, %v699
      %v701 = vpop.f32.mrf.mxu0
      %702 = vmatprep.mubr.f32.mxu0 0.0
      %703 = vmatmul.mubr.f32.gmra.mxu0 %v579
      %v704 = vpop.f32.mrf.mxu0
      %v705 = vadd.f32 0.0, %v704
      %v706 = vpop.f32.mrf.mxu0
      %707 = vmatprep.mubr.f32.mxu0 0.0
      %708 = vmatmul.mubr.f32.gmra.mxu0 %v582
      %v709 = vpop.f32.mrf.mxu0
      %v710 = vadd.f32 0.0, %v709
      %v711 = vpop.f32.mrf.mxu0
      %712 = vmatprep.mubr.f32.mxu0 0.0
      %713 = vmatmul.mubr.f32.gmra.mxu0 %v585
      %v714 = vpop.f32.mrf.mxu0
      %v715 = vadd.f32 0.0, %v714
      %v716 = vpop.f32.mrf.mxu0
      %717 = vmatprep.mubr.f32.mxu0 0.0
      %718 = vmatmul.mubr.f32.gmra.mxu0 %v588
      %v719 = vpop.f32.mrf.mxu0
      %v720 = vadd.f32 0.0, %v719
      %v721 = vpop.f32.mrf.mxu0
      %722 = vmatprep.mubr.f32.mxu0 0.0
      %723 = vmatmul.mubr.f32.gmra.mxu0 %v591
      %v724 = vpop.f32.mrf.mxu0
      %v725 = vadd.f32 0.0, %v724
      %v726 = vpop.f32.mrf.mxu0
      %727 = vdwg.mxu0
      %v728 = vadd.f32 %v522, %v660
      %v729 = vadd.f32 %v523, %v665
      %v730 = vadd.f32 %v524, %v670
      %v731 = vadd.f32 %v525, %v675
      %v732 = vadd.f32 %v526, %v680
      %v733 = vadd.f32 %v527, %v685
      %v734 = vadd.f32 %v528, %v690
      %v735 = vadd.f32 %v529, %v695
      %v736 = vadd.f32 %v530, %v700
      %v737 = vadd.f32 %v531, %v705
      %v738 = vadd.f32 %v532, %v710
      %v739 = vadd.f32 %v533, %v715
      %v740 = vadd.f32 %v534, %v720
      %v741 = vadd.f32 %v535, %v725
      %742 = vst [vmem:[#allocation3] sm:$0xff] %v728
      %743 = vst [vmem:[#allocation3 + $0x8] sm:$0xff] %v729
      %744 = vst [vmem:[#allocation3 + $0x10] sm:$0xff] %v730
      %745 = vst [vmem:[#allocation3 + $0x18] sm:$0xff] %v731
      %746 = vst [vmem:[#allocation3 + $0x20] sm:$0xff] %v732
      %747 = vst [vmem:[#allocation3 + $0x28] sm:$0xff] %v733
      %748 = vst [vmem:[#allocation3 + $0x30] sm:$0xff] %v734
      %749 = vst [vmem:[#allocation3 + $0x38] sm:$0xff] %v735
      %750 = vst [vmem:[#allocation3 + $0x40] sm:$0xff] %v736
      %751 = vst [vmem:[#allocation3 + $0x48] sm:$0xff] %v737
      %752 = vst [vmem:[#allocation3 + $0x50] sm:$0xff] %v738
      %753 = vst [vmem:[#allocation3 + $0x58] sm:$0xff] %v739
      %754 = vst [vmem:[#allocation3 + $0x60] sm:$0xff] %v740
      %755 = vst [vmem:[#allocation3 + $0x68] sm:$0xff] %v741
      %v756 = vld [vmem:[#allocation3] sm:$0xff]
      %v757 = vld [vmem:[#allocation3 + $0x8] sm:$0xff]
      %v758 = vld [vmem:[#allocation3 + $0x10] sm:$0xff]
      %v759 = vld [vmem:[#allocation3 + $0x18] sm:$0xff]
      %v760 = vld [vmem:[#allocation3 + $0x20] sm:$0xff]
      %v761 = vld [vmem:[#allocation3 + $0x28] sm:$0xff]
      %v762 = vld [vmem:[#allocation3 + $0x30] sm:$0xff]
      %v763 = vld [vmem:[#allocation3 + $0x38] sm:$0xff]
      %v764 = vld [vmem:[#allocation3 + $0x40] sm:$0xff]
      %v765 = vld [vmem:[#allocation3 + $0x48] sm:$0xff]
      %v766 = vld [vmem:[#allocation3 + $0x50] sm:$0xff]
      %v767 = vld [vmem:[#allocation3 + $0x58] sm:$0xff]
      %v768 = vld [vmem:[#allocation3 + $0x60] sm:$0xff]
      %v769 = vld [vmem:[#allocation3 + $0x68] sm:$0xff]
      %v770 = vld [vmem:[#allocation2 + $0x1] sm:$0xff]
      %v771 = vld [vmem:[#allocation2 + $0x9] sm:$0xff]
      %v772 = vld [vmem:[#allocation2 + $0x11] sm:$0xff]
      %v773 = vld [vmem:[#allocation2 + $0x19] sm:$0xff]
      %v774 = vld [vmem:[#allocation2 + $0x21] sm:$0xff]
      %v775 = vld [vmem:[#allocation2 + $0x29] sm:$0xff]
      %v776 = vld [vmem:[#allocation2 + $0x31] sm:$0xff]
      %v777 = vld [vmem:[#allocation2 + $0x39] sm:$0xff]
      %v778 = vld [vmem:[#allocation2 + $0x41] sm:$0xff]
      %v779 = vld [vmem:[#allocation2 + $0x49] sm:$0xff]
      %v780 = vld [vmem:[#allocation2 + $0x51] sm:$0xff]
      %v781 = vld [vmem:[#allocation2 + $0x59] sm:$0xff]
      %v782 = vld [vmem:[#allocation2 + $0x61] sm:$0xff]
      %v783 = vld [vmem:[#allocation2 + $0x69] sm:$0xff]
      %s784 = scalar_lea.vmem %s1, 8
      %v785 = vld [vmem:[%s784] sm:$0xff]
      %v787 = vsel %vm489, %v770, 0
      %v790 = vsel %vm489, %v771, 0
      %v793 = vsel %vm489, %v772, 0
      %v796 = vsel %vm489, %v773, 0
      %v799 = vsel %vm489, %v774, 0
      %v802 = vsel %vm489, %v775, 0
      %v805 = vsel %vm489, %v776, 0
      %v808 = vsel %vm489, %v777, 0
      %v811 = vsel %vm489, %v778, 0
      %v814 = vsel %vm489, %v779, 0
      %v817 = vsel %vm489, %v780, 0
      %v820 = vsel %vm489, %v781, 0
      %v823 = vsel %vm489, %v782, 0
      %v826 = vsel %vm489, %v783, 0
      %828 = vmatprep.subr.mxu0 0.0
      %829 = vmatpush1.msra.mxu0 0.0
      %830 = vmatprep.subr.mxu0 0.0
      %831 = vmatpush1.msra.mxu0 0.0
      %832 = vmatprep.subr.mxu0 0.0
      %833 = vmatpush1.msra.mxu0 0.0
      %834 = vmatprep.subr.mxu0 0.0
      %835 = vmatpush1.msra.mxu0 0.0
      %836 = vmatprep.subr.mxu0 0.0
      %837 = vmatpush1.msra.mxu0 0.0
      %838 = vmatprep.subr.mxu0 0.0
      %839 = vmatpush1.msra.mxu0 0.0
      %840 = vmatprep.subr.mxu0 0.0
      %841 = vmatpush1.msra.mxu0 0.0
      %842 = vmatprep.subr.mxu0 0.0
      %843 = vmatpush1.msra.mxu0 0.0
      %844 = vmatprep.subr.mxu0 0.0
      %845 = vmatpush1.msra.mxu0 0.0
      %846 = vmatprep.subr.mxu0 0.0
      %847 = vmatpush1.msra.mxu0 0.0
      %848 = vmatprep.subr.mxu0 0.0
      %849 = vmatpush1.msra.mxu0 0.0
      %850 = vmatprep.subr.mxu0 0.0
      %851 = vmatpush1.msra.mxu0 0.0
      %852 = vmatprep.subr.mxu0 0.0
      %853 = vmatpush1.msra.mxu0 0.0
      %854 = vmatprep.subr.mxu0 0.0
      %855 = vmatpush1.msra.mxu0 0.0
      %856 = vmatprep.subr.mxu0 0.0
      %857 = vmatpush1.msra.mxu0 0.0
      %858 = vmatprep.subr.mxu0 0.0
      %859 = vmatpush1.msra.mxu0 %v785
      %860 = vmatprep.subr.mxu0 0.0
      %861 = vmatpush2.msra.mxu0 0.0
      %862 = vmatprep.subr.mxu0 0.0
      %863 = vmatpush2.msra.mxu0 0.0
      %864 = vmatprep.subr.mxu0 0.0
      %865 = vmatpush2.msra.mxu0 0.0
      %866 = vmatprep.subr.mxu0 0.0
      %867 = vmatpush2.msra.mxu0 0.0
      %868 = vmatprep.subr.mxu0 0.0
      %869 = vmatpush2.msra.mxu0 0.0
      %870 = vmatprep.subr.mxu0 0.0
      %871 = vmatpush2.msra.mxu0 0.0
      %872 = vmatprep.subr.mxu0 0.0
      %873 = vmatpush2.msra.mxu0 0.0
      %874 = vmatprep.subr.mxu0 0.0
      %875 = vmatpush2.msra.mxu0 0.0
      %876 = vmatprep.subr.mxu0 0.0
      %877 = vmatpush2.msra.mxu0 0.0
      %878 = vmatprep.subr.mxu0 0.0
      %879 = vmatpush2.msra.mxu0 0.0
      %880 = vmatprep.subr.mxu0 0.0
      %881 = vmatpush2.msra.mxu0 0.0
      %882 = vmatprep.subr.mxu0 0.0
      %883 = vmatpush2.msra.mxu0 0.0
      %884 = vmatprep.subr.mxu0 0.0
      %885 = vmatpush2.msra.mxu0 0.0
      %886 = vmatprep.subr.mxu0 0.0
      %887 = vmatpush2.msra.mxu0 0.0
      %888 = vmatprep.subr.mxu0 0.0
      %889 = vmatpush2.msra.mxu0 0.0
      %890 = vmatprep.subr.mxu0 0.0
      %891 = vmatpush2.msra.mxu0 0.0
      %892 = vmatprep.mubr.f32.mxu0 0.0
      %893 = vmatmul.mubr.f32.gmra.mxu0 %v787
      %v894 = vpop.f32.mrf.mxu0
      %v895 = vadd.f32 0.0, %v894
      %v896 = vpop.f32.mrf.mxu0
      %897 = vmatprep.mubr.f32.mxu0 0.0
      %898 = vmatmul.mubr.f32.gmra.mxu0 %v790
      %v899 = vpop.f32.mrf.mxu0
      %v900 = vadd.f32 0.0, %v899
      %v901 = vpop.f32.mrf.mxu0
      %902 = vmatprep.mubr.f32.mxu0 0.0
      %903 = vmatmul.mubr.f32.gmra.mxu0 %v793
      %v904 = vpop.f32.mrf.mxu0
      %v905 = vadd.f32 0.0, %v904
      %v906 = vpop.f32.mrf.mxu0
      %907 = vmatprep.mubr.f32.mxu0 0.0
      %908 = vmatmul.mubr.f32.gmra.mxu0 %v796
      %v909 = vpop.f32.mrf.mxu0
      %v910 = vadd.f32 0.0, %v909
      %v911 = vpop.f32.mrf.mxu0
      %912 = vmatprep.mubr.f32.mxu0 0.0
      %913 = vmatmul.mubr.f32.gmra.mxu0 %v799
      %v914 = vpop.f32.mrf.mxu0
      %v915 = vadd.f32 0.0, %v914
      %v916 = vpop.f32.mrf.mxu0
      %917 = vmatprep.mubr.f32.mxu0 0.0
      %918 = vmatmul.mubr.f32.gmra.mxu0 %v802
      %v919 = vpop.f32.mrf.mxu0
      %v920 = vadd.f32 0.0, %v919
      %v921 = vpop.f32.mrf.mxu0
      %922 = vmatprep.mubr.f32.mxu0 0.0
      %923 = vmatmul.mubr.f32.gmra.mxu0 %v805
      %v924 = vpop.f32.mrf.mxu0
      %v925 = vadd.f32 0.0, %v924
      %v926 = vpop.f32.mrf.mxu0
      %927 = vmatprep.mubr.f32.mxu0 0.0
      %928 = vmatmul.mubr.f32.gmra.mxu0 %v808
      %v929 = vpop.f32.mrf.mxu0
      %v930 = vadd.f32 0.0, %v929
      %v931 = vpop.f32.mrf.mxu0
      %932 = vmatprep.mubr.f32.mxu0 0.0
      %933 = vmatmul.mubr.f32.gmra.mxu0 %v811
      %v934 = vpop.f32.mrf.mxu0
      %v935 = vadd.f32 0.0, %v934
      %v936 = vpop.f32.mrf.mxu0
      %937 = vmatprep.mubr.f32.mxu0 0.0
      %938 = vmatmul.mubr.f32.gmra.mxu0 %v814
      %v939 = vpop.f32.mrf.mxu0
      %v940 = vadd.f32 0.0, %v939
      %v941 = vpop.f32.mrf.mxu0
      %942 = vmatprep.mubr.f32.mxu0 0.0
      %943 = vmatmul.mubr.f32.gmra.mxu0 %v817
      %v944 = vpop.f32.mrf.mxu0
      %v945 = vadd.f32 0.0, %v944
      %v946 = vpop.f32.mrf.mxu0
      %947 = vmatprep.mubr.f32.mxu0 0.0
      %948 = vmatmul.mubr.f32.gmra.mxu0 %v820
      %v949 = vpop.f32.mrf.mxu0
      %v950 = vadd.f32 0.0, %v949
      %v951 = vpop.f32.mrf.mxu0
      %952 = vmatprep.mubr.f32.mxu0 0.0
      %953 = vmatmul.mubr.f32.gmra.mxu0 %v823
      %v954 = vpop.f32.mrf.mxu0
      %v955 = vadd.f32 0.0, %v954
      %v956 = vpop.f32.mrf.mxu0
      %957 = vmatprep.mubr.f32.mxu0 0.0
      %958 = vmatmul.mubr.f32.gmra.mxu0 %v826
      %v959 = vpop.f32.mrf.mxu0
      %v960 = vadd.f32 0.0, %v959
      %v961 = vpop.f32.mrf.mxu0
      %962 = vdwg.mxu0
      %v963 = vadd.f32 %v756, %v895
      %v964 = vadd.f32 %v757, %v900
      %v965 = vadd.f32 %v758, %v905
      %v966 = vadd.f32 %v759, %v910
      %v967 = vadd.f32 %v760, %v915
      %v968 = vadd.f32 %v761, %v920
      %v969 = vadd.f32 %v762, %v925
      %v970 = vadd.f32 %v763, %v930
      %v971 = vadd.f32 %v764, %v935
      %v972 = vadd.f32 %v765, %v940
      %v973 = vadd.f32 %v766, %v945
      %v974 = vadd.f32 %v767, %v950
      %v975 = vadd.f32 %v768, %v955
      %v976 = vadd.f32 %v769, %v960
      %977 = vst [vmem:[#allocation3] sm:$0xff] %v963
      %978 = vst [vmem:[#allocation3 + $0x8] sm:$0xff] %v964
      %979 = vst [vmem:[#allocation3 + $0x10] sm:$0xff] %v965
      %980 = vst [vmem:[#allocation3 + $0x18] sm:$0xff] %v966
      %981 = vst [vmem:[#allocation3 + $0x20] sm:$0xff] %v967
      %982 = vst [vmem:[#allocation3 + $0x28] sm:$0xff] %v968
      %983 = vst [vmem:[#allocation3 + $0x30] sm:$0xff] %v969
      %984 = vst [vmem:[#allocation3 + $0x38] sm:$0xff] %v970
      %985 = vst [vmem:[#allocation3 + $0x40] sm:$0xff] %v971
      %986 = vst [vmem:[#allocation3 + $0x48] sm:$0xff] %v972
      %987 = vst [vmem:[#allocation3 + $0x50] sm:$0xff] %v973
      %988 = vst [vmem:[#allocation3 + $0x58] sm:$0xff] %v974
      %989 = vst [vmem:[#allocation3 + $0x60] sm:$0xff] %v975
      %990 = vst [vmem:[#allocation3 + $0x68] sm:$0xff] %v976
      %v991 = vld [vmem:[#allocation3] sm:$0xff]
      %v992 = vld [vmem:[#allocation3 + $0x8] sm:$0xff]
      %v993 = vld [vmem:[#allocation3 + $0x10] sm:$0xff]
      %v994 = vld [vmem:[#allocation3 + $0x18] sm:$0xff]
      %v995 = vld [vmem:[#allocation3 + $0x20] sm:$0xff]
      %v996 = vld [vmem:[#allocation3 + $0x28] sm:$0xff]
      %v997 = vld [vmem:[#allocation3 + $0x30] sm:$0xff]
      %v998 = vld [vmem:[#allocation3 + $0x38] sm:$0xff]
      %v999 = vld [vmem:[#allocation3 + $0x40] sm:$0xff]
      %v1000 = vld [vmem:[#allocation3 + $0x48] sm:$0xff]
      %v1001 = vld [vmem:[#allocation3 + $0x50] sm:$0xff]
      %v1002 = vld [vmem:[#allocation3 + $0x58] sm:$0xff]
      %v1003 = vld [vmem:[#allocation3 + $0x60] sm:$0xff]
      %v1004 = vld [vmem:[#allocation3 + $0x68] sm:$0xff]
      %v1005 = vld [vmem:[#allocation2 + $0x2] sm:$0xff]
      %v1006 = vld [vmem:[#allocation2 + $0xa] sm:$0xff]
      %v1007 = vld [vmem:[#allocation2 + $0x12] sm:$0xff]
      %v1008 = vld [vmem:[#allocation2 + $0x1a] sm:$0xff]
      %v1009 = vld [vmem:[#allocation2 + $0x22] sm:$0xff]
      %v1010 = vld [vmem:[#allocation2 + $0x2a] sm:$0xff]
      %v1011 = vld [vmem:[#allocation2 + $0x32] sm:$0xff]
      %v1012 = vld [vmem:[#allocation2 + $0x3a] sm:$0xff]
      %v1013 = vld [vmem:[#allocation2 + $0x42] sm:$0xff]
      %v1014 = vld [vmem:[#allocation2 + $0x4a] sm:$0xff]
      %v1015 = vld [vmem:[#allocation2 + $0x52] sm:$0xff]
      %v1016 = vld [vmem:[#allocation2 + $0x5a] sm:$0xff]
      %v1017 = vld [vmem:[#allocation2 + $0x62] sm:$0xff]
      %v1018 = vld [vmem:[#allocation2 + $0x6a] sm:$0xff]
      %s1019 = scalar_lea.vmem %s1, 16
      %v1020 = vld [vmem:[%s1019] sm:$0xff]
      %v1022 = vsel %vm489, %v1005, 0
      %v1025 = vsel %vm489, %v1006, 0
      %v1028 = vsel %vm489, %v1007, 0
      %v1031 = vsel %vm489, %v1008, 0
      %v1034 = vsel %vm489, %v1009, 0
      %v1037 = vsel %vm489, %v1010, 0
      %v1040 = vsel %vm489, %v1011, 0
      %v1043 = vsel %vm489, %v1012, 0
      %v1046 = vsel %vm489, %v1013, 0
      %v1049 = vsel %vm489, %v1014, 0
      %v1052 = vsel %vm489, %v1015, 0
      %v1055 = vsel %vm489, %v1016, 0
      %v1058 = vsel %vm489, %v1017, 0
      %v1061 = vsel %vm489, %v1018, 0
      %1063 = vmatprep.subr.mxu0 0.0
      %1064 = vmatpush1.msra.mxu0 0.0
      %1065 = vmatprep.subr.mxu0 0.0
      %1066 = vmatpush1.msra.mxu0 0.0
      %1067 = vmatprep.subr.mxu0 0.0
      %1068 = vmatpush1.msra.mxu0 0.0
      %1069 = vmatprep.subr.mxu0 0.0
      %1070 = vmatpush1.msra.mxu0 0.0
      %1071 = vmatprep.subr.mxu0 0.0
      %1072 = vmatpush1.msra.mxu0 0.0
      %1073 = vmatprep.subr.mxu0 0.0
      %1074 = vmatpush1.msra.mxu0 0.0
      %1075 = vmatprep.subr.mxu0 0.0
      %1076 = vmatpush1.msra.mxu0 0.0
      %1077 = vmatprep.subr.mxu0 0.0
      %1078 = vmatpush1.msra.mxu0 0.0
      %1079 = vmatprep.subr.mxu0 0.0
      %1080 = vmatpush1.msra.mxu0 0.0
      %1081 = vmatprep.subr.mxu0 0.0
      %1082 = vmatpush1.msra.mxu0 0.0
      %1083 = vmatprep.subr.mxu0 0.0
      %1084 = vmatpush1.msra.mxu0 0.0
      %1085 = vmatprep.subr.mxu0 0.0
      %1086 = vmatpush1.msra.mxu0 0.0
      %1087 = vmatprep.subr.mxu0 0.0
      %1088 = vmatpush1.msra.mxu0 0.0
      %1089 = vmatprep.subr.mxu0 0.0
      %1090 = vmatpush1.msra.mxu0 0.0
      %1091 = vmatprep.subr.mxu0 0.0
      %1092 = vmatpush1.msra.mxu0 0.0
      %1093 = vmatprep.subr.mxu0 0.0
      %1094 = vmatpush1.msra.mxu0 %v1020
      %1095 = vmatprep.subr.mxu0 0.0
      %1096 = vmatpush2.msra.mxu0 0.0
      %1097 = vmatprep.subr.mxu0 0.0
      %1098 = vmatpush2.msra.mxu0 0.0
      %1099 = vmatprep.subr.mxu0 0.0
      %1100 = vmatpush2.msra.mxu0 0.0
      %1101 = vmatprep.subr.mxu0 0.0
      %1102 = vmatpush2.msra.mxu0 0.0
      %1103 = vmatprep.subr.mxu0 0.0
      %1104 = vmatpush2.msra.mxu0 0.0
      %1105 = vmatprep.subr.mxu0 0.0
      %1106 = vmatpush2.msra.mxu0 0.0
      %1107 = vmatprep.subr.mxu0 0.0
      %1108 = vmatpush2.msra.mxu0 0.0
      %1109 = vmatprep.subr.mxu0 0.0
      %1110 = vmatpush2.msra.mxu0 0.0
      %1111 = vmatprep.subr.mxu0 0.0
      %1112 = vmatpush2.msra.mxu0 0.0
      %1113 = vmatprep.subr.mxu0 0.0
      %1114 = vmatpush2.msra.mxu0 0.0
      %1115 = vmatprep.subr.mxu0 0.0
      %1116 = vmatpush2.msra.mxu0 0.0
      %1117 = vmatprep.subr.mxu0 0.0
      %1118 = vmatpush2.msra.mxu0 0.0
      %1119 = vmatprep.subr.mxu0 0.0
      %1120 = vmatpush2.msra.mxu0 0.0
      %1121 = vmatprep.subr.mxu0 0.0
      %1122 = vmatpush2.msra.mxu0 0.0
      %1123 = vmatprep.subr.mxu0 0.0
      %1124 = vmatpush2.msra.mxu0 0.0
      %1125 = vmatprep.subr.mxu0 0.0
      %1126 = vmatpush2.msra.mxu0 0.0
      %1127 = vmatprep.mubr.f32.mxu0 0.0
      %1128 = vmatmul.mubr.f32.gmra.mxu0 %v1022
      %v1129 = vpop.f32.mrf.mxu0
      %v1130 = vadd.f32 0.0, %v1129
      %v1131 = vpop.f32.mrf.mxu0
      %1132 = vmatprep.mubr.f32.mxu0 0.0
      %1133 = vmatmul.mubr.f32.gmra.mxu0 %v1025
      %v1134 = vpop.f32.mrf.mxu0
      %v1135 = vadd.f32 0.0, %v1134
      %v1136 = vpop.f32.mrf.mxu0
      %1137 = vmatprep.mubr.f32.mxu0 0.0
      %1138 = vmatmul.mubr.f32.gmra.mxu0 %v1028
      %v1139 = vpop.f32.mrf.mxu0
      %v1140 = vadd.f32 0.0, %v1139
      %v1141 = vpop.f32.mrf.mxu0
      %1142 = vmatprep.mubr.f32.mxu0 0.0
      %1143 = vmatmul.mubr.f32.gmra.mxu0 %v1031
      %v1144 = vpop.f32.mrf.mxu0
      %v1145 = vadd.f32 0.0, %v1144
      %v1146 = vpop.f32.mrf.mxu0
      %1147 = vmatprep.mubr.f32.mxu0 0.0
      %1148 = vmatmul.mubr.f32.gmra.mxu0 %v1034
      %v1149 = vpop.f32.mrf.mxu0
      %v1150 = vadd.f32 0.0, %v1149
      %v1151 = vpop.f32.mrf.mxu0
      %1152 = vmatprep.mubr.f32.mxu0 0.0
      %1153 = vmatmul.mubr.f32.gmra.mxu0 %v1037
      %v1154 = vpop.f32.mrf.mxu0
      %v1155 = vadd.f32 0.0, %v1154
      %v1156 = vpop.f32.mrf.mxu0
      %1157 = vmatprep.mubr.f32.mxu0 0.0
      %1158 = vmatmul.mubr.f32.gmra.mxu0 %v1040
      %v1159 = vpop.f32.mrf.mxu0
      %v1160 = vadd.f32 0.0, %v1159
      %v1161 = vpop.f32.mrf.mxu0
      %1162 = vmatprep.mubr.f32.mxu0 0.0
      %1163 = vmatmul.mubr.f32.gmra.mxu0 %v1043
      %v1164 = vpop.f32.mrf.mxu0
      %v1165 = vadd.f32 0.0, %v1164
      %v1166 = vpop.f32.mrf.mxu0
      %1167 = vmatprep.mubr.f32.mxu0 0.0
      %1168 = vmatmul.mubr.f32.gmra.mxu0 %v1046
      %v1169 = vpop.f32.mrf.mxu0
      %v1170 = vadd.f32 0.0, %v1169
      %v1171 = vpop.f32.mrf.mxu0
      %1172 = vmatprep.mubr.f32.mxu0 0.0
      %1173 = vmatmul.mubr.f32.gmra.mxu0 %v1049
      %v1174 = vpop.f32.mrf.mxu0
      %v1175 = vadd.f32 0.0, %v1174
      %v1176 = vpop.f32.mrf.mxu0
      %1177 = vmatprep.mubr.f32.mxu0 0.0
      %1178 = vmatmul.mubr.f32.gmra.mxu0 %v1052
      %v1179 = vpop.f32.mrf.mxu0
      %v1180 = vadd.f32 0.0, %v1179
      %v1181 = vpop.f32.mrf.mxu0
      %1182 = vmatprep.mubr.f32.mxu0 0.0
      %1183 = vmatmul.mubr.f32.gmra.mxu0 %v1055
      %v1184 = vpop.f32.mrf.mxu0
      %v1185 = vadd.f32 0.0, %v1184
      %v1186 = vpop.f32.mrf.mxu0
      %1187 = vmatprep.mubr.f32.mxu0 0.0
      %1188 = vmatmul.mubr.f32.gmra.mxu0 %v1058
      %v1189 = vpop.f32.mrf.mxu0
      %v1190 = vadd.f32 0.0, %v1189
      %v1191 = vpop.f32.mrf.mxu0
      %1192 = vmatprep.mubr.f32.mxu0 0.0
      %1193 = vmatmul.mubr.f32.gmra.mxu0 %v1061
      %v1194 = vpop.f32.mrf.mxu0
      %v1195 = vadd.f32 0.0, %v1194
      %v1196 = vpop.f32.mrf.mxu0
      %1197 = vdwg.mxu0
      %v1198 = vadd.f32 %v991, %v1130
      %v1199 = vadd.f32 %v992, %v1135
      %v1200 = vadd.f32 %v993, %v1140
      %v1201 = vadd.f32 %v994, %v1145
      %v1202 = vadd.f32 %v995, %v1150
      %v1203 = vadd.f32 %v996, %v1155
      %v1204 = vadd.f32 %v997, %v1160
      %v1205 = vadd.f32 %v998, %v1165
      %v1206 = vadd.f32 %v999, %v1170
      %v1207 = vadd.f32 %v1000, %v1175
      %v1208 = vadd.f32 %v1001, %v1180
      %v1209 = vadd.f32 %v1002, %v1185
      %v1210 = vadd.f32 %v1003, %v1190
      %v1211 = vadd.f32 %v1004, %v1195
      %1212 = vst [vmem:[#allocation3] sm:$0xff] %v1198
      %1213 = vst [vmem:[#allocation3 + $0x8] sm:$0xff] %v1199
      %1214 = vst [vmem:[#allocation3 + $0x10] sm:$0xff] %v1200
      %1215 = vst [vmem:[#allocation3 + $0x18] sm:$0xff] %v1201
      %1216 = vst [vmem:[#allocation3 + $0x20] sm:$0xff] %v1202
      %1217 = vst [vmem:[#allocation3 + $0x28] sm:$0xff] %v1203
      %1218 = vst [vmem:[#allocation3 + $0x30] sm:$0xff] %v1204
      %1219 = vst [vmem:[#allocation3 + $0x38] sm:$0xff] %v1205
      %1220 = vst [vmem:[#allocation3 + $0x40] sm:$0xff] %v1206
      %1221 = vst [vmem:[#allocation3 + $0x48] sm:$0xff] %v1207
      %1222 = vst [vmem:[#allocation3 + $0x50] sm:$0xff] %v1208
      %1223 = vst [vmem:[#allocation3 + $0x58] sm:$0xff] %v1209
      %1224 = vst [vmem:[#allocation3 + $0x60] sm:$0xff] %v1210
      %1225 = vst [vmem:[#allocation3 + $0x68] sm:$0xff] %v1211
      %v1226 = vld [vmem:[#allocation3] sm:$0xff]
      %v1227 = vld [vmem:[#allocation3 + $0x8] sm:$0xff]
      %v1228 = vld [vmem:[#allocation3 + $0x10] sm:$0xff]
      %v1229 = vld [vmem:[#allocation3 + $0x18] sm:$0xff]
      %v1230 = vld [vmem:[#allocation3 + $0x20] sm:$0xff]
      %v1231 = vld [vmem:[#allocation3 + $0x28] sm:$0xff]
      %v1232 = vld [vmem:[#allocation3 + $0x30] sm:$0xff]
      %v1233 = vld [vmem:[#allocation3 + $0x38] sm:$0xff]
      %v1234 = vld [vmem:[#allocation3 + $0x40] sm:$0xff]
      %v1235 = vld [vmem:[#allocation3 + $0x48] sm:$0xff]
      %v1236 = vld [vmem:[#allocation3 + $0x50] sm:$0xff]
      %v1237 = vld [vmem:[#allocation3 + $0x58] sm:$0xff]
      %v1238 = vld [vmem:[#allocation3 + $0x60] sm:$0xff]
      %v1239 = vld [vmem:[#allocation3 + $0x68] sm:$0xff]
      %v1240 = vld [vmem:[#allocation2 + $0xa] sm:$0xff]
      %v1241 = vld [vmem:[#allocation2 + $0x12] sm:$0xff]
      %v1242 = vld [vmem:[#allocation2 + $0x1a] sm:$0xff]
      %v1243 = vld [vmem:[#allocation2 + $0x22] sm:$0xff]
      %v1244 = vld [vmem:[#allocation2 + $0x2a] sm:$0xff]
      %v1245 = vld [vmem:[#allocation2 + $0x32] sm:$0xff]
      %v1246 = vld [vmem:[#allocation2 + $0x3a] sm:$0xff]
      %v1247 = vld [vmem:[#allocation2 + $0x42] sm:$0xff]
      %v1248 = vld [vmem:[#allocation2 + $0x4a] sm:$0xff]
      %v1249 = vld [vmem:[#allocation2 + $0x52] sm:$0xff]
      %v1250 = vld [vmem:[#allocation2 + $0x5a] sm:$0xff]
      %v1251 = vld [vmem:[#allocation2 + $0x62] sm:$0xff]
      %v1252 = vld [vmem:[#allocation2 + $0x6a] sm:$0xff]
      %v1253 = vld [vmem:[#allocation2 + $0x72] sm:$0xff]
      %s1254 = scalar_lea.vmem %s1, 24
      %v1255 = vld [vmem:[%s1254] sm:$0xff]
      %v1257 = vsel %vm489, %v1240, 0
      %v1260 = vsel %vm489, %v1241, 0
      %v1263 = vsel %vm489, %v1242, 0
      %v1266 = vsel %vm489, %v1243, 0
      %v1269 = vsel %vm489, %v1244, 0
      %v1272 = vsel %vm489, %v1245, 0
      %v1275 = vsel %vm489, %v1246, 0
      %v1278 = vsel %vm489, %v1247, 0
      %v1281 = vsel %vm489, %v1248, 0
      %v1284 = vsel %vm489, %v1249, 0
      %v1287 = vsel %vm489, %v1250, 0
      %v1290 = vsel %vm489, %v1251, 0
      %v1293 = vsel %vm489, %v1252, 0
      %v1296 = vsel %vm489, %v1253, 0
      %1298 = vmatprep.subr.mxu0 0.0
      %1299 = vmatpush1.msra.mxu0 0.0
      %1300 = vmatprep.subr.mxu0 0.0
      %1301 = vmatpush1.msra.mxu0 0.0
      %1302 = vmatprep.subr.mxu0 0.0
      %1303 = vmatpush1.msra.mxu0 0.0
      %1304 = vmatprep.subr.mxu0 0.0
      %1305 = vmatpush1.msra.mxu0 0.0
      %1306 = vmatprep.subr.mxu0 0.0
      %1307 = vmatpush1.msra.mxu0 0.0
      %1308 = vmatprep.subr.mxu0 0.0
      %1309 = vmatpush1.msra.mxu0 0.0
      %1310 = vmatprep.subr.mxu0 0.0
      %1311 = vmatpush1.msra.mxu0 0.0
      %1312 = vmatprep.subr.mxu0 0.0
      %1313 = vmatpush1.msra.mxu0 0.0
      %1314 = vmatprep.subr.mxu0 0.0
      %1315 = vmatpush1.msra.mxu0 0.0
      %1316 = vmatprep.subr.mxu0 0.0
      %1317 = vmatpush1.msra.mxu0 0.0
      %1318 = vmatprep.subr.mxu0 0.0
      %1319 = vmatpush1.msra.mxu0 0.0
      %1320 = vmatprep.subr.mxu0 0.0
      %1321 = vmatpush1.msra.mxu0 0.0
      %1322 = vmatprep.subr.mxu0 0.0
      %1323 = vmatpush1.msra.mxu0 0.0
      %1324 = vmatprep.subr.mxu0 0.0
      %1325 = vmatpush1.msra.mxu0 0.0
      %1326 = vmatprep.subr.mxu0 0.0
      %1327 = vmatpush1.msra.mxu0 0.0
      %1328 = vmatprep.subr.mxu0 0.0
      %1329 = vmatpush1.msra.mxu0 %v1255
      %1330 = vmatprep.subr.mxu0 0.0
      %1331 = vmatpush2.msra.mxu0 0.0
      %1332 = vmatprep.subr.mxu0 0.0
      %1333 = vmatpush2.msra.mxu0 0.0
      %1334 = vmatprep.subr.mxu0 0.0
      %1335 = vmatpush2.msra.mxu0 0.0
      %1336 = vmatprep.subr.mxu0 0.0
      %1337 = vmatpush2.msra.mxu0 0.0
      %1338 = vmatprep.subr.mxu0 0.0
      %1339 = vmatpush2.msra.mxu0 0.0
      %1340 = vmatprep.subr.mxu0 0.0
      %1341 = vmatpush2.msra.mxu0 0.0
      %1342 = vmatprep.subr.mxu0 0.0
      %1343 = vmatpush2.msra.mxu0 0.0
      %1344 = vmatprep.subr.mxu0 0.0
      %1345 = vmatpush2.msra.mxu0 0.0
      %1346 = vmatprep.subr.mxu0 0.0
      %1347 = vmatpush2.msra.mxu0 0.0
      %1348 = vmatprep.subr.mxu0 0.0
      %1349 = vmatpush2.msra.mxu0 0.0
      %1350 = vmatprep.subr.mxu0 0.0
      %1351 = vmatpush2.msra.mxu0 0.0
      %1352 = vmatprep.subr.mxu0 0.0
      %1353 = vmatpush2.msra.mxu0 0.0
      %1354 = vmatprep.subr.mxu0 0.0
      %1355 = vmatpush2.msra.mxu0 0.0
      %1356 = vmatprep.subr.mxu0 0.0
      %1357 = vmatpush2.msra.mxu0 0.0
      %1358 = vmatprep.subr.mxu0 0.0
      %1359 = vmatpush2.msra.mxu0 0.0
      %1360 = vmatprep.subr.mxu0 0.0
      %1361 = vmatpush2.msra.mxu0 0.0
      %1362 = vmatprep.mubr.f32.mxu0 0.0
      %1363 = vmatmul.mubr.f32.gmra.mxu0 %v1257
      %v1364 = vpop.f32.mrf.mxu0
      %v1365 = vadd.f32 0.0, %v1364
      %v1366 = vpop.f32.mrf.mxu0
      %1367 = vmatprep.mubr.f32.mxu0 0.0
      %1368 = vmatmul.mubr.f32.gmra.mxu0 %v1260
      %v1369 = vpop.f32.mrf.mxu0
      %v1370 = vadd.f32 0.0, %v1369
      %v1371 = vpop.f32.mrf.mxu0
      %1372 = vmatprep.mubr.f32.mxu0 0.0
      %1373 = vmatmul.mubr.f32.gmra.mxu0 %v1263
      %v1374 = vpop.f32.mrf.mxu0
      %v1375 = vadd.f32 0.0, %v1374
      %v1376 = vpop.f32.mrf.mxu0
      %1377 = vmatprep.mubr.f32.mxu0 0.0
      %1378 = vmatmul.mubr.f32.gmra.mxu0 %v1266
      %v1379 = vpop.f32.mrf.mxu0
      %v1380 = vadd.f32 0.0, %v1379
      %v1381 = vpop.f32.mrf.mxu0
      %1382 = vmatprep.mubr.f32.mxu0 0.0
      %1383 = vmatmul.mubr.f32.gmra.mxu0 %v1269
      %v1384 = vpop.f32.mrf.mxu0
      %v1385 = vadd.f32 0.0, %v1384
      %v1386 = vpop.f32.mrf.mxu0
      %1387 = vmatprep.mubr.f32.mxu0 0.0
      %1388 = vmatmul.mubr.f32.gmra.mxu0 %v1272
      %v1389 = vpop.f32.mrf.mxu0
      %v1390 = vadd.f32 0.0, %v1389
      %v1391 = vpop.f32.mrf.mxu0
      %1392 = vmatprep.mubr.f32.mxu0 0.0
      %1393 = vmatmul.mubr.f32.gmra.mxu0 %v1275
      %v1394 = vpop.f32.mrf.mxu0
      %v1395 = vadd.f32 0.0, %v1394
      %v1396 = vpop.f32.mrf.mxu0
      %1397 = vmatprep.mubr.f32.mxu0 0.0
      %1398 = vmatmul.mubr.f32.gmra.mxu0 %v1278
      %v1399 = vpop.f32.mrf.mxu0
      %v1400 = vadd.f32 0.0, %v1399
      %v1401 = vpop.f32.mrf.mxu0
      %1402 = vmatprep.mubr.f32.mxu0 0.0
      %1403 = vmatmul.mubr.f32.gmra.mxu0 %v1281
      %v1404 = vpop.f32.mrf.mxu0
      %v1405 = vadd.f32 0.0, %v1404
      %v1406 = vpop.f32.mrf.mxu0
      %1407 = vmatprep.mubr.f32.mxu0 0.0
      %1408 = vmatmul.mubr.f32.gmra.mxu0 %v1284
      %v1409 = vpop.f32.mrf.mxu0
      %v1410 = vadd.f32 0.0, %v1409
      %v1411 = vpop.f32.mrf.mxu0
      %1412 = vmatprep.mubr.f32.mxu0 0.0
      %1413 = vmatmul.mubr.f32.gmra.mxu0 %v1287
      %v1414 = vpop.f32.mrf.mxu0
      %v1415 = vadd.f32 0.0, %v1414
      %v1416 = vpop.f32.mrf.mxu0
      %1417 = vmatprep.mubr.f32.mxu0 0.0
      %1418 = vmatmul.mubr.f32.gmra.mxu0 %v1290
      %v1419 = vpop.f32.mrf.mxu0
      %v1420 = vadd.f32 0.0, %v1419
      %v1421 = vpop.f32.mrf.mxu0
      %1422 = vmatprep.mubr.f32.mxu0 0.0
      %1423 = vmatmul.mubr.f32.gmra.mxu0 %v1293
      %v1424 = vpop.f32.mrf.mxu0
      %v1425 = vadd.f32 0.0, %v1424
      %v1426 = vpop.f32.mrf.mxu0
      %1427 = vmatprep.mubr.f32.mxu0 0.0
      %1428 = vmatmul.mubr.f32.gmra.mxu0 %v1296
      %v1429 = vpop.f32.mrf.mxu0
      %v1430 = vadd.f32 0.0, %v1429
      %v1431 = vpop.f32.mrf.mxu0
      %1432 = vdwg.mxu0
      %v1433 = vadd.f32 %v1226, %v1365
      %v1434 = vadd.f32 %v1227, %v1370
      %v1435 = vadd.f32 %v1228, %v1375
      %v1436 = vadd.f32 %v1229, %v1380
      %v1437 = vadd.f32 %v1230, %v1385
      %v1438 = vadd.f32 %v1231, %v1390
      %v1439 = vadd.f32 %v1232, %v1395
      %v1440 = vadd.f32 %v1233, %v1400
      %v1441 = vadd.f32 %v1234, %v1405
      %v1442 = vadd.f32 %v1235, %v1410
      %v1443 = vadd.f32 %v1236, %v1415
      %v1444 = vadd.f32 %v1237, %v1420
      %v1445 = vadd.f32 %v1238, %v1425
      %v1446 = vadd.f32 %v1239, %v1430
      %1447 = vst [vmem:[#allocation3] sm:$0xff] %v1433
      %1448 = vst [vmem:[#allocation3 + $0x8] sm:$0xff] %v1434
      %1449 = vst [vmem:[#allocation3 + $0x10] sm:$0xff] %v1435
      %1450 = vst [vmem:[#allocation3 + $0x18] sm:$0xff] %v1436
      %1451 = vst [vmem:[#allocation3 + $0x20] sm:$0xff] %v1437
      %1452 = vst [vmem:[#allocation3 + $0x28] sm:$0xff] %v1438
      %1453 = vst [vmem:[#allocation3 + $0x30] sm:$0xff] %v1439
      %1454 = vst [vmem:[#allocation3 + $0x38] sm:$0xff] %v1440
      %1455 = vst [vmem:[#allocation3 + $0x40] sm:$0xff] %v1441
      %1456 = vst [vmem:[#allocation3 + $0x48] sm:$0xff] %v1442
      %1457 = vst [vmem:[#allocation3 + $0x50] sm:$0xff] %v1443
      %1458 = vst [vmem:[#allocation3 + $0x58] sm:$0xff] %v1444
      %1459 = vst [vmem:[#allocation3 + $0x60] sm:$0xff] %v1445
      %1460 = vst [vmem:[#allocation3 + $0x68] sm:$0xff] %v1446
      %v1461 = vld [vmem:[#allocation3] sm:$0xff]
      %v1462 = vld [vmem:[#allocation3 + $0x8] sm:$0xff]
      %v1463 = vld [vmem:[#allocation3 + $0x10] sm:$0xff]
      %v1464 = vld [vmem:[#allocation3 + $0x18] sm:$0xff]
      %v1465 = vld [vmem:[#allocation3 + $0x20] sm:$0xff]
      %v1466 = vld [vmem:[#allocation3 + $0x28] sm:$0xff]
      %v1467 = vld [vmem:[#allocation3 + $0x30] sm:$0xff]
      %v1468 = vld [vmem:[#allocation3 + $0x38] sm:$0xff]
      %v1469 = vld [vmem:[#allocation3 + $0x40] sm:$0xff]
      %v1470 = vld [vmem:[#allocation3 + $0x48] sm:$0xff]
      %v1471 = vld [vmem:[#allocation3 + $0x50] sm:$0xff]
      %v1472 = vld [vmem:[#allocation3 + $0x58] sm:$0xff]
      %v1473 = vld [vmem:[#allocation3 + $0x60] sm:$0xff]
      %v1474 = vld [vmem:[#allocation3 + $0x68] sm:$0xff]
      %v1475 = vld [vmem:[#allocation2 + $0xb] sm:$0xff]
      %v1476 = vld [vmem:[#allocation2 + $0x13] sm:$0xff]
      %v1477 = vld [vmem:[#allocation2 + $0x1b] sm:$0xff]
      %v1478 = vld [vmem:[#allocation2 + $0x23] sm:$0xff]
      %v1479 = vld [vmem:[#allocation2 + $0x2b] sm:$0xff]
      %v1480 = vld [vmem:[#allocation2 + $0x33] sm:$0xff]
      %v1481 = vld [vmem:[#allocation2 + $0x3b] sm:$0xff]
      %v1482 = vld [vmem:[#allocation2 + $0x43] sm:$0xff]
      %v1483 = vld [vmem:[#allocation2 + $0x4b] sm:$0xff]
      %v1484 = vld [vmem:[#allocation2 + $0x53] sm:$0xff]
      %v1485 = vld [vmem:[#allocation2 + $0x5b] sm:$0xff]
      %v1486 = vld [vmem:[#allocation2 + $0x63] sm:$0xff]
      %v1487 = vld [vmem:[#allocation2 + $0x6b] sm:$0xff]
      %v1488 = vld [vmem:[#allocation2 + $0x73] sm:$0xff]
      %s1489 = scalar_lea.vmem %s1, 32
      %v1490 = vld [vmem:[%s1489] sm:$0xff]
      %v1492 = vsel %vm489, %v1475, 0
      %v1495 = vsel %vm489, %v1476, 0
      %v1498 = vsel %vm489, %v1477, 0
      %v1501 = vsel %vm489, %v1478, 0
      %v1504 = vsel %vm489, %v1479, 0
      %v1507 = vsel %vm489, %v1480, 0
      %v1510 = vsel %vm489, %v1481, 0
      %v1513 = vsel %vm489, %v1482, 0
      %v1516 = vsel %vm489, %v1483, 0
      %v1519 = vsel %vm489, %v1484, 0
      %v1522 = vsel %vm489, %v1485, 0
      %v1525 = vsel %vm489, %v1486, 0
      %v1528 = vsel %vm489, %v1487, 0
      %v1531 = vsel %vm489, %v1488, 0
      %1533 = vmatprep.subr.mxu0 0.0
      %1534 = vmatpush1.msra.mxu0 0.0
      %1535 = vmatprep.subr.mxu0 0.0
      %1536 = vmatpush1.msra.mxu0 0.0
      %1537 = vmatprep.subr.mxu0 0.0
      %1538 = vmatpush1.msra.mxu0 0.0
      %1539 = vmatprep.subr.mxu0 0.0
      %1540 = vmatpush1.msra.mxu0 0.0
      %1541 = vmatprep.subr.mxu0 0.0
      %1542 = vmatpush1.msra.mxu0 0.0
      %1543 = vmatprep.subr.mxu0 0.0
      %1544 = vmatpush1.msra.mxu0 0.0
      %1545 = vmatprep.subr.mxu0 0.0
      %1546 = vmatpush1.msra.mxu0 0.0
      %1547 = vmatprep.subr.mxu0 0.0
      %1548 = vmatpush1.msra.mxu0 0.0
      %1549 = vmatprep.subr.mxu0 0.0
      %1550 = vmatpush1.msra.mxu0 0.0
      %1551 = vmatprep.subr.mxu0 0.0
      %1552 = vmatpush1.msra.mxu0 0.0
      %1553 = vmatprep.subr.mxu0 0.0
      %1554 = vmatpush1.msra.mxu0 0.0
      %1555 = vmatprep.subr.mxu0 0.0
      %1556 = vmatpush1.msra.mxu0 0.0
      %1557 = vmatprep.subr.mxu0 0.0
      %1558 = vmatpush1.msra.mxu0 0.0
      %1559 = vmatprep.subr.mxu0 0.0
      %1560 = vmatpush1.msra.mxu0 0.0
      %1561 = vmatprep.subr.mxu0 0.0
      %1562 = vmatpush1.msra.mxu0 0.0
      %1563 = vmatprep.subr.mxu0 0.0
      %1564 = vmatpush1.msra.mxu0 %v1490
      %1565 = vmatprep.subr.mxu0 0.0
      %1566 = vmatpush2.msra.mxu0 0.0
      %1567 = vmatprep.subr.mxu0 0.0
      %1568 = vmatpush2.msra.mxu0 0.0
      %1569 = vmatprep.subr.mxu0 0.0
      %1570 = vmatpush2.msra.mxu0 0.0
      %1571 = vmatprep.subr.mxu0 0.0
      %1572 = vmatpush2.msra.mxu0 0.0
      %1573 = vmatprep.subr.mxu0 0.0
      %1574 = vmatpush2.msra.mxu0 0.0
      %1575 = vmatprep.subr.mxu0 0.0
      %1576 = vmatpush2.msra.mxu0 0.0
      %1577 = vmatprep.subr.mxu0 0.0
      %1578 = vmatpush2.msra.mxu0 0.0
      %1579 = vmatprep.subr.mxu0 0.0
      %1580 = vmatpush2.msra.mxu0 0.0
      %1581 = vmatprep.subr.mxu0 0.0
      %1582 = vmatpush2.msra.mxu0 0.0
      %1583 = vmatprep.subr.mxu0 0.0
      %1584 = vmatpush2.msra.mxu0 0.0
      %1585 = vmatprep.subr.mxu0 0.0
      %1586 = vmatpush2.msra.mxu0 0.0
      %1587 = vmatprep.subr.mxu0 0.0
      %1588 = vmatpush2.msra.mxu0 0.0
      %1589 = vmatprep.subr.mxu0 0.0
      %1590 = vmatpush2.msra.mxu0 0.0
      %1591 = vmatprep.subr.mxu0 0.0
      %1592 = vmatpush2.msra.mxu0 0.0
      %1593 = vmatprep.subr.mxu0 0.0
      %1594 = vmatpush2.msra.mxu0 0.0
      %1595 = vmatprep.subr.mxu0 0.0
      %1596 = vmatpush2.msra.mxu0 0.0
      %1597 = vmatprep.mubr.f32.mxu0 0.0
      %1598 = vmatmul.mubr.f32.gmra.mxu0 %v1492
      %v1599 = vpop.f32.mrf.mxu0
      %v1600 = vadd.f32 0.0, %v1599
      %v1601 = vpop.f32.mrf.mxu0
      %1602 = vmatprep.mubr.f32.mxu0 0.0
      %1603 = vmatmul.mubr.f32.gmra.mxu0 %v1495
      %v1604 = vpop.f32.mrf.mxu0
      %v1605 = vadd.f32 0.0, %v1604
      %v1606 = vpop.f32.mrf.mxu0
      %1607 = vmatprep.mubr.f32.mxu0 0.0
      %1608 = vmatmul.mubr.f32.gmra.mxu0 %v1498
      %v1609 = vpop.f32.mrf.mxu0
      %v1610 = vadd.f32 0.0, %v1609
      %v1611 = vpop.f32.mrf.mxu0
      %1612 = vmatprep.mubr.f32.mxu0 0.0
      %1613 = vmatmul.mubr.f32.gmra.mxu0 %v1501
      %v1614 = vpop.f32.mrf.mxu0
      %v1615 = vadd.f32 0.0, %v1614
      %v1616 = vpop.f32.mrf.mxu0
      %1617 = vmatprep.mubr.f32.mxu0 0.0
      %1618 = vmatmul.mubr.f32.gmra.mxu0 %v1504
      %v1619 = vpop.f32.mrf.mxu0
      %v1620 = vadd.f32 0.0, %v1619
      %v1621 = vpop.f32.mrf.mxu0
      %1622 = vmatprep.mubr.f32.mxu0 0.0
      %1623 = vmatmul.mubr.f32.gmra.mxu0 %v1507
      %v1624 = vpop.f32.mrf.mxu0
      %v1625 = vadd.f32 0.0, %v1624
      %v1626 = vpop.f32.mrf.mxu0
      %1627 = vmatprep.mubr.f32.mxu0 0.0
      %1628 = vmatmul.mubr.f32.gmra.mxu0 %v1510
      %v1629 = vpop.f32.mrf.mxu0
      %v1630 = vadd.f32 0.0, %v1629
      %v1631 = vpop.f32.mrf.mxu0
      %1632 = vmatprep.mubr.f32.mxu0 0.0
      %1633 = vmatmul.mubr.f32.gmra.mxu0 %v1513
      %v1634 = vpop.f32.mrf.mxu0
      %v1635 = vadd.f32 0.0, %v1634
      %v1636 = vpop.f32.mrf.mxu0
      %1637 = vmatprep.mubr.f32.mxu0 0.0
      %1638 = vmatmul.mubr.f32.gmra.mxu0 %v1516
      %v1639 = vpop.f32.mrf.mxu0
      %v1640 = vadd.f32 0.0, %v1639
      %v1641 = vpop.f32.mrf.mxu0
      %1642 = vmatprep.mubr.f32.mxu0 0.0
      %1643 = vmatmul.mubr.f32.gmra.mxu0 %v1519
      %v1644 = vpop.f32.mrf.mxu0
      %v1645 = vadd.f32 0.0, %v1644
      %v1646 = vpop.f32.mrf.mxu0
      %1647 = vmatprep.mubr.f32.mxu0 0.0
      %1648 = vmatmul.mubr.f32.gmra.mxu0 %v1522
      %v1649 = vpop.f32.mrf.mxu0
      %v1650 = vadd.f32 0.0, %v1649
      %v1651 = vpop.f32.mrf.mxu0
      %1652 = vmatprep.mubr.f32.mxu0 0.0
      %1653 = vmatmul.mubr.f32.gmra.mxu0 %v1525
      %v1654 = vpop.f32.mrf.mxu0
      %v1655 = vadd.f32 0.0, %v1654
      %v1656 = vpop.f32.mrf.mxu0
      %1657 = vmatprep.mubr.f32.mxu0 0.0
      %1658 = vmatmul.mubr.f32.gmra.mxu0 %v1528
      %v1659 = vpop.f32.mrf.mxu0
      %v1660 = vadd.f32 0.0, %v1659
      %v1661 = vpop.f32.mrf.mxu0
      %1662 = vmatprep.mubr.f32.mxu0 0.0
      %1663 = vmatmul.mubr.f32.gmra.mxu0 %v1531
      %v1664 = vpop.f32.mrf.mxu0
      %v1665 = vadd.f32 0.0, %v1664
      %v1666 = vpop.f32.mrf.mxu0
      %1667 = vdwg.mxu0
      %v1668 = vadd.f32 %v1461, %v1600
      %v1669 = vadd.f32 %v1462, %v1605
      %v1670 = vadd.f32 %v1463, %v1610
      %v1671 = vadd.f32 %v1464, %v1615
      %v1672 = vadd.f32 %v1465, %v1620
      %v1673 = vadd.f32 %v1466, %v1625
      %v1674 = vadd.f32 %v1467, %v1630
      %v1675 = vadd.f32 %v1468, %v1635
      %v1676 = vadd.f32 %v1469, %v1640
      %v1677 = vadd.f32 %v1470, %v1645
      %v1678 = vadd.f32 %v1471, %v1650
      %v1679 = vadd.f32 %v1472, %v1655
      %v1680 = vadd.f32 %v1473, %v1660
      %v1681 = vadd.f32 %v1474, %v1665
      %1682 = vst [vmem:[#allocation3] sm:$0xff] %v1668
      %1683 = vst [vmem:[#allocation3 + $0x8] sm:$0xff] %v1669
      %1684 = vst [vmem:[#allocation3 + $0x10] sm:$0xff] %v1670
      %1685 = vst [vmem:[#allocation3 + $0x18] sm:$0xff] %v1671
      %1686 = vst [vmem:[#allocation3 + $0x20] sm:$0xff] %v1672
      %1687 = vst [vmem:[#allocation3 + $0x28] sm:$0xff] %v1673
      %1688 = vst [vmem:[#allocation3 + $0x30] sm:$0xff] %v1674
      %1689 = vst [vmem:[#allocation3 + $0x38] sm:$0xff] %v1675
      %1690 = vst [vmem:[#allocation3 + $0x40] sm:$0xff] %v1676
      %1691 = vst [vmem:[#allocation3 + $0x48] sm:$0xff] %v1677
      %1692 = vst [vmem:[#allocation3 + $0x50] sm:$0xff] %v1678
      %1693 = vst [vmem:[#allocation3 + $0x58] sm:$0xff] %v1679
      %1694 = vst [vmem:[#allocation3 + $0x60] sm:$0xff] %v1680
      %1695 = vst [vmem:[#allocation3 + $0x68] sm:$0xff] %v1681
      %v1696 = vld [vmem:[#allocation3] sm:$0xff]
      %v1697 = vld [vmem:[#allocation3 + $0x8] sm:$0xff]
      %v1698 = vld [vmem:[#allocation3 + $0x10] sm:$0xff]
      %v1699 = vld [vmem:[#allocation3 + $0x18] sm:$0xff]
      %v1700 = vld [vmem:[#allocation3 + $0x20] sm:$0xff]
      %v1701 = vld [vmem:[#allocation3 + $0x28] sm:$0xff]
      %v1702 = vld [vmem:[#allocation3 + $0x30] sm:$0xff]
      %v1703 = vld [vmem:[#allocation3 + $0x38] sm:$0xff]
      %v1704 = vld [vmem:[#allocation3 + $0x40] sm:$0xff]
      %v1705 = vld [vmem:[#allocation3 + $0x48] sm:$0xff]
      %v1706 = vld [vmem:[#allocation3 + $0x50] sm:$0xff]
      %v1707 = vld [vmem:[#allocation3 + $0x58] sm:$0xff]
      %v1708 = vld [vmem:[#allocation3 + $0x60] sm:$0xff]
      %v1709 = vld [vmem:[#allocation3 + $0x68] sm:$0xff]
      %v1710 = vld [vmem:[#allocation2 + $0xc] sm:$0xff]
      %v1711 = vld [vmem:[#allocation2 + $0x14] sm:$0xff]
      %v1712 = vld [vmem:[#allocation2 + $0x1c] sm:$0xff]
      %v1713 = vld [vmem:[#allocation2 + $0x24] sm:$0xff]
      %v1714 = vld [vmem:[#allocation2 + $0x2c] sm:$0xff]
      %v1715 = vld [vmem:[#allocation2 + $0x34] sm:$0xff]
      %v1716 = vld [vmem:[#allocation2 + $0x3c] sm:$0xff]
      %v1717 = vld [vmem:[#allocation2 + $0x44] sm:$0xff]
      %v1718 = vld [vmem:[#allocation2 + $0x4c] sm:$0xff]
      %v1719 = vld [vmem:[#allocation2 + $0x54] sm:$0xff]
      %v1720 = vld [vmem:[#allocation2 + $0x5c] sm:$0xff]
      %v1721 = vld [vmem:[#allocation2 + $0x64] sm:$0xff]
      %v1722 = vld [vmem:[#allocation2 + $0x6c] sm:$0xff]
      %v1723 = vld [vmem:[#allocation2 + $0x74] sm:$0xff]
      %s1724 = scalar_lea.vmem %s1, 40
      %v1725 = vld [vmem:[%s1724] sm:$0xff]
      %v1727 = vsel %vm489, %v1710, 0
      %v1730 = vsel %vm489, %v1711, 0
      %v1733 = vsel %vm489, %v1712, 0
      %v1736 = vsel %vm489, %v1713, 0
      %v1739 = vsel %vm489, %v1714, 0
      %v1742 = vsel %vm489, %v1715, 0
      %v1745 = vsel %vm489, %v1716, 0
      %v1748 = vsel %vm489, %v1717, 0
      %v1751 = vsel %vm489, %v1718, 0
      %v1754 = vsel %vm489, %v1719, 0
      %v1757 = vsel %vm489, %v1720, 0
      %v1760 = vsel %vm489, %v1721, 0
      %v1763 = vsel %vm489, %v1722, 0
      %v1766 = vsel %vm489, %v1723, 0
      %1768 = vmatprep.subr.mxu0 0.0
      %1769 = vmatpush1.msra.mxu0 0.0
      %1770 = vmatprep.subr.mxu0 0.0
      %1771 = vmatpush1.msra.mxu0 0.0
      %1772 = vmatprep.subr.mxu0 0.0
      %1773 = vmatpush1.msra.mxu0 0.0
      %1774 = vmatprep.subr.mxu0 0.0
      %1775 = vmatpush1.msra.mxu0 0.0
      %1776 = vmatprep.subr.mxu0 0.0
      %1777 = vmatpush1.msra.mxu0 0.0
      %1778 = vmatprep.subr.mxu0 0.0
      %1779 = vmatpush1.msra.mxu0 0.0
      %1780 = vmatprep.subr.mxu0 0.0
      %1781 = vmatpush1.msra.mxu0 0.0
      %1782 = vmatprep.subr.mxu0 0.0
      %1783 = vmatpush1.msra.mxu0 0.0
      %1784 = vmatprep.subr.mxu0 0.0
      %1785 = vmatpush1.msra.mxu0 0.0
      %1786 = vmatprep.subr.mxu0 0.0
      %1787 = vmatpush1.msra.mxu0 0.0
      %1788 = vmatprep.subr.mxu0 0.0
      %1789 = vmatpush1.msra.mxu0 0.0
      %1790 = vmatprep.subr.mxu0 0.0
      %1791 = vmatpush1.msra.mxu0 0.0
      %1792 = vmatprep.subr.mxu0 0.0
      %1793 = vmatpush1.msra.mxu0 0.0
      %1794 = vmatprep.subr.mxu0 0.0
      %1795 = vmatpush1.msra.mxu0 0.0
      %1796 = vmatprep.subr.mxu0 0.0
      %1797 = vmatpush1.msra.mxu0 0.0
      %1798 = vmatprep.subr.mxu0 0.0
      %1799 = vmatpush1.msra.mxu0 %v1725
      %1800 = vmatprep.subr.mxu0 0.0
      %1801 = vmatpush2.msra.mxu0 0.0
      %1802 = vmatprep.subr.mxu0 0.0
      %1803 = vmatpush2.msra.mxu0 0.0
      %1804 = vmatprep.subr.mxu0 0.0
      %1805 = vmatpush2.msra.mxu0 0.0
      %1806 = vmatprep.subr.mxu0 0.0
      %1807 = vmatpush2.msra.mxu0 0.0
      %1808 = vmatprep.subr.mxu0 0.0
      %1809 = vmatpush2.msra.mxu0 0.0
      %1810 = vmatprep.subr.mxu0 0.0
      %1811 = vmatpush2.msra.mxu0 0.0
      %1812 = vmatprep.subr.mxu0 0.0
      %1813 = vmatpush2.msra.mxu0 0.0
      %1814 = vmatprep.subr.mxu0 0.0
      %1815 = vmatpush2.msra.mxu0 0.0
      %1816 = vmatprep.subr.mxu0 0.0
      %1817 = vmatpush2.msra.mxu0 0.0
      %1818 = vmatprep.subr.mxu0 0.0
      %1819 = vmatpush2.msra.mxu0 0.0
      %1820 = vmatprep.subr.mxu0 0.0
      %1821 = vmatpush2.msra.mxu0 0.0
      %1822 = vmatprep.subr.mxu0 0.0
      %1823 = vmatpush2.msra.mxu0 0.0
      %1824 = vmatprep.subr.mxu0 0.0
      %1825 = vmatpush2.msra.mxu0 0.0
      %1826 = vmatprep.subr.mxu0 0.0
      %1827 = vmatpush2.msra.mxu0 0.0
      %1828 = vmatprep.subr.mxu0 0.0
      %1829 = vmatpush2.msra.mxu0 0.0
      %1830 = vmatprep.subr.mxu0 0.0
      %1831 = vmatpush2.msra.mxu0 0.0
      %1832 = vmatprep.mubr.f32.mxu0 0.0
      %1833 = vmatmul.mubr.f32.gmra.mxu0 %v1727
      %v1834 = vpop.f32.mrf.mxu0
      %v1835 = vadd.f32 0.0, %v1834
      %v1836 = vpop.f32.mrf.mxu0
      %1837 = vmatprep.mubr.f32.mxu0 0.0
      %1838 = vmatmul.mubr.f32.gmra.mxu0 %v1730
      %v1839 = vpop.f32.mrf.mxu0
      %v1840 = vadd.f32 0.0, %v1839
      %v1841 = vpop.f32.mrf.mxu0
      %1842 = vmatprep.mubr.f32.mxu0 0.0
      %1843 = vmatmul.mubr.f32.gmra.mxu0 %v1733
      %v1844 = vpop.f32.mrf.mxu0
      %v1845 = vadd.f32 0.0, %v1844
      %v1846 = vpop.f32.mrf.mxu0
      %1847 = vmatprep.mubr.f32.mxu0 0.0
      %1848 = vmatmul.mubr.f32.gmra.mxu0 %v1736
      %v1849 = vpop.f32.mrf.mxu0
      %v1850 = vadd.f32 0.0, %v1849
      %v1851 = vpop.f32.mrf.mxu0
      %1852 = vmatprep.mubr.f32.mxu0 0.0
      %1853 = vmatmul.mubr.f32.gmra.mxu0 %v1739
      %v1854 = vpop.f32.mrf.mxu0
      %v1855 = vadd.f32 0.0, %v1854
      %v1856 = vpop.f32.mrf.mxu0
      %1857 = vmatprep.mubr.f32.mxu0 0.0
      %1858 = vmatmul.mubr.f32.gmra.mxu0 %v1742
      %v1859 = vpop.f32.mrf.mxu0
      %v1860 = vadd.f32 0.0, %v1859
      %v1861 = vpop.f32.mrf.mxu0
      %1862 = vmatprep.mubr.f32.mxu0 0.0
      %1863 = vmatmul.mubr.f32.gmra.mxu0 %v1745
      %v1864 = vpop.f32.mrf.mxu0
      %v1865 = vadd.f32 0.0, %v1864
      %v1866 = vpop.f32.mrf.mxu0
      %1867 = vmatprep.mubr.f32.mxu0 0.0
      %1868 = vmatmul.mubr.f32.gmra.mxu0 %v1748
      %v1869 = vpop.f32.mrf.mxu0
      %v1870 = vadd.f32 0.0, %v1869
      %v1871 = vpop.f32.mrf.mxu0
      %1872 = vmatprep.mubr.f32.mxu0 0.0
      %1873 = vmatmul.mubr.f32.gmra.mxu0 %v1751
      %v1874 = vpop.f32.mrf.mxu0
      %v1875 = vadd.f32 0.0, %v1874
      %v1876 = vpop.f32.mrf.mxu0
      %1877 = vmatprep.mubr.f32.mxu0 0.0
      %1878 = vmatmul.mubr.f32.gmra.mxu0 %v1754
      %v1879 = vpop.f32.mrf.mxu0
      %v1880 = vadd.f32 0.0, %v1879
      %v1881 = vpop.f32.mrf.mxu0
      %1882 = vmatprep.mubr.f32.mxu0 0.0
      %1883 = vmatmul.mubr.f32.gmra.mxu0 %v1757
      %v1884 = vpop.f32.mrf.mxu0
      %v1885 = vadd.f32 0.0, %v1884
      %v1886 = vpop.f32.mrf.mxu0
      %1887 = vmatprep.mubr.f32.mxu0 0.0
      %1888 = vmatmul.mubr.f32.gmra.mxu0 %v1760
      %v1889 = vpop.f32.mrf.mxu0
      %v1890 = vadd.f32 0.0, %v1889
      %v1891 = vpop.f32.mrf.mxu0
      %1892 = vmatprep.mubr.f32.mxu0 0.0
      %1893 = vmatmul.mubr.f32.gmra.mxu0 %v1763
      %v1894 = vpop.f32.mrf.mxu0
      %v1895 = vadd.f32 0.0, %v1894
      %v1896 = vpop.f32.mrf.mxu0
      %1897 = vmatprep.mubr.f32.mxu0 0.0
      %1898 = vmatmul.mubr.f32.gmra.mxu0 %v1766
      %v1899 = vpop.f32.mrf.mxu0
      %v1900 = vadd.f32 0.0, %v1899
      %v1901 = vpop.f32.mrf.mxu0
      %1902 = vdwg.mxu0
      %v1903 = vadd.f32 %v1696, %v1835
      %v1904 = vadd.f32 %v1697, %v1840
      %v1905 = vadd.f32 %v1698, %v1845
      %v1906 = vadd.f32 %v1699, %v1850
      %v1907 = vadd.f32 %v1700, %v1855
      %v1908 = vadd.f32 %v1701, %v1860
      %v1909 = vadd.f32 %v1702, %v1865
      %v1910 = vadd.f32 %v1703, %v1870
      %v1911 = vadd.f32 %v1704, %v1875
      %v1912 = vadd.f32 %v1705, %v1880
      %v1913 = vadd.f32 %v1706, %v1885
      %v1914 = vadd.f32 %v1707, %v1890
      %v1915 = vadd.f32 %v1708, %v1895
      %v1916 = vadd.f32 %v1709, %v1900
      %1917 = vst [vmem:[#allocation3] sm:$0xff] %v1903
      %1918 = vst [vmem:[#allocation3 + $0x8] sm:$0xff] %v1904
      %1919 = vst [vmem:[#allocation3 + $0x10] sm:$0xff] %v1905
      %1920 = vst [vmem:[#allocation3 + $0x18] sm:$0xff] %v1906
      %1921 = vst [vmem:[#allocation3 + $0x20] sm:$0xff] %v1907
      %1922 = vst [vmem:[#allocation3 + $0x28] sm:$0xff] %v1908
      %1923 = vst [vmem:[#allocation3 + $0x30] sm:$0xff] %v1909
      %1924 = vst [vmem:[#allocation3 + $0x38] sm:$0xff] %v1910
      %1925 = vst [vmem:[#allocation3 + $0x40] sm:$0xff] %v1911
      %1926 = vst [vmem:[#allocation3 + $0x48] sm:$0xff] %v1912
      %1927 = vst [vmem:[#allocation3 + $0x50] sm:$0xff] %v1913
      %1928 = vst [vmem:[#allocation3 + $0x58] sm:$0xff] %v1914
      %1929 = vst [vmem:[#allocation3 + $0x60] sm:$0xff] %v1915
      %1930 = vst [vmem:[#allocation3 + $0x68] sm:$0xff] %v1916
      %v1931 = vld [vmem:[#allocation3] sm:$0xff]
      %v1932 = vld [vmem:[#allocation3 + $0x8] sm:$0xff]
      %v1933 = vld [vmem:[#allocation3 + $0x10] sm:$0xff]
      %v1934 = vld [vmem:[#allocation3 + $0x18] sm:$0xff]
      %v1935 = vld [vmem:[#allocation3 + $0x20] sm:$0xff]
      %v1936 = vld [vmem:[#allocation3 + $0x28] sm:$0xff]
      %v1937 = vld [vmem:[#allocation3 + $0x30] sm:$0xff]
      %v1938 = vld [vmem:[#allocation3 + $0x38] sm:$0xff]
      %v1939 = vld [vmem:[#allocation3 + $0x40] sm:$0xff]
      %v1940 = vld [vmem:[#allocation3 + $0x48] sm:$0xff]
      %v1941 = vld [vmem:[#allocation3 + $0x50] sm:$0xff]
      %v1942 = vld [vmem:[#allocation3 + $0x58] sm:$0xff]
      %v1943 = vld [vmem:[#allocation3 + $0x60] sm:$0xff]
      %v1944 = vld [vmem:[#allocation3 + $0x68] sm:$0xff]
      %v1945 = vld [vmem:[#allocation2 + $0x14] sm:$0xff]
      %v1946 = vld [vmem:[#allocation2 + $0x1c] sm:$0xff]
      %v1947 = vld [vmem:[#allocation2 + $0x24] sm:$0xff]
      %v1948 = vld [vmem:[#allocation2 + $0x2c] sm:$0xff]
      %v1949 = vld [vmem:[#allocation2 + $0x34] sm:$0xff]
      %v1950 = vld [vmem:[#allocation2 + $0x3c] sm:$0xff]
      %v1951 = vld [vmem:[#allocation2 + $0x44] sm:$0xff]
      %v1952 = vld [vmem:[#allocation2 + $0x4c] sm:$0xff]
      %v1953 = vld [vmem:[#allocation2 + $0x54] sm:$0xff]
      %v1954 = vld [vmem:[#allocation2 + $0x5c] sm:$0xff]
      %v1955 = vld [vmem:[#allocation2 + $0x64] sm:$0xff]
      %v1956 = vld [vmem:[#allocation2 + $0x6c] sm:$0xff]
      %v1957 = vld [vmem:[#allocation2 + $0x74] sm:$0xff]
      %v1958 = vld [vmem:[#allocation2 + $0x7c] sm:$0xff]
      %s1959 = scalar_lea.vmem %s1, 48
      %v1960 = vld [vmem:[%s1959] sm:$0xff]
      %v1962 = vsel %vm489, %v1945, 0
      %v1965 = vsel %vm489, %v1946, 0
      %v1968 = vsel %vm489, %v1947, 0
      %v1971 = vsel %vm489, %v1948, 0
      %v1974 = vsel %vm489, %v1949, 0
      %v1977 = vsel %vm489, %v1950, 0
      %v1980 = vsel %vm489, %v1951, 0
      %v1983 = vsel %vm489, %v1952, 0
      %v1986 = vsel %vm489, %v1953, 0
      %v1989 = vsel %vm489, %v1954, 0
      %v1992 = vsel %vm489, %v1955, 0
      %v1995 = vsel %vm489, %v1956, 0
      %v1998 = vsel %vm489, %v1957, 0
      %v2001 = vsel %vm489, %v1958, 0
      %2003 = vmatprep.subr.mxu0 0.0
      %2004 = vmatpush1.msra.mxu0 0.0
      %2005 = vmatprep.subr.mxu0 0.0
      %2006 = vmatpush1.msra.mxu0 0.0
      %2007 = vmatprep.subr.mxu0 0.0
      %2008 = vmatpush1.msra.mxu0 0.0
      %2009 = vmatprep.subr.mxu0 0.0
      %2010 = vmatpush1.msra.mxu0 0.0
      %2011 = vmatprep.subr.mxu0 0.0
      %2012 = vmatpush1.msra.mxu0 0.0
      %2013 = vmatprep.subr.mxu0 0.0
      %2014 = vmatpush1.msra.mxu0 0.0
      %2015 = vmatprep.subr.mxu0 0.0
      %2016 = vmatpush1.msra.mxu0 0.0
      %2017 = vmatprep.subr.mxu0 0.0
      %2018 = vmatpush1.msra.mxu0 0.0
      %2019 = vmatprep.subr.mxu0 0.0
      %2020 = vmatpush1.msra.mxu0 0.0
      %2021 = vmatprep.subr.mxu0 0.0
      %2022 = vmatpush1.msra.mxu0 0.0
      %2023 = vmatprep.subr.mxu0 0.0
      %2024 = vmatpush1.msra.mxu0 0.0
      %2025 = vmatprep.subr.mxu0 0.0
      %2026 = vmatpush1.msra.mxu0 0.0
      %2027 = vmatprep.subr.mxu0 0.0
      %2028 = vmatpush1.msra.mxu0 0.0
      %2029 = vmatprep.subr.mxu0 0.0
      %2030 = vmatpush1.msra.mxu0 0.0
      %2031 = vmatprep.subr.mxu0 0.0
      %2032 = vmatpush1.msra.mxu0 0.0
      %2033 = vmatprep.subr.mxu0 0.0
      %2034 = vmatpush1.msra.mxu0 %v1960
      %2035 = vmatprep.subr.mxu0 0.0
      %2036 = vmatpush2.msra.mxu0 0.0
      %2037 = vmatprep.subr.mxu0 0.0
      %2038 = vmatpush2.msra.mxu0 0.0
      %2039 = vmatprep.subr.mxu0 0.0
      %2040 = vmatpush2.msra.mxu0 0.0
      %2041 = vmatprep.subr.mxu0 0.0
      %2042 = vmatpush2.msra.mxu0 0.0
      %2043 = vmatprep.subr.mxu0 0.0
      %2044 = vmatpush2.msra.mxu0 0.0
      %2045 = vmatprep.subr.mxu0 0.0
      %2046 = vmatpush2.msra.mxu0 0.0
      %2047 = vmatprep.subr.mxu0 0.0
      %2048 = vmatpush2.msra.mxu0 0.0
      %2049 = vmatprep.subr.mxu0 0.0
      %2050 = vmatpush2.msra.mxu0 0.0
      %2051 = vmatprep.subr.mxu0 0.0
      %2052 = vmatpush2.msra.mxu0 0.0
      %2053 = vmatprep.subr.mxu0 0.0
      %2054 = vmatpush2.msra.mxu0 0.0
      %2055 = vmatprep.subr.mxu0 0.0
      %2056 = vmatpush2.msra.mxu0 0.0
      %2057 = vmatprep.subr.mxu0 0.0
      %2058 = vmatpush2.msra.mxu0 0.0
      %2059 = vmatprep.subr.mxu0 0.0
      %2060 = vmatpush2.msra.mxu0 0.0
      %2061 = vmatprep.subr.mxu0 0.0
      %2062 = vmatpush2.msra.mxu0 0.0
      %2063 = vmatprep.subr.mxu0 0.0
      %2064 = vmatpush2.msra.mxu0 0.0
      %2065 = vmatprep.subr.mxu0 0.0
      %2066 = vmatpush2.msra.mxu0 0.0
      %2067 = vmatprep.mubr.f32.mxu0 0.0
      %2068 = vmatmul.mubr.f32.gmra.mxu0 %v1962
      %v2069 = vpop.f32.mrf.mxu0
      %v2070 = vadd.f32 0.0, %v2069
      %v2071 = vpop.f32.mrf.mxu0
      %2072 = vmatprep.mubr.f32.mxu0 0.0
      %2073 = vmatmul.mubr.f32.gmra.mxu0 %v1965
      %v2074 = vpop.f32.mrf.mxu0
      %v2075 = vadd.f32 0.0, %v2074
      %v2076 = vpop.f32.mrf.mxu0
      %2077 = vmatprep.mubr.f32.mxu0 0.0
      %2078 = vmatmul.mubr.f32.gmra.mxu0 %v1968
      %v2079 = vpop.f32.mrf.mxu0
      %v2080 = vadd.f32 0.0, %v2079
      %v2081 = vpop.f32.mrf.mxu0
      %2082 = vmatprep.mubr.f32.mxu0 0.0
      %2083 = vmatmul.mubr.f32.gmra.mxu0 %v1971
      %v2084 = vpop.f32.mrf.mxu0
      %v2085 = vadd.f32 0.0, %v2084
      %v2086 = vpop.f32.mrf.mxu0
      %2087 = vmatprep.mubr.f32.mxu0 0.0
      %2088 = vmatmul.mubr.f32.gmra.mxu0 %v1974
      %v2089 = vpop.f32.mrf.mxu0
      %v2090 = vadd.f32 0.0, %v2089
      %v2091 = vpop.f32.mrf.mxu0
      %2092 = vmatprep.mubr.f32.mxu0 0.0
      %2093 = vmatmul.mubr.f32.gmra.mxu0 %v1977
      %v2094 = vpop.f32.mrf.mxu0
      %v2095 = vadd.f32 0.0, %v2094
      %v2096 = vpop.f32.mrf.mxu0
      %2097 = vmatprep.mubr.f32.mxu0 0.0
      %2098 = vmatmul.mubr.f32.gmra.mxu0 %v1980
      %v2099 = vpop.f32.mrf.mxu0
      %v2100 = vadd.f32 0.0, %v2099
      %v2101 = vpop.f32.mrf.mxu0
      %2102 = vmatprep.mubr.f32.mxu0 0.0
      %2103 = vmatmul.mubr.f32.gmra.mxu0 %v1983
      %v2104 = vpop.f32.mrf.mxu0
      %v2105 = vadd.f32 0.0, %v2104
      %v2106 = vpop.f32.mrf.mxu0
      %2107 = vmatprep.mubr.f32.mxu0 0.0
      %2108 = vmatmul.mubr.f32.gmra.mxu0 %v1986
      %v2109 = vpop.f32.mrf.mxu0
      %v2110 = vadd.f32 0.0, %v2109
      %v2111 = vpop.f32.mrf.mxu0
      %2112 = vmatprep.mubr.f32.mxu0 0.0
      %2113 = vmatmul.mubr.f32.gmra.mxu0 %v1989
      %v2114 = vpop.f32.mrf.mxu0
      %v2115 = vadd.f32 0.0, %v2114
      %v2116 = vpop.f32.mrf.mxu0
      %2117 = vmatprep.mubr.f32.mxu0 0.0
      %2118 = vmatmul.mubr.f32.gmra.mxu0 %v1992
      %v2119 = vpop.f32.mrf.mxu0
      %v2120 = vadd.f32 0.0, %v2119
      %v2121 = vpop.f32.mrf.mxu0
      %2122 = vmatprep.mubr.f32.mxu0 0.0
      %2123 = vmatmul.mubr.f32.gmra.mxu0 %v1995
      %v2124 = vpop.f32.mrf.mxu0
      %v2125 = vadd.f32 0.0, %v2124
      %v2126 = vpop.f32.mrf.mxu0
      %2127 = vmatprep.mubr.f32.mxu0 0.0
      %2128 = vmatmul.mubr.f32.gmra.mxu0 %v1998
      %v2129 = vpop.f32.mrf.mxu0
      %v2130 = vadd.f32 0.0, %v2129
      %v2131 = vpop.f32.mrf.mxu0
      %2132 = vmatprep.mubr.f32.mxu0 0.0
      %2133 = vmatmul.mubr.f32.gmra.mxu0 %v2001
      %v2134 = vpop.f32.mrf.mxu0
      %v2135 = vadd.f32 0.0, %v2134
      %v2136 = vpop.f32.mrf.mxu0
      %2137 = vdwg.mxu0
      %v2138 = vadd.f32 %v1931, %v2070
      %v2139 = vadd.f32 %v1932, %v2075
      %v2140 = vadd.f32 %v1933, %v2080
      %v2141 = vadd.f32 %v1934, %v2085
      %v2142 = vadd.f32 %v1935, %v2090
      %v2143 = vadd.f32 %v1936, %v2095
      %v2144 = vadd.f32 %v1937, %v2100
      %v2145 = vadd.f32 %v1938, %v2105
      %v2146 = vadd.f32 %v1939, %v2110
      %v2147 = vadd.f32 %v1940, %v2115
      %v2148 = vadd.f32 %v1941, %v2120
      %v2149 = vadd.f32 %v1942, %v2125
      %v2150 = vadd.f32 %v1943, %v2130
      %v2151 = vadd.f32 %v1944, %v2135
      %2152 = vst [vmem:[#allocation3] sm:$0xff] %v2138
      %2153 = vst [vmem:[#allocation3 + $0x8] sm:$0xff] %v2139
      %2154 = vst [vmem:[#allocation3 + $0x10] sm:$0xff] %v2140
      %2155 = vst [vmem:[#allocation3 + $0x18] sm:$0xff] %v2141
      %2156 = vst [vmem:[#allocation3 + $0x20] sm:$0xff] %v2142
      %2157 = vst [vmem:[#allocation3 + $0x28] sm:$0xff] %v2143
      %2158 = vst [vmem:[#allocation3 + $0x30] sm:$0xff] %v2144
      %2159 = vst [vmem:[#allocation3 + $0x38] sm:$0xff] %v2145
      %2160 = vst [vmem:[#allocation3 + $0x40] sm:$0xff] %v2146
      %2161 = vst [vmem:[#allocation3 + $0x48] sm:$0xff] %v2147
      %2162 = vst [vmem:[#allocation3 + $0x50] sm:$0xff] %v2148
      %2163 = vst [vmem:[#allocation3 + $0x58] sm:$0xff] %v2149
      %2164 = vst [vmem:[#allocation3 + $0x60] sm:$0xff] %v2150
      %2165 = vst [vmem:[#allocation3 + $0x68] sm:$0xff] %v2151
      %v2166 = vld [vmem:[#allocation3] sm:$0xff]
      %v2167 = vld [vmem:[#allocation3 + $0x8] sm:$0xff]
      %v2168 = vld [vmem:[#allocation3 + $0x10] sm:$0xff]
      %v2169 = vld [vmem:[#allocation3 + $0x18] sm:$0xff]
      %v2170 = vld [vmem:[#allocation3 + $0x20] sm:$0xff]
      %v2171 = vld [vmem:[#allocation3 + $0x28] sm:$0xff]
      %v2172 = vld [vmem:[#allocation3 + $0x30] sm:$0xff]
      %v2173 = vld [vmem:[#allocation3 + $0x38] sm:$0xff]
      %v2174 = vld [vmem:[#allocation3 + $0x40] sm:$0xff]
      %v2175 = vld [vmem:[#allocation3 + $0x48] sm:$0xff]
      %v2176 = vld [vmem:[#allocation3 + $0x50] sm:$0xff]
      %v2177 = vld [vmem:[#allocation3 + $0x58] sm:$0xff]
      %v2178 = vld [vmem:[#allocation3 + $0x60] sm:$0xff]
      %v2179 = vld [vmem:[#allocation3 + $0x68] sm:$0xff]
      %v2180 = vld [vmem:[#allocation2 + $0x15] sm:$0xff]
      %v2181 = vld [vmem:[#allocation2 + $0x1d] sm:$0xff]
      %v2182 = vld [vmem:[#allocation2 + $0x25] sm:$0xff]
      %v2183 = vld [vmem:[#allocation2 + $0x2d] sm:$0xff]
      %v2184 = vld [vmem:[#allocation2 + $0x35] sm:$0xff]
      %v2185 = vld [vmem:[#allocation2 + $0x3d] sm:$0xff]
      %v2186 = vld [vmem:[#allocation2 + $0x45] sm:$0xff]
      %v2187 = vld [vmem:[#allocation2 + $0x4d] sm:$0xff]
      %v2188 = vld [vmem:[#allocation2 + $0x55] sm:$0xff]
      %v2189 = vld [vmem:[#allocation2 + $0x5d] sm:$0xff]
      %v2190 = vld [vmem:[#allocation2 + $0x65] sm:$0xff]
      %v2191 = vld [vmem:[#allocation2 + $0x6d] sm:$0xff]
      %v2192 = vld [vmem:[#allocation2 + $0x75] sm:$0xff]
      %v2193 = vld [vmem:[#allocation2 + $0x7d] sm:$0xff]
      %s2194 = scalar_lea.vmem %s1, 56
      %v2195 = vld [vmem:[%s2194] sm:$0xff]
      %v2197 = vsel %vm489, %v2180, 0
      %v2200 = vsel %vm489, %v2181, 0
      %v2203 = vsel %vm489, %v2182, 0
      %v2206 = vsel %vm489, %v2183, 0
      %v2209 = vsel %vm489, %v2184, 0
      %v2212 = vsel %vm489, %v2185, 0
      %v2215 = vsel %vm489, %v2186, 0
      %v2218 = vsel %vm489, %v2187, 0
      %v2221 = vsel %vm489, %v2188, 0
      %v2224 = vsel %vm489, %v2189, 0
      %v2227 = vsel %vm489, %v2190, 0
      %v2230 = vsel %vm489, %v2191, 0
      %v2233 = vsel %vm489, %v2192, 0
      %v2236 = vsel %vm489, %v2193, 0
      %2238 = vmatprep.subr.mxu0 0.0
      %2239 = vmatpush1.msra.mxu0 0.0
      %2240 = vmatprep.subr.mxu0 0.0
      %2241 = vmatpush1.msra.mxu0 0.0
      %2242 = vmatprep.subr.mxu0 0.0
      %2243 = vmatpush1.msra.mxu0 0.0
      %2244 = vmatprep.subr.mxu0 0.0
      %2245 = vmatpush1.msra.mxu0 0.0
      %2246 = vmatprep.subr.mxu0 0.0
      %2247 = vmatpush1.msra.mxu0 0.0
      %2248 = vmatprep.subr.mxu0 0.0
      %2249 = vmatpush1.msra.mxu0 0.0
      %2250 = vmatprep.subr.mxu0 0.0
      %2251 = vmatpush1.msra.mxu0 0.0
      %2252 = vmatprep.subr.mxu0 0.0
      %2253 = vmatpush1.msra.mxu0 0.0
      %2254 = vmatprep.subr.mxu0 0.0
      %2255 = vmatpush1.msra.mxu0 0.0
      %2256 = vmatprep.subr.mxu0 0.0
      %2257 = vmatpush1.msra.mxu0 0.0
      %2258 = vmatprep.subr.mxu0 0.0
      %2259 = vmatpush1.msra.mxu0 0.0
      %2260 = vmatprep.subr.mxu0 0.0
      %2261 = vmatpush1.msra.mxu0 0.0
      %2262 = vmatprep.subr.mxu0 0.0
      %2263 = vmatpush1.msra.mxu0 0.0
      %2264 = vmatprep.subr.mxu0 0.0
      %2265 = vmatpush1.msra.mxu0 0.0
      %2266 = vmatprep.subr.mxu0 0.0
      %2267 = vmatpush1.msra.mxu0 0.0
      %2268 = vmatprep.subr.mxu0 0.0
      %2269 = vmatpush1.msra.mxu0 %v2195
      %2270 = vmatprep.subr.mxu0 0.0
      %2271 = vmatpush2.msra.mxu0 0.0
      %2272 = vmatprep.subr.mxu0 0.0
      %2273 = vmatpush2.msra.mxu0 0.0
      %2274 = vmatprep.subr.mxu0 0.0
      %2275 = vmatpush2.msra.mxu0 0.0
      %2276 = vmatprep.subr.mxu0 0.0
      %2277 = vmatpush2.msra.mxu0 0.0
      %2278 = vmatprep.subr.mxu0 0.0
      %2279 = vmatpush2.msra.mxu0 0.0
      %2280 = vmatprep.subr.mxu0 0.0
      %2281 = vmatpush2.msra.mxu0 0.0
      %2282 = vmatprep.subr.mxu0 0.0
      %2283 = vmatpush2.msra.mxu0 0.0
      %2284 = vmatprep.subr.mxu0 0.0
      %2285 = vmatpush2.msra.mxu0 0.0
      %2286 = vmatprep.subr.mxu0 0.0
      %2287 = vmatpush2.msra.mxu0 0.0
      %2288 = vmatprep.subr.mxu0 0.0
      %2289 = vmatpush2.msra.mxu0 0.0
      %2290 = vmatprep.subr.mxu0 0.0
      %2291 = vmatpush2.msra.mxu0 0.0
      %2292 = vmatprep.subr.mxu0 0.0
      %2293 = vmatpush2.msra.mxu0 0.0
      %2294 = vmatprep.subr.mxu0 0.0
      %2295 = vmatpush2.msra.mxu0 0.0
      %2296 = vmatprep.subr.mxu0 0.0
      %2297 = vmatpush2.msra.mxu0 0.0
      %2298 = vmatprep.subr.mxu0 0.0
      %2299 = vmatpush2.msra.mxu0 0.0
      %2300 = vmatprep.subr.mxu0 0.0
      %2301 = vmatpush2.msra.mxu0 0.0
      %2302 = vmatprep.mubr.f32.mxu0 0.0
      %2303 = vmatmul.mubr.f32.gmra.mxu0 %v2197
      %v2304 = vpop.f32.mrf.mxu0
      %v2305 = vadd.f32 0.0, %v2304
      %v2306 = vpop.f32.mrf.mxu0
      %2307 = vmatprep.mubr.f32.mxu0 0.0
      %2308 = vmatmul.mubr.f32.gmra.mxu0 %v2200
      %v2309 = vpop.f32.mrf.mxu0
      %v2310 = vadd.f32 0.0, %v2309
      %v2311 = vpop.f32.mrf.mxu0
      %2312 = vmatprep.mubr.f32.mxu0 0.0
      %2313 = vmatmul.mubr.f32.gmra.mxu0 %v2203
      %v2314 = vpop.f32.mrf.mxu0
      %v2315 = vadd.f32 0.0, %v2314
      %v2316 = vpop.f32.mrf.mxu0
      %2317 = vmatprep.mubr.f32.mxu0 0.0
      %2318 = vmatmul.mubr.f32.gmra.mxu0 %v2206
      %v2319 = vpop.f32.mrf.mxu0
      %v2320 = vadd.f32 0.0, %v2319
      %v2321 = vpop.f32.mrf.mxu0
      %2322 = vmatprep.mubr.f32.mxu0 0.0
      %2323 = vmatmul.mubr.f32.gmra.mxu0 %v2209
      %v2324 = vpop.f32.mrf.mxu0
      %v2325 = vadd.f32 0.0, %v2324
      %v2326 = vpop.f32.mrf.mxu0
      %2327 = vmatprep.mubr.f32.mxu0 0.0
      %2328 = vmatmul.mubr.f32.gmra.mxu0 %v2212
      %v2329 = vpop.f32.mrf.mxu0
      %v2330 = vadd.f32 0.0, %v2329
      %v2331 = vpop.f32.mrf.mxu0
      %2332 = vmatprep.mubr.f32.mxu0 0.0
      %2333 = vmatmul.mubr.f32.gmra.mxu0 %v2215
      %v2334 = vpop.f32.mrf.mxu0
      %v2335 = vadd.f32 0.0, %v2334
      %v2336 = vpop.f32.mrf.mxu0
      %2337 = vmatprep.mubr.f32.mxu0 0.0
      %2338 = vmatmul.mubr.f32.gmra.mxu0 %v2218
      %v2339 = vpop.f32.mrf.mxu0
      %v2340 = vadd.f32 0.0, %v2339
      %v2341 = vpop.f32.mrf.mxu0
      %2342 = vmatprep.mubr.f32.mxu0 0.0
      %2343 = vmatmul.mubr.f32.gmra.mxu0 %v2221
      %v2344 = vpop.f32.mrf.mxu0
      %v2345 = vadd.f32 0.0, %v2344
      %v2346 = vpop.f32.mrf.mxu0
      %2347 = vmatprep.mubr.f32.mxu0 0.0
      %2348 = vmatmul.mubr.f32.gmra.mxu0 %v2224
      %v2349 = vpop.f32.mrf.mxu0
      %v2350 = vadd.f32 0.0, %v2349
      %v2351 = vpop.f32.mrf.mxu0
      %2352 = vmatprep.mubr.f32.mxu0 0.0
      %2353 = vmatmul.mubr.f32.gmra.mxu0 %v2227
      %v2354 = vpop.f32.mrf.mxu0
      %v2355 = vadd.f32 0.0, %v2354
      %v2356 = vpop.f32.mrf.mxu0
      %2357 = vmatprep.mubr.f32.mxu0 0.0
      %2358 = vmatmul.mubr.f32.gmra.mxu0 %v2230
      %v2359 = vpop.f32.mrf.mxu0
      %v2360 = vadd.f32 0.0, %v2359
      %v2361 = vpop.f32.mrf.mxu0
      %2362 = vmatprep.mubr.f32.mxu0 0.0
      %2363 = vmatmul.mubr.f32.gmra.mxu0 %v2233
      %v2364 = vpop.f32.mrf.mxu0
      %v2365 = vadd.f32 0.0, %v2364
      %v2366 = vpop.f32.mrf.mxu0
      %2367 = vmatprep.mubr.f32.mxu0 0.0
      %2368 = vmatmul.mubr.f32.gmra.mxu0 %v2236
      %v2369 = vpop.f32.mrf.mxu0
      %v2370 = vadd.f32 0.0, %v2369
      %v2371 = vpop.f32.mrf.mxu0
      %2372 = vdwg.mxu0
      %v2373 = vadd.f32 %v2166, %v2305
      %v2374 = vadd.f32 %v2167, %v2310
      %v2375 = vadd.f32 %v2168, %v2315
      %v2376 = vadd.f32 %v2169, %v2320
      %v2377 = vadd.f32 %v2170, %v2325
      %v2378 = vadd.f32 %v2171, %v2330
      %v2379 = vadd.f32 %v2172, %v2335
      %v2380 = vadd.f32 %v2173, %v2340
      %v2381 = vadd.f32 %v2174, %v2345
      %v2382 = vadd.f32 %v2175, %v2350
      %v2383 = vadd.f32 %v2176, %v2355
      %v2384 = vadd.f32 %v2177, %v2360
      %v2385 = vadd.f32 %v2178, %v2365
      %v2386 = vadd.f32 %v2179, %v2370
      %2387 = vst [vmem:[#allocation3] sm:$0xff] %v2373
      %2388 = vst [vmem:[#allocation3 + $0x8] sm:$0xff] %v2374
      %2389 = vst [vmem:[#allocation3 + $0x10] sm:$0xff] %v2375
      %2390 = vst [vmem:[#allocation3 + $0x18] sm:$0xff] %v2376
      %2391 = vst [vmem:[#allocation3 + $0x20] sm:$0xff] %v2377
      %2392 = vst [vmem:[#allocation3 + $0x28] sm:$0xff] %v2378
      %2393 = vst [vmem:[#allocation3 + $0x30] sm:$0xff] %v2379
      %2394 = vst [vmem:[#allocation3 + $0x38] sm:$0xff] %v2380
      %2395 = vst [vmem:[#allocation3 + $0x40] sm:$0xff] %v2381
      %2396 = vst [vmem:[#allocation3 + $0x48] sm:$0xff] %v2382
      %2397 = vst [vmem:[#allocation3 + $0x50] sm:$0xff] %v2383
      %2398 = vst [vmem:[#allocation3 + $0x58] sm:$0xff] %v2384
      %2399 = vst [vmem:[#allocation3 + $0x60] sm:$0xff] %v2385
      %2400 = vst [vmem:[#allocation3 + $0x68] sm:$0xff] %v2386
      %v2401 = vld [vmem:[#allocation3] sm:$0xff]
      %v2402 = vld [vmem:[#allocation3 + $0x8] sm:$0xff]
      %v2403 = vld [vmem:[#allocation3 + $0x10] sm:$0xff]
      %v2404 = vld [vmem:[#allocation3 + $0x18] sm:$0xff]
      %v2405 = vld [vmem:[#allocation3 + $0x20] sm:$0xff]
      %v2406 = vld [vmem:[#allocation3 + $0x28] sm:$0xff]
      %v2407 = vld [vmem:[#allocation3 + $0x30] sm:$0xff]
      %v2408 = vld [vmem:[#allocation3 + $0x38] sm:$0xff]
      %v2409 = vld [vmem:[#allocation3 + $0x40] sm:$0xff]
      %v2410 = vld [vmem:[#allocation3 + $0x48] sm:$0xff]
      %v2411 = vld [vmem:[#allocation3 + $0x50] sm:$0xff]
      %v2412 = vld [vmem:[#allocation3 + $0x58] sm:$0xff]
      %v2413 = vld [vmem:[#allocation3 + $0x60] sm:$0xff]
      %v2414 = vld [vmem:[#allocation3 + $0x68] sm:$0xff]
      %v2415 = vld [vmem:[#allocation2 + $0x16] sm:$0xff]
      %v2416 = vld [vmem:[#allocation2 + $0x1e] sm:$0xff]
      %v2417 = vld [vmem:[#allocation2 + $0x26] sm:$0xff]
      %v2418 = vld [vmem:[#allocation2 + $0x2e] sm:$0xff]
      %v2419 = vld [vmem:[#allocation2 + $0x36] sm:$0xff]
      %v2420 = vld [vmem:[#allocation2 + $0x3e] sm:$0xff]
      %v2421 = vld [vmem:[#allocation2 + $0x46] sm:$0xff]
      %v2422 = vld [vmem:[#allocation2 + $0x4e] sm:$0xff]
      %v2423 = vld [vmem:[#allocation2 + $0x56] sm:$0xff]
      %v2424 = vld [vmem:[#allocation2 + $0x5e] sm:$0xff]
      %v2425 = vld [vmem:[#allocation2 + $0x66] sm:$0xff]
      %v2426 = vld [vmem:[#allocation2 + $0x6e] sm:$0xff]
      %v2427 = vld [vmem:[#allocation2 + $0x76] sm:$0xff]
      %v2428 = vld [vmem:[#allocation2 + $0x7e] sm:$0xff]
      %s2429 = scalar_lea.vmem %s1, 64
      %v2430 = vld [vmem:[%s2429] sm:$0xff]
      %v2432 = vsel %vm489, %v2415, 0
      %v2435 = vsel %vm489, %v2416, 0
      %v2438 = vsel %vm489, %v2417, 0
      %v2441 = vsel %vm489, %v2418, 0
      %v2444 = vsel %vm489, %v2419, 0
      %v2447 = vsel %vm489, %v2420, 0
      %v2450 = vsel %vm489, %v2421, 0
      %v2453 = vsel %vm489, %v2422, 0
      %v2456 = vsel %vm489, %v2423, 0
      %v2459 = vsel %vm489, %v2424, 0
      %v2462 = vsel %vm489, %v2425, 0
      %v2465 = vsel %vm489, %v2426, 0
      %v2468 = vsel %vm489, %v2427, 0
      %v2471 = vsel %vm489, %v2428, 0
      %2473 = vmatprep.subr.mxu0 0.0
      %2474 = vmatpush1.msra.mxu0 0.0
      %2475 = vmatprep.subr.mxu0 0.0
      %2476 = vmatpush1.msra.mxu0 0.0
      %2477 = vmatprep.subr.mxu0 0.0
      %2478 = vmatpush1.msra.mxu0 0.0
      %2479 = vmatprep.subr.mxu0 0.0
      %2480 = vmatpush1.msra.mxu0 0.0
      %2481 = vmatprep.subr.mxu0 0.0
      %2482 = vmatpush1.msra.mxu0 0.0
      %2483 = vmatprep.subr.mxu0 0.0
      %2484 = vmatpush1.msra.mxu0 0.0
      %2485 = vmatprep.subr.mxu0 0.0
      %2486 = vmatpush1.msra.mxu0 0.0
      %2487 = vmatprep.subr.mxu0 0.0
      %2488 = vmatpush1.msra.mxu0 0.0
      %2489 = vmatprep.subr.mxu0 0.0
      %2490 = vmatpush1.msra.mxu0 0.0
      %2491 = vmatprep.subr.mxu0 0.0
      %2492 = vmatpush1.msra.mxu0 0.0
      %2493 = vmatprep.subr.mxu0 0.0
      %2494 = vmatpush1.msra.mxu0 0.0
      %2495 = vmatprep.subr.mxu0 0.0
      %2496 = vmatpush1.msra.mxu0 0.0
      %2497 = vmatprep.subr.mxu0 0.0
      %2498 = vmatpush1.msra.mxu0 0.0
      %2499 = vmatprep.subr.mxu0 0.0
      %2500 = vmatpush1.msra.mxu0 0.0
      %2501 = vmatprep.subr.mxu0 0.0
      %2502 = vmatpush1.msra.mxu0 0.0
      %2503 = vmatprep.subr.mxu0 0.0
      %2504 = vmatpush1.msra.mxu0 %v2430
      %2505 = vmatprep.subr.mxu0 0.0
      %2506 = vmatpush2.msra.mxu0 0.0
      %2507 = vmatprep.subr.mxu0 0.0
      %2508 = vmatpush2.msra.mxu0 0.0
      %2509 = vmatprep.subr.mxu0 0.0
      %2510 = vmatpush2.msra.mxu0 0.0
      %2511 = vmatprep.subr.mxu0 0.0
      %2512 = vmatpush2.msra.mxu0 0.0
      %2513 = vmatprep.subr.mxu0 0.0
      %2514 = vmatpush2.msra.mxu0 0.0
      %2515 = vmatprep.subr.mxu0 0.0
      %2516 = vmatpush2.msra.mxu0 0.0
      %2517 = vmatprep.subr.mxu0 0.0
      %2518 = vmatpush2.msra.mxu0 0.0
      %2519 = vmatprep.subr.mxu0 0.0
      %2520 = vmatpush2.msra.mxu0 0.0
      %2521 = vmatprep.subr.mxu0 0.0
      %2522 = vmatpush2.msra.mxu0 0.0
      %2523 = vmatprep.subr.mxu0 0.0
      %2524 = vmatpush2.msra.mxu0 0.0
      %2525 = vmatprep.subr.mxu0 0.0
      %2526 = vmatpush2.msra.mxu0 0.0
      %2527 = vmatprep.subr.mxu0 0.0
      %2528 = vmatpush2.msra.mxu0 0.0
      %2529 = vmatprep.subr.mxu0 0.0
      %2530 = vmatpush2.msra.mxu0 0.0
      %2531 = vmatprep.subr.mxu0 0.0
      %2532 = vmatpush2.msra.mxu0 0.0
      %2533 = vmatprep.subr.mxu0 0.0
      %2534 = vmatpush2.msra.mxu0 0.0
      %2535 = vmatprep.subr.mxu0 0.0
      %2536 = vmatpush2.msra.mxu0 0.0
      %2537 = vmatprep.mubr.f32.mxu0 0.0
      %2538 = vmatmul.mubr.f32.gmra.mxu0 %v2432
      %v2539 = vpop.f32.mrf.mxu0
      %v2540 = vadd.f32 0.0, %v2539
      %v2541 = vpop.f32.mrf.mxu0
      %2542 = vmatprep.mubr.f32.mxu0 0.0
      %2543 = vmatmul.mubr.f32.gmra.mxu0 %v2435
      %v2544 = vpop.f32.mrf.mxu0
      %v2545 = vadd.f32 0.0, %v2544
      %v2546 = vpop.f32.mrf.mxu0
      %2547 = vmatprep.mubr.f32.mxu0 0.0
      %2548 = vmatmul.mubr.f32.gmra.mxu0 %v2438
      %v2549 = vpop.f32.mrf.mxu0
      %v2550 = vadd.f32 0.0, %v2549
      %v2551 = vpop.f32.mrf.mxu0
      %2552 = vmatprep.mubr.f32.mxu0 0.0
      %2553 = vmatmul.mubr.f32.gmra.mxu0 %v2441
      %v2554 = vpop.f32.mrf.mxu0
      %v2555 = vadd.f32 0.0, %v2554
      %v2556 = vpop.f32.mrf.mxu0
      %2557 = vmatprep.mubr.f32.mxu0 0.0
      %2558 = vmatmul.mubr.f32.gmra.mxu0 %v2444
      %v2559 = vpop.f32.mrf.mxu0
      %v2560 = vadd.f32 0.0, %v2559
      %v2561 = vpop.f32.mrf.mxu0
      %2562 = vmatprep.mubr.f32.mxu0 0.0
      %2563 = vmatmul.mubr.f32.gmra.mxu0 %v2447
      %v2564 = vpop.f32.mrf.mxu0
      %v2565 = vadd.f32 0.0, %v2564
      %v2566 = vpop.f32.mrf.mxu0
      %2567 = vmatprep.mubr.f32.mxu0 0.0
      %2568 = vmatmul.mubr.f32.gmra.mxu0 %v2450
      %v2569 = vpop.f32.mrf.mxu0
      %v2570 = vadd.f32 0.0, %v2569
      %v2571 = vpop.f32.mrf.mxu0
      %2572 = vmatprep.mubr.f32.mxu0 0.0
      %2573 = vmatmul.mubr.f32.gmra.mxu0 %v2453
      %v2574 = vpop.f32.mrf.mxu0
      %v2575 = vadd.f32 0.0, %v2574
      %v2576 = vpop.f32.mrf.mxu0
      %2577 = vmatprep.mubr.f32.mxu0 0.0
      %2578 = vmatmul.mubr.f32.gmra.mxu0 %v2456
      %v2579 = vpop.f32.mrf.mxu0
      %v2580 = vadd.f32 0.0, %v2579
      %v2581 = vpop.f32.mrf.mxu0
      %2582 = vmatprep.mubr.f32.mxu0 0.0
      %2583 = vmatmul.mubr.f32.gmra.mxu0 %v2459
      %v2584 = vpop.f32.mrf.mxu0
      %v2585 = vadd.f32 0.0, %v2584
      %v2586 = vpop.f32.mrf.mxu0
      %2587 = vmatprep.mubr.f32.mxu0 0.0
      %2588 = vmatmul.mubr.f32.gmra.mxu0 %v2462
      %v2589 = vpop.f32.mrf.mxu0
      %v2590 = vadd.f32 0.0, %v2589
      %v2591 = vpop.f32.mrf.mxu0
      %2592 = vmatprep.mubr.f32.mxu0 0.0
      %2593 = vmatmul.mubr.f32.gmra.mxu0 %v2465
      %v2594 = vpop.f32.mrf.mxu0
      %v2595 = vadd.f32 0.0, %v2594
      %v2596 = vpop.f32.mrf.mxu0
      %2597 = vmatprep.mubr.f32.mxu0 0.0
      %2598 = vmatmul.mubr.f32.gmra.mxu0 %v2468
      %v2599 = vpop.f32.mrf.mxu0
      %v2600 = vadd.f32 0.0, %v2599
      %v2601 = vpop.f32.mrf.mxu0
      %2602 = vmatprep.mubr.f32.mxu0 0.0
      %2603 = vmatmul.mubr.f32.gmra.mxu0 %v2471
      %v2604 = vpop.f32.mrf.mxu0
      %v2605 = vadd.f32 0.0, %v2604
      %v2606 = vpop.f32.mrf.mxu0
      %2607 = vdwg.mxu0
      %v2608 = vadd.f32 %v2401, %v2540
      %v2609 = vadd.f32 %v2402, %v2545
      %v2610 = vadd.f32 %v2403, %v2550
      %v2611 = vadd.f32 %v2404, %v2555
      %v2612 = vadd.f32 %v2405, %v2560
      %v2613 = vadd.f32 %v2406, %v2565
      %v2614 = vadd.f32 %v2407, %v2570
      %v2615 = vadd.f32 %v2408, %v2575
      %v2616 = vadd.f32 %v2409, %v2580
      %v2617 = vadd.f32 %v2410, %v2585
      %v2618 = vadd.f32 %v2411, %v2590
      %v2619 = vadd.f32 %v2412, %v2595
      %v2620 = vadd.f32 %v2413, %v2600
      %v2621 = vadd.f32 %v2414, %v2605
      %2622 = vst [vmem:[#allocation3] sm:$0xff] %v2608
      %2623 = vst [vmem:[#allocation3 + $0x8] sm:$0xff] %v2609
      %2624 = vst [vmem:[#allocation3 + $0x10] sm:$0xff] %v2610
      %2625 = vst [vmem:[#allocation3 + $0x18] sm:$0xff] %v2611
      %2626 = vst [vmem:[#allocation3 + $0x20] sm:$0xff] %v2612
      %2627 = vst [vmem:[#allocation3 + $0x28] sm:$0xff] %v2613
      %2628 = vst [vmem:[#allocation3 + $0x30] sm:$0xff] %v2614
      %2629 = vst [vmem:[#allocation3 + $0x38] sm:$0xff] %v2615
      %2630 = vst [vmem:[#allocation3 + $0x40] sm:$0xff] %v2616
      %2631 = vst [vmem:[#allocation3 + $0x48] sm:$0xff] %v2617
      %2632 = vst [vmem:[#allocation3 + $0x50] sm:$0xff] %v2618
      %2633 = vst [vmem:[#allocation3 + $0x58] sm:$0xff] %v2619
      %2634 = vst [vmem:[#allocation3 + $0x60] sm:$0xff] %v2620
      %2635 = vst [vmem:[#allocation3 + $0x68] sm:$0xff] %v2621
      %v2636 = vld [vmem:[#allocation3] sm:$0xff]
      %v2637 = vld [vmem:[#allocation3 + $0x8] sm:$0xff]
      %v2638 = vld [vmem:[#allocation3 + $0x10] sm:$0xff]
      %v2639 = vld [vmem:[#allocation3 + $0x18] sm:$0xff]
      %v2640 = vld [vmem:[#allocation3 + $0x20] sm:$0xff]
      %v2641 = vld [vmem:[#allocation3 + $0x28] sm:$0xff]
      %v2642 = vld [vmem:[#allocation3 + $0x30] sm:$0xff]
      %v2643 = vld [vmem:[#allocation3 + $0x38] sm:$0xff]
      %v2644 = vld [vmem:[#allocation3 + $0x40] sm:$0xff]
      %v2645 = vld [vmem:[#allocation3 + $0x48] sm:$0xff]
      %v2646 = vld [vmem:[#allocation3 + $0x50] sm:$0xff]
      %v2647 = vld [vmem:[#allocation3 + $0x58] sm:$0xff]
      %v2648 = vld [vmem:[#allocation3 + $0x60] sm:$0xff]
      %v2649 = vld [vmem:[#allocation3 + $0x68] sm:$0xff]
      %v2650 = vld [vmem:[%s269] sm:$0xff]
      %v2651 = vld [vmem:[%s269 + $0x8] sm:$0xff]
      %v2652 = vld [vmem:[%s269 + $0x10] sm:$0xff]
      %v2653 = vld [vmem:[%s269 + $0x18] sm:$0xff]
      %v2654 = vld [vmem:[%s269 + $0x20] sm:$0xff]
      %v2655 = vld [vmem:[%s269 + $0x28] sm:$0xff]
      %v2656 = vld [vmem:[%s269 + $0x30] sm:$0xff]
      %v2657 = vld [vmem:[%s269 + $0x38] sm:$0xff]
      %v2658 = vld [vmem:[%s269 + $0x40] sm:$0xff]
      %v2659 = vld [vmem:[%s269 + $0x48] sm:$0xff]
      %v2660 = vld [vmem:[%s269 + $0x50] sm:$0xff]
      %v2661 = vld [vmem:[%s269 + $0x58] sm:$0xff]
      %v2662 = vld [vmem:[%s269 + $0x60] sm:$0xff]
      %v2663 = vld [vmem:[%s269 + $0x68] sm:$0xff]
      %v2664 = vadd.f32 %v2636, %v2650
      %v2665 = vadd.f32 %v2637, %v2651
      %v2666 = vadd.f32 %v2638, %v2652
      %v2667 = vadd.f32 %v2639, %v2653
      %v2668 = vadd.f32 %v2640, %v2654
      %v2669 = vadd.f32 %v2641, %v2655
      %v2670 = vadd.f32 %v2642, %v2656
      %v2671 = vadd.f32 %v2643, %v2657
      %v2672 = vadd.f32 %v2644, %v2658
      %v2673 = vadd.f32 %v2645, %v2659
      %v2674 = vadd.f32 %v2646, %v2660
      %v2675 = vadd.f32 %v2647, %v2661
      %v2676 = vadd.f32 %v2648, %v2662
      %v2677 = vadd.f32 %v2649, %v2663
      %2678 = vst [vmem:[%s275] sm:$0xff] %v2664
      %2679 = vst [vmem:[%s275 + $0x8] sm:$0xff] %v2665
      %2680 = vst [vmem:[%s275 + $0x10] sm:$0xff] %v2666
      %2681 = vst [vmem:[%s275 + $0x18] sm:$0xff] %v2667
      %2682 = vst [vmem:[%s275 + $0x20] sm:$0xff] %v2668
      %2683 = vst [vmem:[%s275 + $0x28] sm:$0xff] %v2669
      %2684 = vst [vmem:[%s275 + $0x30] sm:$0xff] %v2670
      %2685 = vst [vmem:[%s275 + $0x38] sm:$0xff] %v2671
      %2686 = vst [vmem:[%s275 + $0x40] sm:$0xff] %v2672
      %2687 = vst [vmem:[%s275 + $0x48] sm:$0xff] %v2673
      %2688 = vst [vmem:[%s275 + $0x50] sm:$0xff] %v2674
      %2689 = vst [vmem:[%s275 + $0x58] sm:$0xff] %v2675
      %2690 = vst [vmem:[%s275 + $0x60] sm:$0xff] %v2676
      %2691 = vst [vmem:[%s275 + $0x68] sm:$0xff] %v2677
      %s2692 = smul.u32 14, %s17
      %p2693 = scmp.lt.s32.totalorder %s2692, 27
      %s2694 = scalar_select %p2693, %s2692, 27
      %s2695 = smul.addr %s2694, 8
      %s2696 = scalar_lea.vmem %s6, %s2695
      // Predicated region
      $region45: #{preact_block_forward.11} parent=43 // pred_check
        %p2697 = pneg %p171
      $region46: #{preact_block_forward.11} parent=43 // pred_check_branch
        %2699 = sbr.rel (%p2697) target = $region48
      $region47: #{preact_block_forward.11} parent=43 // pred_region
        %s2700 = smul.u32 14, %s17
      $region48: #{preact_block_forward.11} parent=43 // pred_fallthru
        _
    $region44: #{preact_block_forward.11} parent=5 // pred_fallthru
      _
    %p2701 = scmp.le.s32.totalorder 2, %s12
    // Predicated region
    $region49: #{preact_block_forward.11} parent=5 // pred_check
      %p2702 = pneg %p2701
    $region50: #{preact_block_forward.11} parent=5 // pred_check_branch
      %2704 = sbr.rel (%p2702) target = $region52
    $region51: #{preact_block_forward.11} parent=5 // pred_region
      %s2705 = ssub.s32 %s12, 2
      // Predicated region
      $region53: #{preact_block_forward.11} parent=51 // pred_check
        %p2706 = pneg %p177
      $region54: #{preact_block_forward.11} parent=51 // pred_check_branch
        %2708 = sbr.rel (%p2706) target = $region56
      $region55: #{preact_block_forward.11} parent=51 // pred_region
        %s2709 = smul.u32 14, %s18
        %p2710 = scmp.lt.s32.totalorder %s2709, 27
        %s2711 = scalar_select %p2710, %s2709, 27
        %s2712 = smul.addr %s2711, 8
        %s2713 = scalar_lea.vmem %s6, %s2712
      $region56: #{preact_block_forward.11} parent=51 // pred_fallthru
        _
    $region52: #{preact_block_forward.11} parent=5 // pred_fallthru
      _
  $region6: #{preact_block_forward.11} parent=0 // loop_footer
    %s16 = sadd.s32 1, %s12
  $region7: #{preact_block_forward.11} parent=0 // loop_footer_branch
    %11 = sbr.rel target = $region3
  $region8: #{preact_block_forward.11} parent=0 // loop_exit
    _

</llo_original>
